<compile_context>
chip_gen: v7x
topology: tpu7x:2x2x1
jax: 0.10.0
libtpu: 0.0.40
codegen_flags: <defaults>
</compile_context>

<pallas_src>
import functools

import jax
import jax.numpy as jnp
from jax.experimental import pallas as pl
from jax.experimental.pallas import tpu as pltpu


def _round_up(x, m):
    return (x + m - 1) // m * m


def _block_dims(ndf):
    # (H, W, Cin, Cout) of the four encoder stages (input is 1 x 64 x 64).
    return ((64, 64, 1, ndf),
            (32, 32, ndf, 2 * ndf),
            (16, 16, 2 * ndf, 4 * ndf),
            (8, 8, 4 * ndf, 8 * ndf))


def _banded_conv_matrices(wf, W):
    """Banded matrices realising a 3x3 'same' conv in the merged (H, W*Cin) layout.

    wf: (3, 3, Cin, Cout) conv weights (BN scale already folded in).
    Returns (2, 3, Kp, (W//2)*Cout): index 0 selects even conv-output columns,
    index 1 odd columns (so the W direction of the 2x2 max-pool is an
    elementwise max of the two matmul accumulators); the second index is the
    row offset dy; Kp = W*Cin rounded up to a multiple of 8.
    """
    _, _, Cin, Cout = wf.shape
    W2 = W // 2
    K = W * Cin
    Kp = _round_up(K, 8)
    mats = []
    for off in (0, 1):
        wi = jnp.arange(W)[:, None]                  # input column index
        wo = 2 * jnp.arange(W2)[None, :] + off       # conv output column index
        dx = wi - wo + 1                             # 3x3 tap index (pad=1)
        valid = (dx >= 0) & (dx <= 2)
        g = wf[:, jnp.clip(dx, 0, 2)]                # (3, W, W2, Cin, Cout)
        g = g * valid[None, :, :, None, None].astype(wf.dtype)
        g = jnp.transpose(g, (0, 1, 3, 2, 4)).reshape(3, K, W2 * Cout)
        if Kp > K:
            g = jnp.pad(g, ((0, 0), (0, Kp - K), (0, 0)))
        mats.append(g)
    return jnp.stack(mats, axis=0)


def _fused_classifier_kernel(x_ref,
                             wb1, sh1, wb2, sh2, wb3, sh3, wb4, sh4,
                             w1_ref, b1_ref, w2_ref, b2_ref,
                             out_ref,
                             pad1, pad2, pad3, pad4, pool_ref,
                             *, dims, mode):
    def conv_bn_pool_relu(act, pad_ref, wb_ref, sh_ref, H, W, Cin, Cout):
        # act: (H, W*Cin) merged-layout activation for one sample.
        H2 = H // 2
        WCin = W * Cin
        W2C = (W // 2) * Cout
        # Spatial zero padding (one row top/bottom; the left/right columns are
        # handled inside the banded weight matrices) into VMEM scratch.
        pad_ref[...] = jnp.zeros_like(pad_ref)
        pad_ref[1:1 + H, 0:WCin] = act
        # 3x3 conv (+ folded BN scale) as 6 MXU matmuls; even/odd output
        # columns are produced separately so the W-pool is a plain max.
        acc_e = jnp.zeros((H, W2C), jnp.float32)
        acc_o = jnp.zeros((H, W2C), jnp.float32)
        for dy in range(3):
            lhs = pad_ref[dy:dy + H, :]                       # (H, Kp)
            acc_e = acc_e + jnp.dot(lhs, wb_ref[0, dy],
                                    preferred_element_type=jnp.float32)
            acc_o = acc_o + jnp.dot(lhs, wb_ref[1, dy],
                                    preferred_element_type=jnp.float32)
        wmax = jnp.maximum(acc_e, acc_o)                      # maxpool over W
        # maxpool over H: stride-2 sublane reads from a lane-dense scratch.
        pool_ref[0:H, :] = wmax
        hmax = jnp.maximum(pool_ref[pl.ds(0, H2, 2), :],
                           pool_ref[pl.ds(1, H2, 2), :])      # (H2, W2C)
        # Folded conv-bias + BatchNorm shift, then ReLU.
        return jnp.maximum(hmax + sh_ref[...], 0.0)

    act = x_ref[0]                                            # (64, 64), Cin = 1
    pads = (pad1, pad2, pad3, pad4)
    wbs = (wb1, wb2, wb3, wb4)
    shs = (sh1, sh2, sh3, sh4)
    for i, (H, W, Cin, Cout) in enumerate(dims):
        act = conv_bn_pool_relu(act, pads[i], wbs[i], shs[i], H, W, Cin, Cout)

    # FC head: Linear -> Dropout(eval identity) -> Linear -> head output.
    # act is (4, 32*ndf) in NHWC-merged order; w1 was permuted/reshaped at init
    # so this matches PyTorch's NCHW .view(-1, ndf*8*4*4) flatten.
    # TODO(synk): Dropout(p=0.5) is inference-mode identity; training-mode
    # random masking is not implemented.
    h1 = b1_ref[...]
    for hh in range(act.shape[0]):
        h1 = h1 + jnp.dot(act[hh:hh + 1, :], w1_ref[hh],
                          preferred_element_type=jnp.float32)
    z = jnp.dot(h1, w2_ref[...], preferred_element_type=jnp.float32) + b2_ref[...]

    if mode == "celoss":
        out_ref[0] = z
    else:
        m = jnp.max(z, axis=-1, keepdims=True)
        e = jnp.exp(z - m)
        s = jnp.sum(e, axis=-1, keepdims=True)
        if mode == "release":
            out_ref[0] = e / s                                # softmax
        else:
            out_ref[0] = (z - m) - jnp.log(s)                 # log_softmax


def build_classifier_forward(params, ndf, nz, mode="log_softmax"):
    dims = _block_dims(ndf)
    kernel = functools.partial(_fused_classifier_kernel, dims=dims, mode=mode)
    wbands, shifts = params["wbands"], params["shifts"]
    w1, b1, w2, b2 = params["w1"], params["b1"], params["w2"], params["b2"]

    def forward(x):
        # x.view(-1, 1, 64, 64); with C = 1 the NHWC squeeze is a pure reshape.
        x = x.reshape(-1, 64, 64).astype(jnp.float32)
        n_batch = x.shape[0]

        in_specs = [pl.BlockSpec((1, 64, 64), lambda n: (n, 0, 0))]
        operands = [x]
        for wb, sh in zip(wbands, shifts):
            in_specs.append(pl.BlockSpec(wb.shape, lambda n: (0, 0, 0, 0)))
            in_specs.append(pl.BlockSpec(sh.shape, lambda n: (0, 0)))
            operands += [wb, sh]
        in_specs += [pl.BlockSpec(w1.shape, lambda n: (0, 0, 0)),
                     pl.BlockSpec(b1.shape, lambda n: (0, 0)),
                     pl.BlockSpec(w2.shape, lambda n: (0, 0)),
                     pl.BlockSpec(b2.shape, lambda n: (0, 0))]
        operands += [w1, b1, w2, b2]

        scratch_shapes = [
            pltpu.VMEM((H + 2, wb.shape[-2]), jnp.float32)     # padded activations
            for (H, _, _, _), wb in zip(dims, wbands)
        ] + [pltpu.VMEM((64, 32 * ndf), jnp.float32)]          # H-pool scratch

        out = pl.pallas_call(
            kernel,
            grid=(n_batch,),
            in_specs=in_specs,
            out_specs=pl.BlockSpec((1, 1, nz), lambda n: (n, 0, 0)),
            out_shape=jax.ShapeDtypeStruct((n_batch, 1, nz), jnp.float32),
            scratch_shapes=scratch_shapes,
            compiler_params=pltpu.CompilerParams(
                dimension_semantics=("parallel",)),
        )(*operands)
        return out[:, 0, :]

    return forward


def classifier_forward(params, x, ndf, nz, release=False, celoss=False):
    """Mirrors Classifier.forward (x is NCHW, as in PyTorch)."""
    mode = "celoss" if celoss else ("release" if release else "log_softmax")
    return build_classifier_forward(params, ndf, nz, mode)(x)


def init_params(key, nc, ndf, nz):
    """Deterministic synthetic parameters matching the PyTorch module's shapes.

    Returns (params, raw): `params` holds the kernel-ready folded/banded form,
    `raw` the plain PyTorch-style tensors used by the pure-JAX reference.
    """
    assert nc == 1, "Classifier.forward hard-codes x.view(-1, 1, 64, 64)"
    eps = 1e-5
    dims = _block_dims(ndf)
    raw_blocks, wbands, shifts = [], [], []
    for (_, W, Cin, Cout) in dims:
        key, k1, k2, k3, k4, k5, k6 = jax.random.split(key, 7)
        fan_in = Cin * 9
        w = jax.random.normal(k1, (3, 3, Cin, Cout), jnp.float32) / jnp.sqrt(fan_in)
        b = 0.1 * jax.random.normal(k2, (Cout,), jnp.float32)
        gamma = 1.0 + 0.1 * jax.random.normal(k3, (Cout,), jnp.float32)
        beta = 0.1 * jax.random.normal(k4, (Cout,), jnp.float32)
        mean = 0.1 * jax.random.normal(k5, (Cout,), jnp.float32)
        var = 0.5 + jnp.abs(jax.random.normal(k6, (Cout,), jnp.float32))
        raw_blocks.append((w, b, gamma, beta, mean, var))

        scale = gamma / jnp.sqrt(var + eps)               # eval-mode BN folding
        wf = w * scale[None, None, None, :]               # scale -> conv weights
        shift = (b - mean) * scale + beta                 # conv bias + BN shift
        wbands.append(_banded_conv_matrices(wf, W))
        shifts.append(jnp.tile(shift.reshape(1, Cout), (1, W // 2)))

    feat_dim = ndf * 8 * 4 * 4
    nh = nz * 5
    key, k1, k2, k3, k4 = jax.random.split(key, 5)
    w1_pt = jax.random.normal(k1, (feat_dim, nh), jnp.float32) / jnp.sqrt(feat_dim)
    b1 = 0.1 * jax.random.normal(k2, (1, nh), jnp.float32)
    w2 = jax.random.normal(k3, (nh, nz), jnp.float32) / jnp.sqrt(nh)
    b2 = 0.1 * jax.random.normal(k4, (1, nz), jnp.float32)

    # Permute w1 rows once so the kernel's NHWC-merged flatten matches
    # PyTorch's NCHW .view(-1, ndf*8*4*4): kernel row (h, w*C + c) must read
    # PyTorch row (c*16 + h*4 + w).  Also pre-split the 4 spatial rows.
    c4 = ndf * 8
    hh = jnp.arange(4)[:, None, None]
    ww = jnp.arange(4)[None, :, None]
    cc = jnp.arange(c4)[None, None, :]
    pt_rows = (cc * 16 + hh * 4 + ww).reshape(4, 4 * c4)
    w1_nhwc = w1_pt[pt_rows]                               # (4, 4*c4, nh)

    params = {"wbands": wbands, "shifts": shifts,
              "w1": w1_nhwc, "b1": b1, "w2": w2, "b2": b2}
    raw = {"blocks": raw_blocks, "w1": w1_pt, "b1": b1, "w2": w2, "b2": b2}
    return params, raw


def reference_forward(raw, x, release=False, celoss=False):
    """Pure-JAX reference mirroring the PyTorch module (eval mode)."""
    hp = jax.lax.Precision.HIGHEST
    a = jnp.transpose(x.reshape(-1, 1, 64, 64), (0, 2, 3, 1))   # NHWC
    for (w, b, gamma, beta, mean, var) in raw["blocks"]:
        a = jax.lax.conv_general_dilated(
            a, w, (1, 1), ((1, 1), (1, 1)),
            dimension_numbers=("NHWC", "HWIO", "NHWC"), precision=hp) + b
        a = (a - mean) / jnp.sqrt(var + 1e-5) * gamma + beta
        a = jax.lax.reduce_window(a, -jnp.inf, jax.lax.max,
                                  (1, 2, 2, 1), (1, 2, 2, 1), "VALID")
        a = jnp.maximum(a, 0.0)
    feat = jnp.transpose(a, (0, 3, 1, 2)).reshape(a.shape[0], -1)  # NCHW flatten
    h = jnp.dot(feat, raw["w1"], precision=hp) + raw["b1"]
    z = jnp.dot(h, raw["w2"], precision=hp) + raw["b2"]
    if celoss:
        return z
    if release:
        return jax.nn.softmax(z, axis=1)
    return jax.nn.log_softmax(z, axis=1)


if __name__ == "__main__":
    nc, ndf, nz, batch = 1, 4, 8, 2
    key = jax.random.PRNGKey(0)
    key, kx = jax.random.split(key)
    x = jax.random.normal(kx, (batch, nc, 64, 64), jnp.float32)

    params, raw = init_params(key, nc, ndf, nz)

    logp = classifier_forward(params, x, ndf, nz)      # default: log_softmax
    logp = jax.block_until_ready(logp)

    assert logp.shape == (batch, nz)
    assert bool(jnp.all(jnp.isfinite(logp)))
    probs = jnp.exp(logp)
    assert bool(jnp.all(jnp.abs(jnp.sum(probs, axis=1) - 1.0) < 1e-4))

    # Cross-check against a pure-JAX reference of the PyTorch forward pass
    # (loose tolerance: the in-kernel MXU matmuls may use reduced-precision
    # f32 passes, while structural bugs would show up as O(0.1+) errors).
    ref = reference_forward(raw, x)
    assert float(jnp.max(jnp.abs(logp - ref))) < 5e-2

    print("KERNEL_OK")
</pallas_src>

<mosaic_0001>
module attributes {stable_mosaic.version = 11 : i64} {
  func.func @_fused_classifier_kernel(%arg0: i32, %arg1: memref<1x64x64xf32, #tpu.memory_space<vmem>>, %arg2: memref<2x3x64x128xf32, #tpu.memory_space<vmem>>, %arg3: memref<1x128xf32, #tpu.memory_space<vmem>>, %arg4: memref<2x3x128x128xf32, #tpu.memory_space<vmem>>, %arg5: memref<1x128xf32, #tpu.memory_space<vmem>>, %arg6: memref<2x3x128x128xf32, #tpu.memory_space<vmem>>, %arg7: memref<1x128xf32, #tpu.memory_space<vmem>>, %arg8: memref<2x3x128x128xf32, #tpu.memory_space<vmem>>, %arg9: memref<1x128xf32, #tpu.memory_space<vmem>>, %arg10: memref<4x128x40xf32, #tpu.memory_space<vmem>>, %arg11: memref<1x40xf32, #tpu.memory_space<vmem>>, %arg12: memref<40x8xf32, #tpu.memory_space<vmem>>, %arg13: memref<1x8xf32, #tpu.memory_space<vmem>>, %arg14: memref<1x1x8xf32, #tpu.memory_space<vmem>>, %arg15: memref<66x64xf32, #tpu.memory_space<vmem>>, %arg16: memref<34x128xf32, #tpu.memory_space<vmem>>, %arg17: memref<18x128xf32, #tpu.memory_space<vmem>>, %arg18: memref<10x128xf32, #tpu.memory_space<vmem>>, %arg19: memref<64x128xf32, #tpu.memory_space<vmem>>) attributes {dimension_semantics = [#tpu.dimension_semantics<parallel>], iteration_bounds = array<i64: 2>, scalar_prefetch = 0 : i64, scratch_operands = 5 : i64, tpu.core_type = #tpu.core_type<tc>, window_params = [{transform_indices = @transform_0, window_bounds = array<i64: 1, 64, 64>}, {pipeline_mode = #tpu.pipeline_mode<synchronous>, transform_indices = @transform_1, window_bounds = array<i64: 2, 3, 64, 128>}, {pipeline_mode = #tpu.pipeline_mode<synchronous>, transform_indices = @transform_2, window_bounds = array<i64: 1, 128>}, {pipeline_mode = #tpu.pipeline_mode<synchronous>, transform_indices = @transform_3, window_bounds = array<i64: 2, 3, 128, 128>}, {pipeline_mode = #tpu.pipeline_mode<synchronous>, transform_indices = @transform_4, window_bounds = array<i64: 1, 128>}, {pipeline_mode = #tpu.pipeline_mode<synchronous>, transform_indices = @transform_5, window_bounds = array<i64: 2, 3, 128, 128>}, {pipeline_mode = #tpu.pipeline_mode<synchronous>, transform_indices = @transform_6, window_bounds = array<i64: 1, 128>}, {pipeline_mode = #tpu.pipeline_mode<synchronous>, transform_indices = @transform_7, window_bounds = array<i64: 2, 3, 128, 128>}, {pipeline_mode = #tpu.pipeline_mode<synchronous>, transform_indices = @transform_8, window_bounds = array<i64: 1, 128>}, {pipeline_mode = #tpu.pipeline_mode<synchronous>, transform_indices = @transform_9, window_bounds = array<i64: 4, 128, 40>}, {pipeline_mode = #tpu.pipeline_mode<synchronous>, transform_indices = @transform_10, window_bounds = array<i64: 1, 40>}, {pipeline_mode = #tpu.pipeline_mode<synchronous>, transform_indices = @transform_11, window_bounds = array<i64: 40, 8>}, {pipeline_mode = #tpu.pipeline_mode<synchronous>, transform_indices = @transform_12, window_bounds = array<i64: 1, 8>}, {transform_indices = @transform_13, window_bounds = array<i64: 1, 1, 8>}]} {
    %c0 = arith.constant 0 : index
    %c0_0 = arith.constant 0 : index
    %c0_1 = arith.constant 0 : index
    %0 = vector.load %arg1[%c0, %c0_0, %c0_1] : memref<1x64x64xf32, #tpu.memory_space<vmem>>, vector<1x64x64xf32>
    %1 = vector.shape_cast %0 : vector<1x64x64xf32> to vector<64x64xf32>
    %cst = arith.constant 0.000000e+00 : f32
    %2 = vector.broadcast %cst : f32 to vector<66x64xf32>
    %c0_2 = arith.constant 0 : index
    %c0_3 = arith.constant 0 : index
    %3 = vector.load %arg15[%c0_2, %c0_3] : memref<66x64xf32, #tpu.memory_space<vmem>>, vector<66x64xf32>
    tpu.vector_store %arg15[%c0_2, %c0_3], %2 {strides = array<i32>} : memref<66x64xf32, #tpu.memory_space<vmem>>, vector<66x64xf32>,
    %c1 = arith.constant 1 : index
    %c0_4 = arith.constant 0 : index
    %4 = vector.load %arg15[%c1, %c0_4] : memref<66x64xf32, #tpu.memory_space<vmem>>, vector<64x64xf32>
    tpu.vector_store %arg15[%c1, %c0_4], %1 {strides = array<i32>} : memref<66x64xf32, #tpu.memory_space<vmem>>, vector<64x64xf32>,
    %cst_5 = arith.constant 0.000000e+00 : f32
    %5 = vector.broadcast %cst_5 : f32 to vector<64x128xf32>
    %cst_6 = arith.constant 0.000000e+00 : f32
    %6 = vector.broadcast %cst_6 : f32 to vector<64x128xf32>
    %c0_7 = arith.constant 0 : index
    %c0_8 = arith.constant 0 : index
    %7 = vector.load %arg15[%c0_7, %c0_8] : memref<66x64xf32, #tpu.memory_space<vmem>>, vector<64x64xf32>
    %c0_9 = arith.constant 0 : index
    %c0_10 = arith.constant 0 : index
    %c0_11 = arith.constant 0 : index
    %c0_12 = arith.constant 0 : index
    %8 = vector.load %arg2[%c0_9, %c0_10, %c0_11, %c0_12] : memref<2x3x64x128xf32, #tpu.memory_space<vmem>>, vector<1x1x64x128xf32>
    %9 = vector.shape_cast %8 : vector<1x1x64x128xf32> to vector<64x128xf32>
    %cst_13 = arith.constant dense<0.000000e+00> : vector<64x128xf32>
    %10 = tpu.matmul %7, %9, %cst_13 {dimension_numbers = #tpu.dot_dimension_numbers<[1], [0], [0], [1], [0, 0, 1, 1], [], []>} : vector<64x64xf32>, vector<64x128xf32>, vector<64x128xf32> -> vector<64x128xf32>
    %11 = arith.addf %5, %10 : vector<64x128xf32>
    %c1_14 = arith.constant 1 : index
    %c0_15 = arith.constant 0 : index
    %c0_16 = arith.constant 0 : index
    %c0_17 = arith.constant 0 : index
    %12 = vector.load %arg2[%c1_14, %c0_15, %c0_16, %c0_17] : memref<2x3x64x128xf32, #tpu.memory_space<vmem>>, vector<1x1x64x128xf32>
    %13 = vector.shape_cast %12 : vector<1x1x64x128xf32> to vector<64x128xf32>
    %cst_18 = arith.constant dense<0.000000e+00> : vector<64x128xf32>
    %14 = tpu.matmul %7, %13, %cst_18 {dimension_numbers = #tpu.dot_dimension_numbers<[1], [0], [0], [1], [0, 0, 1, 1], [], []>} : vector<64x64xf32>, vector<64x128xf32>, vector<64x128xf32> -> vector<64x128xf32>
    %15 = arith.addf %6, %14 : vector<64x128xf32>
    %c1_19 = arith.constant 1 : index
    %c0_20 = arith.constant 0 : index
    %16 = vector.load %arg15[%c1_19, %c0_20] : memref<66x64xf32, #tpu.memory_space<vmem>>, vector<64x64xf32>
    %c0_21 = arith.constant 0 : index
    %c1_22 = arith.constant 1 : index
    %c0_23 = arith.constant 0 : index
    %c0_24 = arith.constant 0 : index
    %17 = vector.load %arg2[%c0_21, %c1_22, %c0_23, %c0_24] : memref<2x3x64x128xf32, #tpu.memory_space<vmem>>, vector<1x1x64x128xf32>
    %18 = vector.shape_cast %17 : vector<1x1x64x128xf32> to vector<64x128xf32>
    %cst_25 = arith.constant dense<0.000000e+00> : vector<64x128xf32>
    %19 = tpu.matmul %16, %18, %cst_25 {dimension_numbers = #tpu.dot_dimension_numbers<[1], [0], [0], [1], [0, 0, 1, 1], [], []>} : vector<64x64xf32>, vector<64x128xf32>, vector<64x128xf32> -> vector<64x128xf32>
    %20 = arith.addf %11, %19 : vector<64x128xf32>
    %c1_26 = arith.constant 1 : index
    %c1_27 = arith.constant 1 : index
    %c0_28 = arith.constant 0 : index
    %c0_29 = arith.constant 0 : index
    %21 = vector.load %arg2[%c1_26, %c1_27, %c0_28, %c0_29] : memref<2x3x64x128xf32, #tpu.memory_space<vmem>>, vector<1x1x64x128xf32>
    %22 = vector.shape_cast %21 : vector<1x1x64x128xf32> to vector<64x128xf32>
    %cst_30 = arith.constant dense<0.000000e+00> : vector<64x128xf32>
    %23 = tpu.matmul %16, %22, %cst_30 {dimension_numbers = #tpu.dot_dimension_numbers<[1], [0], [0], [1], [0, 0, 1, 1], [], []>} : vector<64x64xf32>, vector<64x128xf32>, vector<64x128xf32> -> vector<64x128xf32>
    %24 = arith.addf %15, %23 : vector<64x128xf32>
    %c2 = arith.constant 2 : index
    %c0_31 = arith.constant 0 : index
    %25 = vector.load %arg15[%c2, %c0_31] : memref<66x64xf32, #tpu.memory_space<vmem>>, vector<64x64xf32>
    %c0_32 = arith.constant 0 : index
    %c2_33 = arith.constant 2 : index
    %c0_34 = arith.constant 0 : index
    %c0_35 = arith.constant 0 : index
    %26 = vector.load %arg2[%c0_32, %c2_33, %c0_34, %c0_35] : memref<2x3x64x128xf32, #tpu.memory_space<vmem>>, vector<1x1x64x128xf32>
    %27 = vector.shape_cast %26 : vector<1x1x64x128xf32> to vector<64x128xf32>
    %cst_36 = arith.constant dense<0.000000e+00> : vector<64x128xf32>
    %28 = tpu.matmul %25, %27, %cst_36 {dimension_numbers = #tpu.dot_dimension_numbers<[1], [0], [0], [1], [0, 0, 1, 1], [], []>} : vector<64x64xf32>, vector<64x128xf32>, vector<64x128xf32> -> vector<64x128xf32>
    %29 = arith.addf %20, %28 : vector<64x128xf32>
    %c1_37 = arith.constant 1 : index
    %c2_38 = arith.constant 2 : index
    %c0_39 = arith.constant 0 : index
    %c0_40 = arith.constant 0 : index
    %30 = vector.load %arg2[%c1_37, %c2_38, %c0_39, %c0_40] : memref<2x3x64x128xf32, #tpu.memory_space<vmem>>, vector<1x1x64x128xf32>
    %31 = vector.shape_cast %30 : vector<1x1x64x128xf32> to vector<64x128xf32>
    %cst_41 = arith.constant dense<0.000000e+00> : vector<64x128xf32>
    %32 = tpu.matmul %25, %31, %cst_41 {dimension_numbers = #tpu.dot_dimension_numbers<[1], [0], [0], [1], [0, 0, 1, 1], [], []>} : vector<64x64xf32>, vector<64x128xf32>, vector<64x128xf32> -> vector<64x128xf32>
    %33 = arith.addf %24, %32 : vector<64x128xf32>
    %34 = arith.maximumf %29, %33 : vector<64x128xf32>
    %c0_42 = arith.constant 0 : index
    %c0_43 = arith.constant 0 : index
    %35 = vector.load %arg19[%c0_42, %c0_43] : memref<64x128xf32, #tpu.memory_space<vmem>>, vector<64x128xf32>
    tpu.vector_store %arg19[%c0_42, %c0_43], %34 {strides = array<i32>} : memref<64x128xf32, #tpu.memory_space<vmem>>, vector<64x128xf32>,
    %c0_44 = arith.constant 0 : index
    %c0_45 = arith.constant 0 : index
    %36 = tpu.strided_load %arg19[%c0_44, %c0_45] {strides = array<i32: 2, 1>} : memref<64x128xf32, #tpu.memory_space<vmem>>, vector<32x128xf32>
    %c1_46 = arith.constant 1 : index
    %c0_47 = arith.constant 0 : index
    %37 = tpu.strided_load %arg19[%c1_46, %c0_47] {strides = array<i32: 2, 1>} : memref<64x128xf32, #tpu.memory_space<vmem>>, vector<32x128xf32>
    %38 = arith.maximumf %36, %37 : vector<32x128xf32>
    %c0_48 = arith.constant 0 : index
    %c0_49 = arith.constant 0 : index
    %39 = vector.load %arg3[%c0_48, %c0_49] : memref<1x128xf32, #tpu.memory_space<vmem>>, vector<1x128xf32>
    %40 = vector.broadcast %39 : vector<1x128xf32> to vector<32x128xf32>
    %41 = arith.addf %38, %40 : vector<32x128xf32>
    %cst_50 = arith.constant 0.000000e+00 : f32
    %42 = vector.broadcast %cst_50 : f32 to vector<32x128xf32>
    %43 = arith.maximumf %41, %42 : vector<32x128xf32>
    %cst_51 = arith.constant 0.000000e+00 : f32
    %44 = vector.broadcast %cst_51 : f32 to vector<34x128xf32>
    %c0_52 = arith.constant 0 : index
    %c0_53 = arith.constant 0 : index
    %45 = vector.load %arg16[%c0_52, %c0_53] : memref<34x128xf32, #tpu.memory_space<vmem>>, vector<34x128xf32>
    tpu.vector_store %arg16[%c0_52, %c0_53], %44 {strides = array<i32>} : memref<34x128xf32, #tpu.memory_space<vmem>>, vector<34x128xf32>,
    %c1_54 = arith.constant 1 : index
    %c0_55 = arith.constant 0 : index
    %46 = vector.load %arg16[%c1_54, %c0_55] : memref<34x128xf32, #tpu.memory_space<vmem>>, vector<32x128xf32>
    tpu.vector_store %arg16[%c1_54, %c0_55], %43 {strides = array<i32>} : memref<34x128xf32, #tpu.memory_space<vmem>>, vector<32x128xf32>,
    %cst_56 = arith.constant 0.000000e+00 : f32
    %47 = vector.broadcast %cst_56 : f32 to vector<32x128xf32>
    %cst_57 = arith.constant 0.000000e+00 : f32
    %48 = vector.broadcast %cst_57 : f32 to vector<32x128xf32>
    %c0_58 = arith.constant 0 : index
    %c0_59 = arith.constant 0 : index
    %49 = vector.load %arg16[%c0_58, %c0_59] : memref<34x128xf32, #tpu.memory_space<vmem>>, vector<32x128xf32>
    %c0_60 = arith.constant 0 : index
    %c0_61 = arith.constant 0 : index
    %c0_62 = arith.constant 0 : index
    %c0_63 = arith.constant 0 : index
    %50 = vector.load %arg4[%c0_60, %c0_61, %c0_62, %c0_63] : memref<2x3x128x128xf32, #tpu.memory_space<vmem>>, vector<1x1x128x128xf32>
    %51 = vector.shape_cast %50 : vector<1x1x128x128xf32> to vector<128x128xf32>
    %cst_64 = arith.constant dense<0.000000e+00> : vector<32x128xf32>
    %52 = tpu.matmul %49, %51, %cst_64 {dimension_numbers = #tpu.dot_dimension_numbers<[1], [0], [0], [1], [0, 0, 1, 1], [], []>} : vector<32x128xf32>, vector<128x128xf32>, vector<32x128xf32> -> vector<32x128xf32>
    %53 = arith.addf %47, %52 : vector<32x128xf32>
    %c1_65 = arith.constant 1 : index
    %c0_66 = arith.constant 0 : index
    %c0_67 = arith.constant 0 : index
    %c0_68 = arith.constant 0 : index
    %54 = vector.load %arg4[%c1_65, %c0_66, %c0_67, %c0_68] : memref<2x3x128x128xf32, #tpu.memory_space<vmem>>, vector<1x1x128x128xf32>
    %55 = vector.shape_cast %54 : vector<1x1x128x128xf32> to vector<128x128xf32>
    %cst_69 = arith.constant dense<0.000000e+00> : vector<32x128xf32>
    %56 = tpu.matmul %49, %55, %cst_69 {dimension_numbers = #tpu.dot_dimension_numbers<[1], [0], [0], [1], [0, 0, 1, 1], [], []>} : vector<32x128xf32>, vector<128x128xf32>, vector<32x128xf32> -> vector<32x128xf32>
    %57 = arith.addf %48, %56 : vector<32x128xf32>
    %c1_70 = arith.constant 1 : index
    %c0_71 = arith.constant 0 : index
    %58 = vector.load %arg16[%c1_70, %c0_71] : memref<34x128xf32, #tpu.memory_space<vmem>>, vector<32x128xf32>
    %c0_72 = arith.constant 0 : index
    %c1_73 = arith.constant 1 : index
    %c0_74 = arith.constant 0 : index
    %c0_75 = arith.constant 0 : index
    %59 = vector.load %arg4[%c0_72, %c1_73, %c0_74, %c0_75] : memref<2x3x128x128xf32, #tpu.memory_space<vmem>>, vector<1x1x128x128xf32>
    %60 = vector.shape_cast %59 : vector<1x1x128x128xf32> to vector<128x128xf32>
    %cst_76 = arith.constant dense<0.000000e+00> : vector<32x128xf32>
    %61 = tpu.matmul %58, %60, %cst_76 {dimension_numbers = #tpu.dot_dimension_numbers<[1], [0], [0], [1], [0, 0, 1, 1], [], []>} : vector<32x128xf32>, vector<128x128xf32>, vector<32x128xf32> -> vector<32x128xf32>
    %62 = arith.addf %53, %61 : vector<32x128xf32>
    %c1_77 = arith.constant 1 : index
    %c1_78 = arith.constant 1 : index
    %c0_79 = arith.constant 0 : index
    %c0_80 = arith.constant 0 : index
    %63 = vector.load %arg4[%c1_77, %c1_78, %c0_79, %c0_80] : memref<2x3x128x128xf32, #tpu.memory_space<vmem>>, vector<1x1x128x128xf32>
    %64 = vector.shape_cast %63 : vector<1x1x128x128xf32> to vector<128x128xf32>
    %cst_81 = arith.constant dense<0.000000e+00> : vector<32x128xf32>
    %65 = tpu.matmul %58, %64, %cst_81 {dimension_numbers = #tpu.dot_dimension_numbers<[1], [0], [0], [1], [0, 0, 1, 1], [], []>} : vector<32x128xf32>, vector<128x128xf32>, vector<32x128xf32> -> vector<32x128xf32>
    %66 = arith.addf %57, %65 : vector<32x128xf32>
    %c2_82 = arith.constant 2 : index
    %c0_83 = arith.constant 0 : index
    %67 = vector.load %arg16[%c2_82, %c0_83] : memref<34x128xf32, #tpu.memory_space<vmem>>, vector<32x128xf32>
    %c0_84 = arith.constant 0 : index
    %c2_85 = arith.constant 2 : index
    %c0_86 = arith.constant 0 : index
    %c0_87 = arith.constant 0 : index
    %68 = vector.load %arg4[%c0_84, %c2_85, %c0_86, %c0_87] : memref<2x3x128x128xf32, #tpu.memory_space<vmem>>, vector<1x1x128x128xf32>
    %69 = vector.shape_cast %68 : vector<1x1x128x128xf32> to vector<128x128xf32>
    %cst_88 = arith.constant dense<0.000000e+00> : vector<32x128xf32>
    %70 = tpu.matmul %67, %69, %cst_88 {dimension_numbers = #tpu.dot_dimension_numbers<[1], [0], [0], [1], [0, 0, 1, 1], [], []>} : vector<32x128xf32>, vector<128x128xf32>, vector<32x128xf32> -> vector<32x128xf32>
    %71 = arith.addf %62, %70 : vector<32x128xf32>
    %c1_89 = arith.constant 1 : index
    %c2_90 = arith.constant 2 : index
    %c0_91 = arith.constant 0 : index
    %c0_92 = arith.constant 0 : index
    %72 = vector.load %arg4[%c1_89, %c2_90, %c0_91, %c0_92] : memref<2x3x128x128xf32, #tpu.memory_space<vmem>>, vector<1x1x128x128xf32>
    %73 = vector.shape_cast %72 : vector<1x1x128x128xf32> to vector<128x128xf32>
    %cst_93 = arith.constant dense<0.000000e+00> : vector<32x128xf32>
    %74 = tpu.matmul %67, %73, %cst_93 {dimension_numbers = #tpu.dot_dimension_numbers<[1], [0], [0], [1], [0, 0, 1, 1], [], []>} : vector<32x128xf32>, vector<128x128xf32>, vector<32x128xf32> -> vector<32x128xf32>
    %75 = arith.addf %66, %74 : vector<32x128xf32>
    %76 = arith.maximumf %71, %75 : vector<32x128xf32>
    %c0_94 = arith.constant 0 : index
    %c0_95 = arith.constant 0 : index
    %77 = vector.load %arg19[%c0_94, %c0_95] : memref<64x128xf32, #tpu.memory_space<vmem>>, vector<32x128xf32>
    tpu.vector_store %arg19[%c0_94, %c0_95], %76 {strides = array<i32>} : memref<64x128xf32, #tpu.memory_space<vmem>>, vector<32x128xf32>,
    %c0_96 = arith.constant 0 : index
    %c0_97 = arith.constant 0 : index
    %78 = tpu.strided_load %arg19[%c0_96, %c0_97] {strides = array<i32: 2, 1>} : memref<64x128xf32, #tpu.memory_space<vmem>>, vector<16x128xf32>
    %c1_98 = arith.constant 1 : index
    %c0_99 = arith.constant 0 : index
    %79 = tpu.strided_load %arg19[%c1_98, %c0_99] {strides = array<i32: 2, 1>} : memref<64x128xf32, #tpu.memory_space<vmem>>, vector<16x128xf32>
    %80 = arith.maximumf %78, %79 : vector<16x128xf32>
    %c0_100 = arith.constant 0 : index
    %c0_101 = arith.constant 0 : index
    %81 = vector.load %arg5[%c0_100, %c0_101] : memref<1x128xf32, #tpu.memory_space<vmem>>, vector<1x128xf32>
    %82 = vector.broadcast %81 : vector<1x128xf32> to vector<16x128xf32>
    %83 = arith.addf %80, %82 : vector<16x128xf32>
    %cst_102 = arith.constant 0.000000e+00 : f32
    %84 = vector.broadcast %cst_102 : f32 to vector<16x128xf32>
    %85 = arith.maximumf %83, %84 : vector<16x128xf32>
    %cst_103 = arith.constant 0.000000e+00 : f32
    %86 = vector.broadcast %cst_103 : f32 to vector<18x128xf32>
    %c0_104 = arith.constant 0 : index
    %c0_105 = arith.constant 0 : index
    %87 = vector.load %arg17[%c0_104, %c0_105] : memref<18x128xf32, #tpu.memory_space<vmem>>, vector<18x128xf32>
    tpu.vector_store %arg17[%c0_104, %c0_105], %86 {strides = array<i32>} : memref<18x128xf32, #tpu.memory_space<vmem>>, vector<18x128xf32>,
    %c1_106 = arith.constant 1 : index
    %c0_107 = arith.constant 0 : index
    %88 = vector.load %arg17[%c1_106, %c0_107] : memref<18x128xf32, #tpu.memory_space<vmem>>, vector<16x128xf32>
    tpu.vector_store %arg17[%c1_106, %c0_107], %85 {strides = array<i32>} : memref<18x128xf32, #tpu.memory_space<vmem>>, vector<16x128xf32>,
    %cst_108 = arith.constant 0.000000e+00 : f32
    %89 = vector.broadcast %cst_108 : f32 to vector<16x128xf32>
    %cst_109 = arith.constant 0.000000e+00 : f32
    %90 = vector.broadcast %cst_109 : f32 to vector<16x128xf32>
    %c0_110 = arith.constant 0 : index
    %c0_111 = arith.constant 0 : index
    %91 = vector.load %arg17[%c0_110, %c0_111] : memref<18x128xf32, #tpu.memory_space<vmem>>, vector<16x128xf32>
    %c0_112 = arith.constant 0 : index
    %c0_113 = arith.constant 0 : index
    %c0_114 = arith.constant 0 : index
    %c0_115 = arith.constant 0 : index
    %92 = vector.load %arg6[%c0_112, %c0_113, %c0_114, %c0_115] : memref<2x3x128x128xf32, #tpu.memory_space<vmem>>, vector<1x1x128x128xf32>
    %93 = vector.shape_cast %92 : vector<1x1x128x128xf32> to vector<128x128xf32>
    %cst_116 = arith.constant dense<0.000000e+00> : vector<16x128xf32>
    %94 = tpu.matmul %91, %93, %cst_116 {dimension_numbers = #tpu.dot_dimension_numbers<[1], [0], [0], [1], [0, 0, 1, 1], [], []>} : vector<16x128xf32>, vector<128x128xf32>, vector<16x128xf32> -> vector<16x128xf32>
    %95 = arith.addf %89, %94 : vector<16x128xf32>
    %c1_117 = arith.constant 1 : index
    %c0_118 = arith.constant 0 : index
    %c0_119 = arith.constant 0 : index
    %c0_120 = arith.constant 0 : index
    %96 = vector.load %arg6[%c1_117, %c0_118, %c0_119, %c0_120] : memref<2x3x128x128xf32, #tpu.memory_space<vmem>>, vector<1x1x128x128xf32>
    %97 = vector.shape_cast %96 : vector<1x1x128x128xf32> to vector<128x128xf32>
    %cst_121 = arith.constant dense<0.000000e+00> : vector<16x128xf32>
    %98 = tpu.matmul %91, %97, %cst_121 {dimension_numbers = #tpu.dot_dimension_numbers<[1], [0], [0], [1], [0, 0, 1, 1], [], []>} : vector<16x128xf32>, vector<128x128xf32>, vector<16x128xf32> -> vector<16x128xf32>
    %99 = arith.addf %90, %98 : vector<16x128xf32>
    %c1_122 = arith.constant 1 : index
    %c0_123 = arith.constant 0 : index
    %100 = vector.load %arg17[%c1_122, %c0_123] : memref<18x128xf32, #tpu.memory_space<vmem>>, vector<16x128xf32>
    %c0_124 = arith.constant 0 : index
    %c1_125 = arith.constant 1 : index
    %c0_126 = arith.constant 0 : index
    %c0_127 = arith.constant 0 : index
    %101 = vector.load %arg6[%c0_124, %c1_125, %c0_126, %c0_127] : memref<2x3x128x128xf32, #tpu.memory_space<vmem>>, vector<1x1x128x128xf32>
    %102 = vector.shape_cast %101 : vector<1x1x128x128xf32> to vector<128x128xf32>
    %cst_128 = arith.constant dense<0.000000e+00> : vector<16x128xf32>
    %103 = tpu.matmul %100, %102, %cst_128 {dimension_numbers = #tpu.dot_dimension_numbers<[1], [0], [0], [1], [0, 0, 1, 1], [], []>} : vector<16x128xf32>, vector<128x128xf32>, vector<16x128xf32> -> vector<16x128xf32>
    %104 = arith.addf %95, %103 : vector<16x128xf32>
    %c1_129 = arith.constant 1 : index
    %c1_130 = arith.constant 1 : index
    %c0_131 = arith.constant 0 : index
    %c0_132 = arith.constant 0 : index
    %105 = vector.load %arg6[%c1_129, %c1_130, %c0_131, %c0_132] : memref<2x3x128x128xf32, #tpu.memory_space<vmem>>, vector<1x1x128x128xf32>
    %106 = vector.shape_cast %105 : vector<1x1x128x128xf32> to vector<128x128xf32>
    %cst_133 = arith.constant dense<0.000000e+00> : vector<16x128xf32>
    %107 = tpu.matmul %100, %106, %cst_133 {dimension_numbers = #tpu.dot_dimension_numbers<[1], [0], [0], [1], [0, 0, 1, 1], [], []>} : vector<16x128xf32>, vector<128x128xf32>, vector<16x128xf32> -> vector<16x128xf32>
    %108 = arith.addf %99, %107 : vector<16x128xf32>
    %c2_134 = arith.constant 2 : index
    %c0_135 = arith.constant 0 : index
    %109 = vector.load %arg17[%c2_134, %c0_135] : memref<18x128xf32, #tpu.memory_space<vmem>>, vector<16x128xf32>
    %c0_136 = arith.constant 0 : index
    %c2_137 = arith.constant 2 : index
    %c0_138 = arith.constant 0 : index
    %c0_139 = arith.constant 0 : index
    %110 = vector.load %arg6[%c0_136, %c2_137, %c0_138, %c0_139] : memref<2x3x128x128xf32, #tpu.memory_space<vmem>>, vector<1x1x128x128xf32>
    %111 = vector.shape_cast %110 : vector<1x1x128x128xf32> to vector<128x128xf32>
    %cst_140 = arith.constant dense<0.000000e+00> : vector<16x128xf32>
    %112 = tpu.matmul %109, %111, %cst_140 {dimension_numbers = #tpu.dot_dimension_numbers<[1], [0], [0], [1], [0, 0, 1, 1], [], []>} : vector<16x128xf32>, vector<128x128xf32>, vector<16x128xf32> -> vector<16x128xf32>
    %113 = arith.addf %104, %112 : vector<16x128xf32>
    %c1_141 = arith.constant 1 : index
    %c2_142 = arith.constant 2 : index
    %c0_143 = arith.constant 0 : index
    %c0_144 = arith.constant 0 : index
    %114 = vector.load %arg6[%c1_141, %c2_142, %c0_143, %c0_144] : memref<2x3x128x128xf32, #tpu.memory_space<vmem>>, vector<1x1x128x128xf32>
    %115 = vector.shape_cast %114 : vector<1x1x128x128xf32> to vector<128x128xf32>
    %cst_145 = arith.constant dense<0.000000e+00> : vector<16x128xf32>
    %116 = tpu.matmul %109, %115, %cst_145 {dimension_numbers = #tpu.dot_dimension_numbers<[1], [0], [0], [1], [0, 0, 1, 1], [], []>} : vector<16x128xf32>, vector<128x128xf32>, vector<16x128xf32> -> vector<16x128xf32>
    %117 = arith.addf %108, %116 : vector<16x128xf32>
    %118 = arith.maximumf %113, %117 : vector<16x128xf32>
    %c0_146 = arith.constant 0 : index
    %c0_147 = arith.constant 0 : index
    %119 = vector.load %arg19[%c0_146, %c0_147] : memref<64x128xf32, #tpu.memory_space<vmem>>, vector<16x128xf32>
    tpu.vector_store %arg19[%c0_146, %c0_147], %118 {strides = array<i32>} : memref<64x128xf32, #tpu.memory_space<vmem>>, vector<16x128xf32>,
    %c0_148 = arith.constant 0 : index
    %c0_149 = arith.constant 0 : index
    %120 = tpu.strided_load %arg19[%c0_148, %c0_149] {strides = array<i32: 2, 1>} : memref<64x128xf32, #tpu.memory_space<vmem>>, vector<8x128xf32>
    %c1_150 = arith.constant 1 : index
    %c0_151 = arith.constant 0 : index
    %121 = tpu.strided_load %arg19[%c1_150, %c0_151] {strides = array<i32: 2, 1>} : memref<64x128xf32, #tpu.memory_space<vmem>>, vector<8x128xf32>
    %122 = arith.maximumf %120, %121 : vector<8x128xf32>
    %c0_152 = arith.constant 0 : index
    %c0_153 = arith.constant 0 : index
    %123 = vector.load %arg7[%c0_152, %c0_153] : memref<1x128xf32, #tpu.memory_space<vmem>>, vector<1x128xf32>
    %124 = vector.broadcast %123 : vector<1x128xf32> to vector<8x128xf32>
    %125 = arith.addf %122, %124 : vector<8x128xf32>
    %cst_154 = arith.constant 0.000000e+00 : f32
    %126 = vector.broadcast %cst_154 : f32 to vector<8x128xf32>
    %127 = arith.maximumf %125, %126 : vector<8x128xf32>
    %cst_155 = arith.constant 0.000000e+00 : f32
    %128 = vector.broadcast %cst_155 : f32 to vector<10x128xf32>
    %c0_156 = arith.constant 0 : index
    %c0_157 = arith.constant 0 : index
    %129 = vector.load %arg18[%c0_156, %c0_157] : memref<10x128xf32, #tpu.memory_space<vmem>>, vector<10x128xf32>
    tpu.vector_store %arg18[%c0_156, %c0_157], %128 {strides = array<i32>} : memref<10x128xf32, #tpu.memory_space<vmem>>, vector<10x128xf32>,
    %c1_158 = arith.constant 1 : index
    %c0_159 = arith.constant 0 : index
    %130 = vector.load %arg18[%c1_158, %c0_159] : memref<10x128xf32, #tpu.memory_space<vmem>>, vector<8x128xf32>
    tpu.vector_store %arg18[%c1_158, %c0_159], %127 {strides = array<i32>} : memref<10x128xf32, #tpu.memory_space<vmem>>, vector<8x128xf32>,
    %cst_160 = arith.constant 0.000000e+00 : f32
    %131 = vector.broadcast %cst_160 : f32 to vector<8x128xf32>
    %cst_161 = arith.constant 0.000000e+00 : f32
    %132 = vector.broadcast %cst_161 : f32 to vector<8x128xf32>
    %c0_162 = arith.constant 0 : index
    %c0_163 = arith.constant 0 : index
    %133 = vector.load %arg18[%c0_162, %c0_163] : memref<10x128xf32, #tpu.memory_space<vmem>>, vector<8x128xf32>
    %c0_164 = arith.constant 0 : index
    %c0_165 = arith.constant 0 : index
    %c0_166 = arith.constant 0 : index
    %c0_167 = arith.constant 0 : index
    %134 = vector.load %arg8[%c0_164, %c0_165, %c0_166, %c0_167] : memref<2x3x128x128xf32, #tpu.memory_space<vmem>>, vector<1x1x128x128xf32>
    %135 = vector.shape_cast %134 : vector<1x1x128x128xf32> to vector<128x128xf32>
    %cst_168 = arith.constant dense<0.000000e+00> : vector<8x128xf32>
    %136 = tpu.matmul %133, %135, %cst_168 {dimension_numbers = #tpu.dot_dimension_numbers<[1], [0], [0], [1], [0, 0, 1, 1], [], []>} : vector<8x128xf32>, vector<128x128xf32>, vector<8x128xf32> -> vector<8x128xf32>
    %137 = arith.addf %131, %136 : vector<8x128xf32>
    %c1_169 = arith.constant 1 : index
    %c0_170 = arith.constant 0 : index
    %c0_171 = arith.constant 0 : index
    %c0_172 = arith.constant 0 : index
    %138 = vector.load %arg8[%c1_169, %c0_170, %c0_171, %c0_172] : memref<2x3x128x128xf32, #tpu.memory_space<vmem>>, vector<1x1x128x128xf32>
    %139 = vector.shape_cast %138 : vector<1x1x128x128xf32> to vector<128x128xf32>
    %cst_173 = arith.constant dense<0.000000e+00> : vector<8x128xf32>
    %140 = tpu.matmul %133, %139, %cst_173 {dimension_numbers = #tpu.dot_dimension_numbers<[1], [0], [0], [1], [0, 0, 1, 1], [], []>} : vector<8x128xf32>, vector<128x128xf32>, vector<8x128xf32> -> vector<8x128xf32>
    %141 = arith.addf %132, %140 : vector<8x128xf32>
    %c1_174 = arith.constant 1 : index
    %c0_175 = arith.constant 0 : index
    %142 = vector.load %arg18[%c1_174, %c0_175] : memref<10x128xf32, #tpu.memory_space<vmem>>, vector<8x128xf32>
    %c0_176 = arith.constant 0 : index
    %c1_177 = arith.constant 1 : index
    %c0_178 = arith.constant 0 : index
    %c0_179 = arith.constant 0 : index
    %143 = vector.load %arg8[%c0_176, %c1_177, %c0_178, %c0_179] : memref<2x3x128x128xf32, #tpu.memory_space<vmem>>, vector<1x1x128x128xf32>
    %144 = vector.shape_cast %143 : vector<1x1x128x128xf32> to vector<128x128xf32>
    %cst_180 = arith.constant dense<0.000000e+00> : vector<8x128xf32>
    %145 = tpu.matmul %142, %144, %cst_180 {dimension_numbers = #tpu.dot_dimension_numbers<[1], [0], [0], [1], [0, 0, 1, 1], [], []>} : vector<8x128xf32>, vector<128x128xf32>, vector<8x128xf32> -> vector<8x128xf32>
    %146 = arith.addf %137, %145 : vector<8x128xf32>
    %c1_181 = arith.constant 1 : index
    %c1_182 = arith.constant 1 : index
    %c0_183 = arith.constant 0 : index
    %c0_184 = arith.constant 0 : index
    %147 = vector.load %arg8[%c1_181, %c1_182, %c0_183, %c0_184] : memref<2x3x128x128xf32, #tpu.memory_space<vmem>>, vector<1x1x128x128xf32>
    %148 = vector.shape_cast %147 : vector<1x1x128x128xf32> to vector<128x128xf32>
    %cst_185 = arith.constant dense<0.000000e+00> : vector<8x128xf32>
    %149 = tpu.matmul %142, %148, %cst_185 {dimension_numbers = #tpu.dot_dimension_numbers<[1], [0], [0], [1], [0, 0, 1, 1], [], []>} : vector<8x128xf32>, vector<128x128xf32>, vector<8x128xf32> -> vector<8x128xf32>
    %150 = arith.addf %141, %149 : vector<8x128xf32>
    %c2_186 = arith.constant 2 : index
    %c0_187 = arith.constant 0 : index
    %151 = vector.load %arg18[%c2_186, %c0_187] : memref<10x128xf32, #tpu.memory_space<vmem>>, vector<8x128xf32>
    %c0_188 = arith.constant 0 : index
    %c2_189 = arith.constant 2 : index
    %c0_190 = arith.constant 0 : index
    %c0_191 = arith.constant 0 : index
    %152 = vector.load %arg8[%c0_188, %c2_189, %c0_190, %c0_191] : memref<2x3x128x128xf32, #tpu.memory_space<vmem>>, vector<1x1x128x128xf32>
    %153 = vector.shape_cast %152 : vector<1x1x128x128xf32> to vector<128x128xf32>
    %cst_192 = arith.constant dense<0.000000e+00> : vector<8x128xf32>
    %154 = tpu.matmul %151, %153, %cst_192 {dimension_numbers = #tpu.dot_dimension_numbers<[1], [0], [0], [1], [0, 0, 1, 1], [], []>} : vector<8x128xf32>, vector<128x128xf32>, vector<8x128xf32> -> vector<8x128xf32>
    %155 = arith.addf %146, %154 : vector<8x128xf32>
    %c1_193 = arith.constant 1 : index
    %c2_194 = arith.constant 2 : index
    %c0_195 = arith.constant 0 : index
    %c0_196 = arith.constant 0 : index
    %156 = vector.load %arg8[%c1_193, %c2_194, %c0_195, %c0_196] : memref<2x3x128x128xf32, #tpu.memory_space<vmem>>, vector<1x1x128x128xf32>
    %157 = vector.shape_cast %156 : vector<1x1x128x128xf32> to vector<128x128xf32>
    %cst_197 = arith.constant dense<0.000000e+00> : vector<8x128xf32>
    %158 = tpu.matmul %151, %157, %cst_197 {dimension_numbers = #tpu.dot_dimension_numbers<[1], [0], [0], [1], [0, 0, 1, 1], [], []>} : vector<8x128xf32>, vector<128x128xf32>, vector<8x128xf32> -> vector<8x128xf32>
    %159 = arith.addf %150, %158 : vector<8x128xf32>
    %160 = arith.maximumf %155, %159 : vector<8x128xf32>
    %c0_198 = arith.constant 0 : index
    %c0_199 = arith.constant 0 : index
    %161 = vector.load %arg19[%c0_198, %c0_199] : memref<64x128xf32, #tpu.memory_space<vmem>>, vector<8x128xf32>
    tpu.vector_store %arg19[%c0_198, %c0_199], %160 {strides = array<i32>} : memref<64x128xf32, #tpu.memory_space<vmem>>, vector<8x128xf32>,
    %c0_200 = arith.constant 0 : index
    %c0_201 = arith.constant 0 : index
    %162 = tpu.strided_load %arg19[%c0_200, %c0_201] {strides = array<i32: 2, 1>} : memref<64x128xf32, #tpu.memory_space<vmem>>, vector<4x128xf32>
    %c1_202 = arith.constant 1 : index
    %c0_203 = arith.constant 0 : index
    %163 = tpu.strided_load %arg19[%c1_202, %c0_203] {strides = array<i32: 2, 1>} : memref<64x128xf32, #tpu.memory_space<vmem>>, vector<4x128xf32>
    %164 = arith.maximumf %162, %163 : vector<4x128xf32>
    %c0_204 = arith.constant 0 : index
    %c0_205 = arith.constant 0 : index
    %165 = vector.load %arg9[%c0_204, %c0_205] : memref<1x128xf32, #tpu.memory_space<vmem>>, vector<1x128xf32>
    %166 = vector.broadcast %165 : vector<1x128xf32> to vector<4x128xf32>
    %167 = arith.addf %164, %166 : vector<4x128xf32>
    %cst_206 = arith.constant 0.000000e+00 : f32
    %168 = vector.broadcast %cst_206 : f32 to vector<4x128xf32>
    %169 = arith.maximumf %167, %168 : vector<4x128xf32>
    %c0_207 = arith.constant 0 : index
    %c0_208 = arith.constant 0 : index
    %170 = vector.load %arg11[%c0_207, %c0_208] : memref<1x40xf32, #tpu.memory_space<vmem>>, vector<1x40xf32>
    %171 = vector.extract_strided_slice %169 {offsets = [0, 0], sizes = [1, 128], strides = [1, 1]} : vector<4x128xf32> to vector<1x128xf32>
    %c0_209 = arith.constant 0 : index
    %c0_210 = arith.constant 0 : index
    %c0_211 = arith.constant 0 : index
    %172 = vector.load %arg10[%c0_209, %c0_210, %c0_211] : memref<4x128x40xf32, #tpu.memory_space<vmem>>, vector<1x128x40xf32>
    %173 = vector.shape_cast %172 : vector<1x128x40xf32> to vector<128x40xf32>
    %cst_212 = arith.constant dense<0.000000e+00> : vector<1x40xf32>
    %174 = tpu.matmul %171, %173, %cst_212 {dimension_numbers = #tpu.dot_dimension_numbers<[1], [0], [0], [1], [0, 0, 1, 1], [], []>} : vector<1x128xf32>, vector<128x40xf32>, vector<1x40xf32> -> vector<1x40xf32>
    %175 = arith.addf %170, %174 : vector<1x40xf32>
    %176 = vector.extract_strided_slice %169 {offsets = [1, 0], sizes = [1, 128], strides = [1, 1]} : vector<4x128xf32> to vector<1x128xf32>
    %c1_213 = arith.constant 1 : index
    %c0_214 = arith.constant 0 : index
    %c0_215 = arith.constant 0 : index
    %177 = vector.load %arg10[%c1_213, %c0_214, %c0_215] : memref<4x128x40xf32, #tpu.memory_space<vmem>>, vector<1x128x40xf32>
    %178 = vector.shape_cast %177 : vector<1x128x40xf32> to vector<128x40xf32>
    %cst_216 = arith.constant dense<0.000000e+00> : vector<1x40xf32>
    %179 = tpu.matmul %176, %178, %cst_216 {dimension_numbers = #tpu.dot_dimension_numbers<[1], [0], [0], [1], [0, 0, 1, 1], [], []>} : vector<1x128xf32>, vector<128x40xf32>, vector<1x40xf32> -> vector<1x40xf32>
    %180 = arith.addf %175, %179 : vector<1x40xf32>
    %181 = vector.extract_strided_slice %169 {offsets = [2, 0], sizes = [1, 128], strides = [1, 1]} : vector<4x128xf32> to vector<1x128xf32>
    %c2_217 = arith.constant 2 : index
    %c0_218 = arith.constant 0 : index
    %c0_219 = arith.constant 0 : index
    %182 = vector.load %arg10[%c2_217, %c0_218, %c0_219] : memref<4x128x40xf32, #tpu.memory_space<vmem>>, vector<1x128x40xf32>
    %183 = vector.shape_cast %182 : vector<1x128x40xf32> to vector<128x40xf32>
    %cst_220 = arith.constant dense<0.000000e+00> : vector<1x40xf32>
    %184 = tpu.matmul %181, %183, %cst_220 {dimension_numbers = #tpu.dot_dimension_numbers<[1], [0], [0], [1], [0, 0, 1, 1], [], []>} : vector<1x128xf32>, vector<128x40xf32>, vector<1x40xf32> -> vector<1x40xf32>
    %185 = arith.addf %180, %184 : vector<1x40xf32>
    %186 = vector.extract_strided_slice %169 {offsets = [3, 0], sizes = [1, 128], strides = [1, 1]} : vector<4x128xf32> to vector<1x128xf32>
    %c3 = arith.constant 3 : index
    %c0_221 = arith.constant 0 : index
    %c0_222 = arith.constant 0 : index
    %187 = vector.load %arg10[%c3, %c0_221, %c0_222] : memref<4x128x40xf32, #tpu.memory_space<vmem>>, vector<1x128x40xf32>
    %188 = vector.shape_cast %187 : vector<1x128x40xf32> to vector<128x40xf32>
    %cst_223 = arith.constant dense<0.000000e+00> : vector<1x40xf32>
    %189 = tpu.matmul %186, %188, %cst_223 {dimension_numbers = #tpu.dot_dimension_numbers<[1], [0], [0], [1], [0, 0, 1, 1], [], []>} : vector<1x128xf32>, vector<128x40xf32>, vector<1x40xf32> -> vector<1x40xf32>
    %190 = arith.addf %185, %189 : vector<1x40xf32>
    %c0_224 = arith.constant 0 : index
    %c0_225 = arith.constant 0 : index
    %191 = vector.load %arg12[%c0_224, %c0_225] : memref<40x8xf32, #tpu.memory_space<vmem>>, vector<40x8xf32>
    %cst_226 = arith.constant dense<0.000000e+00> : vector<1x8xf32>
    %192 = tpu.matmul %190, %191, %cst_226 {dimension_numbers = #tpu.dot_dimension_numbers<[1], [0], [0], [1], [0, 0, 1, 1], [], []>} : vector<1x40xf32>, vector<40x8xf32>, vector<1x8xf32> -> vector<1x8xf32>
    %c0_227 = arith.constant 0 : index
    %c0_228 = arith.constant 0 : index
    %193 = vector.load %arg13[%c0_227, %c0_228] : memref<1x8xf32, #tpu.memory_space<vmem>>, vector<1x8xf32>
    %194 = arith.addf %192, %193 : vector<1x8xf32>
    %cst_229 = arith.constant dense<0xFF800000> : vector<1xf32>
    %195 = vector.multi_reduction <maximumf>, %194, %cst_229 [1] : vector<1x8xf32> to vector<1xf32>
    %196 = vector.shape_cast %195 : vector<1xf32> to vector<1x1xf32>
    %197 = vector.broadcast %196 : vector<1x1xf32> to vector<1x8xf32>
    %198 = arith.subf %194, %197 : vector<1x8xf32>
    %199 = math.exp %198 : vector<1x8xf32>
    %cst_230 = arith.constant dense<0.000000e+00> : vector<1xf32>
    %200 = vector.multi_reduction <add>, %199, %cst_230 [1] : vector<1x8xf32> to vector<1xf32>
    %201 = vector.shape_cast %200 : vector<1xf32> to vector<1x1xf32>
    %202 = vector.broadcast %196 : vector<1x1xf32> to vector<1x8xf32>
    %203 = arith.subf %194, %202 : vector<1x8xf32>
    %204 = math.log %201 : vector<1x1xf32>
    %205 = vector.broadcast %204 : vector<1x1xf32> to vector<1x8xf32>
    %206 = arith.subf %203, %205 : vector<1x8xf32>
    %c0_231 = arith.constant 0 : index
    %c0_232 = arith.constant 0 : index
    %c0_233 = arith.constant 0 : index
    %207 = vector.load %arg14[%c0_231, %c0_232, %c0_233] : memref<1x1x8xf32, #tpu.memory_space<vmem>>, vector<1x1x8xf32>
    %208 = vector.shape_cast %207 : vector<1x1x8xf32> to vector<1x8xf32>
    %209 = vector.shape_cast %206 : vector<1x8xf32> to vector<1x1x8xf32>
    tpu.vector_store %arg14[%c0_231, %c0_232, %c0_233], %209 {strides = array<i32>} : memref<1x1x8xf32, #tpu.memory_space<vmem>>, vector<1x1x8xf32>,
    return
  }
  func.func @transform_0(%arg0: i32) -> (i32, i32, i32) {
    %c0_i32 = arith.constant 0 : i32
    %c0_i32_0 = arith.constant 0 : i32
    %c0_i32_1 = arith.constant 0 : i32
    return %arg0, %c0_i32, %c0_i32_0 : i32, i32, i32
  }
  func.func @transform_1(%arg0: i32) -> (i32, i32, i32, i32) {
    %c0_i32 = arith.constant 0 : i32
    %c0_i32_0 = arith.constant 0 : i32
    %c0_i32_1 = arith.constant 0 : i32
    %c0_i32_2 = arith.constant 0 : i32
    %c0_i32_3 = arith.constant 0 : i32
    return %c0_i32, %c0_i32_0, %c0_i32_1, %c0_i32_2 : i32, i32, i32, i32
  }
  func.func @transform_2(%arg0: i32) -> (i32, i32) {
    %c0_i32 = arith.constant 0 : i32
    %c0_i32_0 = arith.constant 0 : i32
    %c0_i32_1 = arith.constant 0 : i32
    return %c0_i32, %c0_i32_0 : i32, i32
  }
  func.func @transform_3(%arg0: i32) -> (i32, i32, i32, i32) {
    %c0_i32 = arith.constant 0 : i32
    %c0_i32_0 = arith.constant 0 : i32
    %c0_i32_1 = arith.constant 0 : i32
    %c0_i32_2 = arith.constant 0 : i32
    %c0_i32_3 = arith.constant 0 : i32
    return %c0_i32, %c0_i32_0, %c0_i32_1, %c0_i32_2 : i32, i32, i32, i32
  }
  func.func @transform_4(%arg0: i32) -> (i32, i32) {
    %c0_i32 = arith.constant 0 : i32
    %c0_i32_0 = arith.constant 0 : i32
    %c0_i32_1 = arith.constant 0 : i32
    return %c0_i32, %c0_i32_0 : i32, i32
  }
  func.func @transform_5(%arg0: i32) -> (i32, i32, i32, i32) {
    %c0_i32 = arith.constant 0 : i32
    %c0_i32_0 = arith.constant 0 : i32
    %c0_i32_1 = arith.constant 0 : i32
    %c0_i32_2 = arith.constant 0 : i32
    %c0_i32_3 = arith.constant 0 : i32
    return %c0_i32, %c0_i32_0, %c0_i32_1, %c0_i32_2 : i32, i32, i32, i32
  }
  func.func @transform_6(%arg0: i32) -> (i32, i32) {
    %c0_i32 = arith.constant 0 : i32
    %c0_i32_0 = arith.constant 0 : i32
    %c0_i32_1 = arith.constant 0 : i32
    return %c0_i32, %c0_i32_0 : i32, i32
  }
  func.func @transform_7(%arg0: i32) -> (i32, i32, i32, i32) {
    %c0_i32 = arith.constant 0 : i32
    %c0_i32_0 = arith.constant 0 : i32
    %c0_i32_1 = arith.constant 0 : i32
    %c0_i32_2 = arith.constant 0 : i32
    %c0_i32_3 = arith.constant 0 : i32
    return %c0_i32, %c0_i32_0, %c0_i32_1, %c0_i32_2 : i32, i32, i32, i32
  }
  func.func @transform_8(%arg0: i32) -> (i32, i32) {
    %c0_i32 = arith.constant 0 : i32
    %c0_i32_0 = arith.constant 0 : i32
    %c0_i32_1 = arith.constant 0 : i32
    return %c0_i32, %c0_i32_0 : i32, i32
  }
  func.func @transform_9(%arg0: i32) -> (i32, i32, i32) {
    %c0_i32 = arith.constant 0 : i32
    %c0_i32_0 = arith.constant 0 : i32
    %c0_i32_1 = arith.constant 0 : i32
    %c0_i32_2 = arith.constant 0 : i32
    return %c0_i32, %c0_i32_0, %c0_i32_1 : i32, i32, i32
  }
  func.func @transform_10(%arg0: i32) -> (i32, i32) {
    %c0_i32 = arith.constant 0 : i32
    %c0_i32_0 = arith.constant 0 : i32
    %c0_i32_1 = arith.constant 0 : i32
    return %c0_i32, %c0_i32_0 : i32, i32
  }
  func.func @transform_11(%arg0: i32) -> (i32, i32) {
    %c0_i32 = arith.constant 0 : i32
    %c0_i32_0 = arith.constant 0 : i32
    %c0_i32_1 = arith.constant 0 : i32
    return %c0_i32, %c0_i32_0 : i32, i32
  }
  func.func @transform_12(%arg0: i32) -> (i32, i32) {
    %c0_i32 = arith.constant 0 : i32
    %c0_i32_0 = arith.constant 0 : i32
    %c0_i32_1 = arith.constant 0 : i32
    return %c0_i32, %c0_i32_0 : i32, i32
  }
  func.func @transform_13(%arg0: i32) -> (i32, i32, i32) {
    %c0_i32 = arith.constant 0 : i32
    %c0_i32_0 = arith.constant 0 : i32
    %c0_i32_1 = arith.constant 0 : i32
    return %arg0, %c0_i32, %c0_i32_0 : i32, i32, i32
  }
}

</mosaic_0001>

<llo_original>
// kernel: tpu_custom_call.1
$region0: #{tpu_custom_call.1}
  #allocation0 [shape = 'u32[]', space=smem, size = 0x4, offset = 0x4, fixed_abs, tag = 'smem constant byte address 0x4 - core index']
  #allocation1 [shape = 'u32[144,128]{1,0:T(1,128)}', space=vmem, size = 0x12000, scoped, tag = 'internal scratch']
  #allocation2 [shape = 'f32[66,64]{1,0:T(8,128)}', space=vmem, size = 0x9000, scoped, tag = 'scratch operand']
  #allocation3 [shape = 'f32[34,128]{1,0:T(8,128)}', space=vmem, size = 0x5000, scoped, tag = 'scratch operand']
  #allocation4 [shape = 'f32[18,128]{1,0:T(8,128)}', space=vmem, size = 0x3000, scoped, tag = 'scratch operand']
  #allocation5 [shape = 'f32[10,128]{1,0:T(8,128)}', space=vmem, size = 0x2000, scoped, tag = 'scratch operand']
  #allocation6 [shape = 'f32[64,128]{1,0:T(8,128)}', space=vmem, size = 0x8000, scoped, tag = 'scratch operand']
  %s0 = inlined_call_operand.vmem [shape: f32[2,64,64], index: 0, kind: input, shape index: {}]
  %s1 = inlined_call_operand.vmem [shape: f32[2,3,64,128], index: 1, kind: input, shape index: {}]
  %s2 = inlined_call_operand.vmem [shape: f32[1,128], index: 2, kind: input, shape index: {}]
  %s3 = inlined_call_operand.hbm [shape: f32[2,3,128,128], index: 3, kind: input, shape index: {}]
  %s4 = inlined_call_operand.vmem [shape: f32[1,128], index: 4, kind: input, shape index: {}]
  %s5 = inlined_call_operand.hbm [shape: f32[2,3,128,128], index: 5, kind: input, shape index: {}]
  %s6 = inlined_call_operand.vmem [shape: f32[1,128], index: 6, kind: input, shape index: {}]
  %s7 = inlined_call_operand.hbm [shape: f32[2,3,128,128], index: 7, kind: input, shape index: {}]
  %s8 = inlined_call_operand.vmem [shape: f32[1,128], index: 8, kind: input, shape index: {}]
  %s9 = inlined_call_operand.vmem [shape: f32[4,128,40], index: 9, kind: input, shape index: {}]
  %s10 = inlined_call_operand.vmem [shape: f32[1,40], index: 10, kind: input, shape index: {}]
  %s11 = inlined_call_operand.vmem [shape: f32[40,8], index: 11, kind: input, shape index: {}]
  %s12 = inlined_call_operand.vmem [shape: f32[1,8], index: 12, kind: input, shape index: {}]
  %s13 = inlined_call_operand.hbm [shape: f32[2,1,8], index: 13, kind: output, shape index: {}]
  %s14 = sld [smem:[#allocation0]]
  $region97: #{tpu_custom_call.1} parent=0
    _
  %s16 = ssub.s32 1, %s14
  %s17 = scalar_select 0, %s16, %s14
  $region1: #{tpu_custom_call.1} parent=0
    #allocation7 [shape = 'u8[393216]{0}', space=vmem, size = 0x60000, scoped, tag = 'input window, operand 3, single buffered']
    #allocation8 [shape = 's32[2]{0}', space=sflag, size = 0x8, scoped, tag = 'scoped memory for tpu_custom_call.1']
    #allocation9 [shape = 's32[2]{0}', space=sflag, size = 0x8, scoped, tag = 'scoped memory for tpu_custom_call.1']
    #allocation10 [shape = 'u8[393216]{0}', space=vmem, size = 0x60000, scoped, tag = 'input window, operand 5, single buffered']
    #allocation11 [shape = 's32[1]{0}', space=sflag, size = 0x4, scoped, tag = 'scoped memory for tpu_custom_call.1']
    #allocation12 [shape = 'u8[393216]{0}', space=vmem, size = 0x60000, scoped, tag = 'input window, operand 7, single buffered']
    #allocation13 [shape = 'u8[1024]{0}', space=vmem, size = 0x400, scoped, tag = 'output window, operand 0']
    %18 = vsyncpa [#allocation8], 0
    %19 = vsyncpa [#allocation11], 0
    %20 = vsyncpa [#allocation9], 0
    %s21 = scalar_lea.sflag [#allocation9], 1
    %22 = vsyncpa %s21, 0
    loop: start=0, step=1, limit=4
    $region2: #{tpu_custom_call.1} parent=1 // loop_pre_header
      _
    $region3: #{tpu_custom_call.1} parent=1 // loop_header
      %s24 = sphi 0, %s28
      %p25 = scmp.ge.s32.totalorder %s24, 4
      %s34 = sphi 0, %s36
      %s37 = sphi 0, %s34
      %s38 = sphi 0, %s37
      %s54 = sphi 0, %s38
      %s58 = sphi 0, %s58
      %s60 = sphi 0, %s58
      %s61 = sphi 0, %s60
      %s75 = sphi 0, %s61
      %s79 = sphi 0, %s79
      %s81 = sphi 0, %s79
      %s82 = sphi 0, %s81
      %s96 = sphi 0, %s82
      %s100 = sphi 0, %s100
      %s102 = sphi 0, %s100
      %s103 = sphi 0, %s102
      %s117 = sphi 0, %s103
      %s121 = sphi 0, %s121
      %s123 = sphi 0, %s121
      %s124 = sphi 0, %s123
      %s138 = sphi 0, %s124
      %s142 = sphi 0, %s142
      %s144 = sphi 0, %s142
      %s145 = sphi 0, %s144
      %s159 = sphi 0, %s145
      %s163 = sphi 0, %s163
      %s165 = sphi 0, %s163
      %s166 = sphi 0, %s165
      %s180 = sphi 0, %s166
      %s184 = sphi 0, %s184
      %s186 = sphi 0, %s184
      %s187 = sphi 0, %s186
      %s201 = sphi 0, %s187
      %s205 = sphi 0, %s205
      %s207 = sphi 0, %s205
      %s208 = sphi 0, %s207
      %s222 = sphi 0, %s208
      %s226 = sphi 0, %s226
      %s228 = sphi 0, %s226
      %s229 = sphi 0, %s228
      %s243 = sphi 0, %s229
      %s247 = sphi 0, %s247
      %s249 = sphi 0, %s247
      %s250 = sphi 0, %s249
      %s264 = sphi 0, %s250
      %s268 = sphi 0, %s268
      %s270 = sphi 0, %s268
      %s271 = sphi 0, %s270
      %s285 = sphi 0, %s271
      %s289 = sphi 0, %s289
      %s291 = sphi 0, %s289
      %s292 = sphi 0, %s291
      %s306 = sphi 0, %s292
      %s312 = sphi 0, %s314
      %s315 = sphi 0, %s312
      %s316 = sphi 0, %s315
      %s332 = sphi 0, %s316
    $region4: #{tpu_custom_call.1} parent=1 // loop_header_branch
      %27 = sbr.rel (%p25) target = $region8
    $region5: #{tpu_custom_call.1} parent=1 // loop_body
      %s29 = ssub.s32 %s24, 1
      %s30 = ssub.s32 %s24, 2
      %s31 = sadd.s32 %s24, 1
      %s32 = ssub.s32 %s24, %s31
      %p33 = scmp.eq.s32.totalorder %s32, 0
      %s35 = sadd.s32 %s34, 1
      %s36 = scalar_select %p33, %s34, %s35
      %p39 = pneg %p33
      %p40 = scmp.eq.s32.totalorder %s24, 1
      %p41 = por %p39, %p40
      %p42 = scmp.ne.s32.totalorder %s34, %s37
      %p43 = scmp.eq.s32.totalorder %s24, 0
      %p44 = por %p42, %p43
      %p45 = scmp.ne.s32.totalorder %s34, %s37
      %p46 = scmp.eq.s32.totalorder %s29, 1
      %p47 = por %p45, %p46
      %p48 = scmp.ne.s32.totalorder %s37, %s38
      %p49 = scmp.eq.s32.totalorder %s29, 0
      %p50 = por %p48, %p49
      %p51 = scmp.ne.s32.totalorder %s37, %s38
      %p52 = scmp.eq.s32.totalorder %s30, 1
      %p53 = por %p51, %p52
      %p55 = scmp.ne.s32.totalorder %s38, %s54
      %p56 = scmp.eq.s32.totalorder %s30, 0
      %p57 = por %p55, %p56
      %s59 = sadd.s32 %s58, 1
      %p62 = scmp.eq.s32.totalorder %s24, 1
      %p63 = scmp.ne.s32.totalorder %s58, %s60
      %p64 = scmp.eq.s32.totalorder %s24, 0
      %p65 = por %p63, %p64
      %p66 = scmp.ne.s32.totalorder %s58, %s60
      %p67 = scmp.eq.s32.totalorder %s29, 1
      %p68 = por %p66, %p67
      %p69 = scmp.ne.s32.totalorder %s60, %s61
      %p70 = scmp.eq.s32.totalorder %s29, 0
      %p71 = por %p69, %p70
      %p72 = scmp.ne.s32.totalorder %s60, %s61
      %p73 = scmp.eq.s32.totalorder %s30, 1
      %p74 = por %p72, %p73
      %p76 = scmp.ne.s32.totalorder %s61, %s75
      %p77 = scmp.eq.s32.totalorder %s30, 0
      %p78 = por %p76, %p77
      %s80 = sadd.s32 %s79, 1
      %p83 = scmp.eq.s32.totalorder %s24, 1
      %p84 = scmp.ne.s32.totalorder %s79, %s81
      %p85 = scmp.eq.s32.totalorder %s24, 0
      %p86 = por %p84, %p85
      %p87 = scmp.ne.s32.totalorder %s79, %s81
      %p88 = scmp.eq.s32.totalorder %s29, 1
      %p89 = por %p87, %p88
      %p90 = scmp.ne.s32.totalorder %s81, %s82
      %p91 = scmp.eq.s32.totalorder %s29, 0
      %p92 = por %p90, %p91
      %p93 = scmp.ne.s32.totalorder %s81, %s82
      %p94 = scmp.eq.s32.totalorder %s30, 1
      %p95 = por %p93, %p94
      %p97 = scmp.ne.s32.totalorder %s82, %s96
      %p98 = scmp.eq.s32.totalorder %s30, 0
      %p99 = por %p97, %p98
      %s101 = sadd.s32 %s100, 1
      %p104 = scmp.eq.s32.totalorder %s24, 1
      %p105 = scmp.ne.s32.totalorder %s100, %s102
      %p106 = scmp.eq.s32.totalorder %s24, 0
      %p107 = por %p105, %p106
      %p108 = scmp.ne.s32.totalorder %s100, %s102
      %p109 = scmp.eq.s32.totalorder %s29, 1
      %p110 = por %p108, %p109
      %p111 = scmp.ne.s32.totalorder %s102, %s103
      %p112 = scmp.eq.s32.totalorder %s29, 0
      %p113 = por %p111, %p112
      %p114 = scmp.ne.s32.totalorder %s102, %s103
      %p115 = scmp.eq.s32.totalorder %s30, 1
      %p116 = por %p114, %p115
      %p118 = scmp.ne.s32.totalorder %s103, %s117
      %p119 = scmp.eq.s32.totalorder %s30, 0
      %p120 = por %p118, %p119
      %s122 = sadd.s32 %s121, 1
      %p125 = scmp.eq.s32.totalorder %s24, 1
      %p126 = scmp.ne.s32.totalorder %s121, %s123
      %p127 = scmp.eq.s32.totalorder %s24, 0
      %p128 = por %p126, %p127
      %p129 = scmp.ne.s32.totalorder %s121, %s123
      %p130 = scmp.eq.s32.totalorder %s29, 1
      %p131 = por %p129, %p130
      %p132 = scmp.ne.s32.totalorder %s123, %s124
      %p133 = scmp.eq.s32.totalorder %s29, 0
      %p134 = por %p132, %p133
      %p135 = scmp.ne.s32.totalorder %s123, %s124
      %p136 = scmp.eq.s32.totalorder %s30, 1
      %p137 = por %p135, %p136
      %p139 = scmp.ne.s32.totalorder %s124, %s138
      %p140 = scmp.eq.s32.totalorder %s30, 0
      %p141 = por %p139, %p140
      %s143 = sadd.s32 %s142, 1
      %p146 = scmp.eq.s32.totalorder %s24, 1
      %p147 = scmp.ne.s32.totalorder %s142, %s144
      %p148 = scmp.eq.s32.totalorder %s24, 0
      %p149 = por %p147, %p148
      %p150 = scmp.ne.s32.totalorder %s142, %s144
      %p151 = scmp.eq.s32.totalorder %s29, 1
      %p152 = por %p150, %p151
      %p153 = scmp.ne.s32.totalorder %s144, %s145
      %p154 = scmp.eq.s32.totalorder %s29, 0
      %p155 = por %p153, %p154
      %p156 = scmp.ne.s32.totalorder %s144, %s145
      %p157 = scmp.eq.s32.totalorder %s30, 1
      %p158 = por %p156, %p157
      %p160 = scmp.ne.s32.totalorder %s145, %s159
      %p161 = scmp.eq.s32.totalorder %s30, 0
      %p162 = por %p160, %p161
      %s164 = sadd.s32 %s163, 1
      %p167 = scmp.eq.s32.totalorder %s24, 1
      %p168 = scmp.ne.s32.totalorder %s163, %s165
      %p169 = scmp.eq.s32.totalorder %s24, 0
      %p170 = por %p168, %p169
      %p171 = scmp.ne.s32.totalorder %s163, %s165
      %p172 = scmp.eq.s32.totalorder %s29, 1
      %p173 = por %p171, %p172
      %p174 = scmp.ne.s32.totalorder %s165, %s166
      %p175 = scmp.eq.s32.totalorder %s29, 0
      %p176 = por %p174, %p175
      %p177 = scmp.ne.s32.totalorder %s165, %s166
      %p178 = scmp.eq.s32.totalorder %s30, 1
      %p179 = por %p177, %p178
      %p181 = scmp.ne.s32.totalorder %s166, %s180
      %p182 = scmp.eq.s32.totalorder %s30, 0
      %p183 = por %p181, %p182
      %s185 = sadd.s32 %s184, 1
      %p188 = scmp.eq.s32.totalorder %s24, 1
      %p189 = scmp.ne.s32.totalorder %s184, %s186
      %p190 = scmp.eq.s32.totalorder %s24, 0
      %p191 = por %p189, %p190
      %p192 = scmp.ne.s32.totalorder %s184, %s186
      %p193 = scmp.eq.s32.totalorder %s29, 1
      %p194 = por %p192, %p193
      %p195 = scmp.ne.s32.totalorder %s186, %s187
      %p196 = scmp.eq.s32.totalorder %s29, 0
      %p197 = por %p195, %p196
      %p198 = scmp.ne.s32.totalorder %s186, %s187
      %p199 = scmp.eq.s32.totalorder %s30, 1
      %p200 = por %p198, %p199
      %p202 = scmp.ne.s32.totalorder %s187, %s201
      %p203 = scmp.eq.s32.totalorder %s30, 0
      %p204 = por %p202, %p203
      %s206 = sadd.s32 %s205, 1
      %p209 = scmp.eq.s32.totalorder %s24, 1
      %p210 = scmp.ne.s32.totalorder %s205, %s207
      %p211 = scmp.eq.s32.totalorder %s24, 0
      %p212 = por %p210, %p211
      %p213 = scmp.ne.s32.totalorder %s205, %s207
      %p214 = scmp.eq.s32.totalorder %s29, 1
      %p215 = por %p213, %p214
      %p216 = scmp.ne.s32.totalorder %s207, %s208
      %p217 = scmp.eq.s32.totalorder %s29, 0
      %p218 = por %p216, %p217
      %p219 = scmp.ne.s32.totalorder %s207, %s208
      %p220 = scmp.eq.s32.totalorder %s30, 1
      %p221 = por %p219, %p220
      %p223 = scmp.ne.s32.totalorder %s208, %s222
      %p224 = scmp.eq.s32.totalorder %s30, 0
      %p225 = por %p223, %p224
      %s227 = sadd.s32 %s226, 1
      %p230 = scmp.eq.s32.totalorder %s24, 1
      %p231 = scmp.ne.s32.totalorder %s226, %s228
      %p232 = scmp.eq.s32.totalorder %s24, 0
      %p233 = por %p231, %p232
      %p234 = scmp.ne.s32.totalorder %s226, %s228
      %p235 = scmp.eq.s32.totalorder %s29, 1
      %p236 = por %p234, %p235
      %p237 = scmp.ne.s32.totalorder %s228, %s229
      %p238 = scmp.eq.s32.totalorder %s29, 0
      %p239 = por %p237, %p238
      %p240 = scmp.ne.s32.totalorder %s228, %s229
      %p241 = scmp.eq.s32.totalorder %s30, 1
      %p242 = por %p240, %p241
      %p244 = scmp.ne.s32.totalorder %s229, %s243
      %p245 = scmp.eq.s32.totalorder %s30, 0
      %p246 = por %p244, %p245
      %s248 = sadd.s32 %s247, 1
      %p251 = scmp.eq.s32.totalorder %s24, 1
      %p252 = scmp.ne.s32.totalorder %s247, %s249
      %p253 = scmp.eq.s32.totalorder %s24, 0
      %p254 = por %p252, %p253
      %p255 = scmp.ne.s32.totalorder %s247, %s249
      %p256 = scmp.eq.s32.totalorder %s29, 1
      %p257 = por %p255, %p256
      %p258 = scmp.ne.s32.totalorder %s249, %s250
      %p259 = scmp.eq.s32.totalorder %s29, 0
      %p260 = por %p258, %p259
      %p261 = scmp.ne.s32.totalorder %s249, %s250
      %p262 = scmp.eq.s32.totalorder %s30, 1
      %p263 = por %p261, %p262
      %p265 = scmp.ne.s32.totalorder %s250, %s264
      %p266 = scmp.eq.s32.totalorder %s30, 0
      %p267 = por %p265, %p266
      %s269 = sadd.s32 %s268, 1
      %p272 = scmp.eq.s32.totalorder %s24, 1
      %p273 = scmp.ne.s32.totalorder %s268, %s270
      %p274 = scmp.eq.s32.totalorder %s24, 0
      %p275 = por %p273, %p274
      %p276 = scmp.ne.s32.totalorder %s268, %s270
      %p277 = scmp.eq.s32.totalorder %s29, 1
      %p278 = por %p276, %p277
      %p279 = scmp.ne.s32.totalorder %s270, %s271
      %p280 = scmp.eq.s32.totalorder %s29, 0
      %p281 = por %p279, %p280
      %p282 = scmp.ne.s32.totalorder %s270, %s271
      %p283 = scmp.eq.s32.totalorder %s30, 1
      %p284 = por %p282, %p283
      %p286 = scmp.ne.s32.totalorder %s271, %s285
      %p287 = scmp.eq.s32.totalorder %s30, 0
      %p288 = por %p286, %p287
      %s290 = sadd.s32 %s289, 1
      %p293 = scmp.eq.s32.totalorder %s24, 1
      %p294 = scmp.ne.s32.totalorder %s289, %s291
      %p295 = scmp.eq.s32.totalorder %s24, 0
      %p296 = por %p294, %p295
      %p297 = scmp.ne.s32.totalorder %s289, %s291
      %p298 = scmp.eq.s32.totalorder %s29, 1
      %p299 = por %p297, %p298
      %p300 = scmp.ne.s32.totalorder %s291, %s292
      %p301 = scmp.eq.s32.totalorder %s29, 0
      %p302 = por %p300, %p301
      %p303 = scmp.ne.s32.totalorder %s291, %s292
      %p304 = scmp.eq.s32.totalorder %s30, 1
      %p305 = por %p303, %p304
      %p307 = scmp.ne.s32.totalorder %s292, %s306
      %p308 = scmp.eq.s32.totalorder %s30, 0
      %p309 = por %p307, %p308
      %s310 = ssub.s32 %s24, %s31
      %p311 = scmp.eq.s32.totalorder %s310, 0
      %s313 = sadd.s32 %s312, 1
      %s314 = scalar_select %p311, %s312, %s313
      %p317 = pneg %p311
      %p318 = scmp.eq.s32.totalorder %s24, 1
      %p319 = por %p317, %p318
      %p320 = scmp.ne.s32.totalorder %s312, %s315
      %p321 = scmp.eq.s32.totalorder %s24, 0
      %p322 = por %p320, %p321
      %p323 = scmp.ne.s32.totalorder %s312, %s315
      %p324 = scmp.eq.s32.totalorder %s29, 1
      %p325 = por %p323, %p324
      %p326 = scmp.ne.s32.totalorder %s315, %s316
      %p327 = scmp.eq.s32.totalorder %s29, 0
      %p328 = por %p326, %p327
      %p329 = scmp.ne.s32.totalorder %s315, %s316
      %p330 = scmp.eq.s32.totalorder %s30, 1
      %p331 = por %p329, %p330
      %p333 = scmp.ne.s32.totalorder %s316, %s332
      %p334 = scmp.eq.s32.totalorder %s30, 0
      %p335 = por %p333, %p334
      %p336 = scmp.le.s32.totalorder 1, %s24
      %p337 = scmp.lt.s32.totalorder %s24, 3
      %p338 = pnand %p336, %p337
      %p339 = pneg %p338
      // Predicated region
      $region9: #{tpu_custom_call.1} parent=5 // pred_check
        _
      $region10: #{tpu_custom_call.1} parent=5 // pred_check_branch
        %341 = sbr.rel (%p338) target = $region12
      $region11: #{tpu_custom_call.1} parent=5 // pred_region
        %s342 = ssub.s32 %s24, 1
        // Predicated region
        $region13: #{tpu_custom_call.1} parent=11 // pred_check
          %p343 = pneg %p71
        $region14: #{tpu_custom_call.1} parent=11 // pred_check_branch
          %345 = sbr.rel (%p343) target = $region16
        $region15: #{tpu_custom_call.1} parent=11 // pred_region
          _
        $region16: #{tpu_custom_call.1} parent=11 // pred_fallthru
          _
        // Predicated region
        $region17: #{tpu_custom_call.1} parent=11 // pred_check
          %p346 = pneg %p92
        $region18: #{tpu_custom_call.1} parent=11 // pred_check_branch
          %348 = sbr.rel (%p346) target = $region20
        $region19: #{tpu_custom_call.1} parent=11 // pred_region
          _
        $region20: #{tpu_custom_call.1} parent=11 // pred_fallthru
          _
        // Predicated region
        $region21: #{tpu_custom_call.1} parent=11 // pred_check
          %p349 = pneg %p113
        $region22: #{tpu_custom_call.1} parent=11 // pred_check_branch
          %351 = sbr.rel (%p349) target = $region24
        $region23: #{tpu_custom_call.1} parent=11 // pred_region
          %s353 = ssub.s32 12288, 12288
          %354 = vsyncadd [#allocation8], %s353
          %s355 = sshll.u32 [#allocation7], 4
          %s356 = int_to_ptr.vmem [resolvable:$true] %s355
          %361 = dma.hbm_to_vmem [thread:$0]  %s3, 12288, %s356, [#allocation8], 128, 128, 8
        $region24: #{tpu_custom_call.1} parent=11 // pred_fallthru
          _
        // Predicated region
        $region25: #{tpu_custom_call.1} parent=11 // pred_check
          %p362 = pneg %p134
        $region26: #{tpu_custom_call.1} parent=11 // pred_check_branch
          %364 = sbr.rel (%p362) target = $region28
        $region27: #{tpu_custom_call.1} parent=11 // pred_region
          _
        $region28: #{tpu_custom_call.1} parent=11 // pred_fallthru
          _
        // Predicated region
        $region29: #{tpu_custom_call.1} parent=11 // pred_check
          %p365 = pneg %p155
        $region30: #{tpu_custom_call.1} parent=11 // pred_check_branch
          %367 = sbr.rel (%p365) target = $region32
        $region31: #{tpu_custom_call.1} parent=11 // pred_region
          %s369 = ssub.s32 12288, 12288
          %370 = vsyncadd [#allocation11], %s369
          %s371 = sshll.u32 [#allocation10], 4
          %s372 = int_to_ptr.vmem [resolvable:$true] %s371
          %377 = dma.hbm_to_vmem [thread:$0]  %s5, 12288, %s372, [#allocation11], 128, 128, 8
        $region32: #{tpu_custom_call.1} parent=11 // pred_fallthru
          _
        // Predicated region
        $region33: #{tpu_custom_call.1} parent=11 // pred_check
          %p378 = pneg %p176
        $region34: #{tpu_custom_call.1} parent=11 // pred_check_branch
          %380 = sbr.rel (%p378) target = $region36
        $region35: #{tpu_custom_call.1} parent=11 // pred_region
          _
        $region36: #{tpu_custom_call.1} parent=11 // pred_fallthru
          _
        // Predicated region
        $region37: #{tpu_custom_call.1} parent=11 // pred_check
          %p381 = pneg %p197
        $region38: #{tpu_custom_call.1} parent=11 // pred_check_branch
          %383 = sbr.rel (%p381) target = $region40
        $region39: #{tpu_custom_call.1} parent=11 // pred_region
          %s385 = ssub.s32 12288, 12288
          %386 = vsyncadd [#allocation11], %s385
          %s387 = sshll.u32 [#allocation12], 4
          %s388 = int_to_ptr.vmem [resolvable:$true] %s387
          %393 = dma.hbm_to_vmem [thread:$0]  %s7, 12288, %s388, [#allocation11], 128, 128, 8
        $region40: #{tpu_custom_call.1} parent=11 // pred_fallthru
          _
        // Predicated region
        $region41: #{tpu_custom_call.1} parent=11 // pred_check
          %p394 = pneg %p218
        $region42: #{tpu_custom_call.1} parent=11 // pred_check_branch
          %396 = sbr.rel (%p394) target = $region44
        $region43: #{tpu_custom_call.1} parent=11 // pred_region
          _
        $region44: #{tpu_custom_call.1} parent=11 // pred_fallthru
          _
        // Predicated region
        $region45: #{tpu_custom_call.1} parent=11 // pred_check
          %p397 = pneg %p239
        $region46: #{tpu_custom_call.1} parent=11 // pred_check_branch
          %399 = sbr.rel (%p397) target = $region48
        $region47: #{tpu_custom_call.1} parent=11 // pred_region
          _
        $region48: #{tpu_custom_call.1} parent=11 // pred_fallthru
          _
        // Predicated region
        $region49: #{tpu_custom_call.1} parent=11 // pred_check
          %p400 = pneg %p260
        $region50: #{tpu_custom_call.1} parent=11 // pred_check_branch
          %402 = sbr.rel (%p400) target = $region52
        $region51: #{tpu_custom_call.1} parent=11 // pred_region
          _
        $region52: #{tpu_custom_call.1} parent=11 // pred_fallthru
          _
        // Predicated region
        $region53: #{tpu_custom_call.1} parent=11 // pred_check
          %p403 = pneg %p281
        $region54: #{tpu_custom_call.1} parent=11 // pred_check_branch
          %405 = sbr.rel (%p403) target = $region56
        $region55: #{tpu_custom_call.1} parent=11 // pred_region
          _
        $region56: #{tpu_custom_call.1} parent=11 // pred_fallthru
          _
        // Predicated region
        $region57: #{tpu_custom_call.1} parent=11 // pred_check
          %p406 = pneg %p302
        $region58: #{tpu_custom_call.1} parent=11 // pred_check_branch
          %408 = sbr.rel (%p406) target = $region60
        $region59: #{tpu_custom_call.1} parent=11 // pred_region
          _
        $region60: #{tpu_custom_call.1} parent=11 // pred_fallthru
          _
      $region12: #{tpu_custom_call.1} parent=5 // pred_fallthru
        _
      %p409 = scmp.lt.s32.totalorder %s24, 2
      // Predicated region
      $region61: #{tpu_custom_call.1} parent=5 // pred_check
        %p410 = pneg %p409
      $region62: #{tpu_custom_call.1} parent=5 // pred_check_branch
        %412 = sbr.rel (%p410) target = $region64
      $region63: #{tpu_custom_call.1} parent=5 // pred_region
        // Predicated region
        $region65: #{tpu_custom_call.1} parent=63 // pred_check
          %p413 = pneg %p44
        $region66: #{tpu_custom_call.1} parent=63 // pred_check_branch
          %415 = sbr.rel (%p413) target = $region68
        $region67: #{tpu_custom_call.1} parent=63 // pred_region
          %p416 = scmp.lt.s32.totalorder %s24, 1
          %s417 = scalar_select %p416, %s24, 1
          %s418 = smul.addr %s417, 8
          %s419 = smul.addr %s418, 8
          %s420 = scalar_lea.vmem %s0, %s419
        $region68: #{tpu_custom_call.1} parent=63 // pred_fallthru
          _
      $region64: #{tpu_custom_call.1} parent=5 // pred_fallthru
        _
      %p421 = scmp.le.s32.totalorder 1, %s24
      %p422 = scmp.lt.s32.totalorder %s24, 3
      %p423 = pnand %p421, %p422
      %p424 = pneg %p423
      // Predicated region
      $region69: #{tpu_custom_call.1} parent=5 // pred_check
        _
      $region70: #{tpu_custom_call.1} parent=5 // pred_check_branch
        %426 = sbr.rel (%p423) target = $region72
      $region71: #{tpu_custom_call.1} parent=5 // pred_region
        %s427 = ssub.s32 %s24, 1
        // Predicated region
        $region73: #{tpu_custom_call.1} parent=71 // pred_check
          %p428 = pneg %p113
        $region74: #{tpu_custom_call.1} parent=71 // pred_check_branch
          %430 = sbr.rel (%p428) target = $region76
        $region75: #{tpu_custom_call.1} parent=71 // pred_region
          %431 = dma.done [#allocation8], 12288
        $region76: #{tpu_custom_call.1} parent=71 // pred_fallthru
          _
        // Predicated region
        $region77: #{tpu_custom_call.1} parent=71 // pred_check
          %p432 = pneg %p155
        $region78: #{tpu_custom_call.1} parent=71 // pred_check_branch
          %434 = sbr.rel (%p432) target = $region80
        $region79: #{tpu_custom_call.1} parent=71 // pred_region
          %435 = dma.done [#allocation11], 12288
        $region80: #{tpu_custom_call.1} parent=71 // pred_fallthru
          _
        // Predicated region
        $region81: #{tpu_custom_call.1} parent=71 // pred_check
          %p436 = pneg %p197
        $region82: #{tpu_custom_call.1} parent=71 // pred_check_branch
          %438 = sbr.rel (%p436) target = $region84
        $region83: #{tpu_custom_call.1} parent=71 // pred_region
          %439 = dma.done [#allocation11], 12288
        $region84: #{tpu_custom_call.1} parent=71 // pred_fallthru
          _
        %p440 = scmp.lt.s32.totalorder %s29, 1
        %s441 = scalar_select %p440, %s29, 1
        %s442 = smul.addr %s441, 8
        %s443 = smul.addr %s442, 8
        %s444 = scalar_lea.vmem %s0, %s443
        %p445 = pneg %p50
        %p446 = pneg %p47
        %p447 = pneg %p71
        %p448 = pneg %p68
        %p449 = pneg %p92
        %p450 = pneg %p89
        %p451 = pneg %p113
        %p452 = pneg %p110
        %p453 = pneg %p134
        %p454 = pneg %p131
        %p455 = pneg %p155
        %p456 = pneg %p152
        %p457 = pneg %p176
        %p458 = pneg %p173
        %p459 = pneg %p197
        %p460 = pneg %p194
        %p461 = pneg %p218
        %p462 = pneg %p215
        %p463 = pneg %p239
        %p464 = pneg %p236
        %p465 = pneg %p260
        %p466 = pneg %p257
        %p467 = pneg %p281
        %p468 = pneg %p278
        %p469 = pneg %p302
        %p470 = pneg %p299
        %p471 = pneg %p328
        %p472 = pneg %p325
        %s473 = sand.u32 %s315, 1
        %s474 = scalar_lea.sflag [#allocation9], %s473
        %s475 = sand.u32 %s315, 1
        %s476 = scalar_lea.vmem [#allocation13], %s475
        %p477 = scmp.lt.s32.totalorder %s29, 1
        %s478 = scalar_select %p477, %s29, 1
        %s479 = smul.addr %s478, 8
        %s480 = smul.addr %s479, 8
        %s481 = scalar_lea.vmem %s0, %s480
        %v482 = vld [vmem:[%s481] sm:$0xff]
        %v483 = vld [vmem:[%s481 + $0x8] sm:$0xff]
        %v484 = vld [vmem:[%s481 + $0x10] sm:$0xff]
        %v485 = vld [vmem:[%s481 + $0x18] sm:$0xff]
        %v486 = vld [vmem:[%s481 + $0x20] sm:$0xff]
        %v487 = vld [vmem:[%s481 + $0x28] sm:$0xff]
        %v488 = vld [vmem:[%s481 + $0x30] sm:$0xff]
        %v489 = vld [vmem:[%s481 + $0x38] sm:$0xff]
        %vm490 = vcmask 523264
        %491 = vst.msk [vmem:[#allocation2] sm:$0xff] %vm490, 0.0
        %492 = vst.msk [vmem:[#allocation2 + $0x8] sm:$0xff] %vm490, 0.0
        %493 = vst.msk [vmem:[#allocation2 + $0x10] sm:$0xff] %vm490, 0.0
        %494 = vst.msk [vmem:[#allocation2 + $0x18] sm:$0xff] %vm490, 0.0
        %495 = vst.msk [vmem:[#allocation2 + $0x20] sm:$0xff] %vm490, 0.0
        %496 = vst.msk [vmem:[#allocation2 + $0x28] sm:$0xff] %vm490, 0.0
        %497 = vst.msk [vmem:[#allocation2 + $0x30] sm:$0xff] %vm490, 0.0
        %498 = vst.msk [vmem:[#allocation2 + $0x38] sm:$0xff] %vm490, 0.0
        %vm499 = vcmask 517120
        %500 = vst.msk [vmem:[#allocation2 + $0x40] sm:$0x3] %vm499, 0.0
        %501 = vst.msk [vmem:[#allocation2 + $0x1] sm:$0xff] %vm490, %v482
        %502 = vst.msk [vmem:[#allocation2 + $0x9] sm:$0xff] %vm490, %v483
        %503 = vst.msk [vmem:[#allocation2 + $0x11] sm:$0xff] %vm490, %v484
        %504 = vst.msk [vmem:[#allocation2 + $0x19] sm:$0xff] %vm490, %v485
        %505 = vst.msk [vmem:[#allocation2 + $0x21] sm:$0xff] %vm490, %v486
        %506 = vst.msk [vmem:[#allocation2 + $0x29] sm:$0xff] %vm490, %v487
        %507 = vst.msk [vmem:[#allocation2 + $0x31] sm:$0xff] %vm490, %v488
        %508 = vst.msk [vmem:[#allocation2 + $0x39] sm:$0xff] %vm490, %v489
        %v509 = vld [vmem:[#allocation2] sm:$0xff]
        %v510 = vld [vmem:[#allocation2 + $0x8] sm:$0xff]
        %v511 = vld [vmem:[#allocation2 + $0x10] sm:$0xff]
        %v512 = vld [vmem:[#allocation2 + $0x18] sm:$0xff]
        %v513 = vld [vmem:[#allocation2 + $0x20] sm:$0xff]
        %v514 = vld [vmem:[#allocation2 + $0x28] sm:$0xff]
        %v515 = vld [vmem:[#allocation2 + $0x30] sm:$0xff]
        %v516 = vld [vmem:[#allocation2 + $0x38] sm:$0xff]
        %v517 = vld [vmem:[%s1] sm:$0xff]
        %v518 = vld [vmem:[%s1 + $0x8] sm:$0xff]
        %v519 = vld [vmem:[%s1 + $0x10] sm:$0xff]
        %v520 = vld [vmem:[%s1 + $0x18] sm:$0xff]
        %v521 = vld [vmem:[%s1 + $0x20] sm:$0xff]
        %v522 = vld [vmem:[%s1 + $0x28] sm:$0xff]
        %v523 = vld [vmem:[%s1 + $0x30] sm:$0xff]
        %v524 = vld [vmem:[%s1 + $0x38] sm:$0xff]
        %s525 = scalar_lea.vmem %s1, 192
        %v526 = vld [vmem:[%s525] sm:$0xff]
        %v527 = vld [vmem:[%s525 + $0x8] sm:$0xff]
        %v528 = vld [vmem:[%s525 + $0x10] sm:$0xff]
        %v529 = vld [vmem:[%s525 + $0x18] sm:$0xff]
        %v530 = vld [vmem:[%s525 + $0x20] sm:$0xff]
        %v531 = vld [vmem:[%s525 + $0x28] sm:$0xff]
        %v532 = vld [vmem:[%s525 + $0x30] sm:$0xff]
        %v533 = vld [vmem:[%s525 + $0x38] sm:$0xff]
        %v534 = vld [vmem:[#allocation2 + $0x1] sm:$0xff]
        %v535 = vld [vmem:[#allocation2 + $0x9] sm:$0xff]
        %v536 = vld [vmem:[#allocation2 + $0x11] sm:$0xff]
        %v537 = vld [vmem:[#allocation2 + $0x19] sm:$0xff]
        %v538 = vld [vmem:[#allocation2 + $0x21] sm:$0xff]
        %v539 = vld [vmem:[#allocation2 + $0x29] sm:$0xff]
        %v540 = vld [vmem:[#allocation2 + $0x31] sm:$0xff]
        %v541 = vld [vmem:[#allocation2 + $0x39] sm:$0xff]
        %s542 = scalar_lea.vmem %s1, 64
        %v543 = vld [vmem:[%s542] sm:$0xff]
        %v544 = vld [vmem:[%s542 + $0x8] sm:$0xff]
        %v545 = vld [vmem:[%s542 + $0x10] sm:$0xff]
        %v546 = vld [vmem:[%s542 + $0x18] sm:$0xff]
        %v547 = vld [vmem:[%s542 + $0x20] sm:$0xff]
        %v548 = vld [vmem:[%s542 + $0x28] sm:$0xff]
        %v549 = vld [vmem:[%s542 + $0x30] sm:$0xff]
        %v550 = vld [vmem:[%s542 + $0x38] sm:$0xff]
        %v552 = vsel %vm490, %v534, 0
        %v555 = vsel %vm490, %v535, 0
        %v558 = vsel %vm490, %v536, 0
        %v561 = vsel %vm490, %v537, 0
        %v564 = vsel %vm490, %v538, 0
        %v567 = vsel %vm490, %v539, 0
        %v570 = vsel %vm490, %v540, 0
        %v573 = vsel %vm490, %v541, 0
        %575 = vmatprep.subr.mxu0 0.0
        %576 = vmatpush1.msra.mxu0 %v543
        %577 = vmatprep.subr.mxu0 0.0
        %578 = vmatpush1.msra.mxu0 %v544
        %579 = vmatprep.subr.mxu0 0.0
        %580 = vmatpush1.msra.mxu0 %v545
        %581 = vmatprep.subr.mxu0 0.0
        %582 = vmatpush1.msra.mxu0 %v546
        %583 = vmatprep.subr.mxu0 0.0
        %584 = vmatpush1.msra.mxu0 %v547
        %585 = vmatprep.subr.mxu0 0.0
        %586 = vmatpush1.msra.mxu0 %v548
        %587 = vmatprep.subr.mxu0 0.0
        %588 = vmatpush1.msra.mxu0 %v549
        %589 = vmatprep.subr.mxu0 0.0
        %590 = vmatpush1.msra.mxu0 %v550
        %591 = vmatprep.subr.mxu0 0.0
        %592 = vmatpush1.msra.mxu0 0.0
        %593 = vmatprep.subr.mxu0 0.0
        %594 = vmatpush1.msra.mxu0 0.0
        %595 = vmatprep.subr.mxu0 0.0
        %596 = vmatpush1.msra.mxu0 0.0
        %597 = vmatprep.subr.mxu0 0.0
        %598 = vmatpush1.msra.mxu0 0.0
        %599 = vmatprep.subr.mxu0 0.0
        %600 = vmatpush1.msra.mxu0 0.0
        %601 = vmatprep.subr.mxu0 0.0
        %602 = vmatpush1.msra.mxu0 0.0
        %603 = vmatprep.subr.mxu0 0.0
        %604 = vmatpush1.msra.mxu0 0.0
        %605 = vmatprep.subr.mxu0 0.0
        %606 = vmatpush1.msra.mxu0 0.0
        %607 = vmatprep.subr.mxu0 0.0
        %608 = vmatpush1.msra.mxu0 0.0
        %609 = vmatprep.subr.mxu0 0.0
        %610 = vmatpush1.msra.mxu0 0.0
        %611 = vmatprep.subr.mxu0 0.0
        %612 = vmatpush1.msra.mxu0 0.0
        %613 = vmatprep.subr.mxu0 0.0
        %614 = vmatpush1.msra.mxu0 0.0
        %615 = vmatprep.subr.mxu0 0.0
        %616 = vmatpush1.msra.mxu0 0.0
        %617 = vmatprep.subr.mxu0 0.0
        %618 = vmatpush1.msra.mxu0 0.0
        %619 = vmatprep.subr.mxu0 0.0
        %620 = vmatpush1.msra.mxu0 0.0
        %621 = vmatprep.subr.mxu0 0.0
        %622 = vmatpush1.msra.mxu0 0.0
        %623 = vmatprep.subr.mxu0 0.0
        %624 = vmatpush1.msra.mxu0 0.0
        %625 = vmatprep.subr.mxu0 0.0
        %626 = vmatpush1.msra.mxu0 0.0
        %627 = vmatprep.subr.mxu0 0.0
        %628 = vmatpush1.msra.mxu0 0.0
        %629 = vmatprep.subr.mxu0 0.0
        %630 = vmatpush1.msra.mxu0 0.0
        %631 = vmatprep.subr.mxu0 0.0
        %632 = vmatpush1.msra.mxu0 0.0
        %633 = vmatprep.subr.mxu0 0.0
        %634 = vmatpush1.msra.mxu0 0.0
        %635 = vmatprep.subr.mxu0 0.0
        %636 = vmatpush1.msra.mxu0 0.0
        %637 = vmatprep.subr.mxu0 0.0
        %638 = vmatpush1.msra.mxu0 0.0
        %639 = vmatprep.mubr.f32.mxu0 0.0
        %640 = vmatmul.mubr.f32.gmra.mrb[0].mxu0 %v552
        %v641 = vpop.f32.mrb[0].mxu0
        %v642 = vadd.f32 0.0, %v641
        %v643 = vpop.f32.mrb[0].mxu0
        %644 = vmatprep.mubr.f32.mxu0 0.0
        %645 = vmatmul.mubr.f32.gmra.mrb[0].mxu0 %v555
        %v646 = vpop.f32.mrb[0].mxu0
        %v647 = vadd.f32 0.0, %v646
        %v648 = vpop.f32.mrb[0].mxu0
        %649 = vmatprep.mubr.f32.mxu0 0.0
        %650 = vmatmul.mubr.f32.gmra.mrb[0].mxu0 %v558
        %v651 = vpop.f32.mrb[0].mxu0
        %v652 = vadd.f32 0.0, %v651
        %v653 = vpop.f32.mrb[0].mxu0
        %654 = vmatprep.mubr.f32.mxu0 0.0
        %655 = vmatmul.mubr.f32.gmra.mrb[0].mxu0 %v561
        %v656 = vpop.f32.mrb[0].mxu0
        %v657 = vadd.f32 0.0, %v656
        %v658 = vpop.f32.mrb[0].mxu0
        %659 = vmatprep.mubr.f32.mxu0 0.0
        %660 = vmatmul.mubr.f32.gmra.mrb[0].mxu0 %v564
        %v661 = vpop.f32.mrb[0].mxu0
        %v662 = vadd.f32 0.0, %v661
        %v663 = vpop.f32.mrb[0].mxu0
        %664 = vmatprep.mubr.f32.mxu0 0.0
        %665 = vmatmul.mubr.f32.gmra.mrb[0].mxu0 %v567
        %v666 = vpop.f32.mrb[0].mxu0
        %v667 = vadd.f32 0.0, %v666
        %v668 = vpop.f32.mrb[0].mxu0
        %669 = vmatprep.mubr.f32.mxu0 0.0
        %670 = vmatmul.mubr.f32.gmra.mrb[0].mxu0 %v570
        %v671 = vpop.f32.mrb[0].mxu0
        %v672 = vadd.f32 0.0, %v671
        %v673 = vpop.f32.mrb[0].mxu0
        %674 = vmatprep.mubr.f32.mxu0 0.0
        %675 = vmatmul.mubr.f32.gmra.mrb[0].mxu0 %v573
        %v676 = vpop.f32.mrb[0].mxu0
        %v677 = vadd.f32 0.0, %v676
        %v678 = vpop.f32.mrb[0].mxu0
        %679 = vdwg.mxu0
        %v681 = vsel %vm490, %v509, 0
        %v684 = vsel %vm490, %v510, 0
        %v687 = vsel %vm490, %v511, 0
        %v690 = vsel %vm490, %v512, 0
        %v693 = vsel %vm490, %v513, 0
        %v696 = vsel %vm490, %v514, 0
        %v699 = vsel %vm490, %v515, 0
        %v702 = vsel %vm490, %v516, 0
        %704 = vmatprep.subr.mxu0 0.0
        %705 = vmatpush1.msra.mxu0 %v517
        %706 = vmatprep.subr.mxu0 0.0
        %707 = vmatpush1.msra.mxu0 %v518
        %708 = vmatprep.subr.mxu0 0.0
        %709 = vmatpush1.msra.mxu0 %v519
        %710 = vmatprep.subr.mxu0 0.0
        %711 = vmatpush1.msra.mxu0 %v520
        %712 = vmatprep.subr.mxu0 0.0
        %713 = vmatpush1.msra.mxu0 %v521
        %714 = vmatprep.subr.mxu0 0.0
        %715 = vmatpush1.msra.mxu0 %v522
        %716 = vmatprep.subr.mxu0 0.0
        %717 = vmatpush1.msra.mxu0 %v523
        %718 = vmatprep.subr.mxu0 0.0
        %719 = vmatpush1.msra.mxu0 %v524
        %720 = vmatprep.subr.mxu0 0.0
        %721 = vmatpush1.msra.mxu0 0.0
        %722 = vmatprep.subr.mxu0 0.0
        %723 = vmatpush1.msra.mxu0 0.0
        %724 = vmatprep.subr.mxu0 0.0
        %725 = vmatpush1.msra.mxu0 0.0
        %726 = vmatprep.subr.mxu0 0.0
        %727 = vmatpush1.msra.mxu0 0.0
        %728 = vmatprep.subr.mxu0 0.0
        %729 = vmatpush1.msra.mxu0 0.0
        %730 = vmatprep.subr.mxu0 0.0
        %731 = vmatpush1.msra.mxu0 0.0
        %732 = vmatprep.subr.mxu0 0.0
        %733 = vmatpush1.msra.mxu0 0.0
        %734 = vmatprep.subr.mxu0 0.0
        %735 = vmatpush1.msra.mxu0 0.0
        %736 = vmatprep.subr.mxu0 0.0
        %737 = vmatpush1.msra.mxu0 0.0
        %738 = vmatprep.subr.mxu0 0.0
        %739 = vmatpush1.msra.mxu0 0.0
        %740 = vmatprep.subr.mxu0 0.0
        %741 = vmatpush1.msra.mxu0 0.0
        %742 = vmatprep.subr.mxu0 0.0
        %743 = vmatpush1.msra.mxu0 0.0
        %744 = vmatprep.subr.mxu0 0.0
        %745 = vmatpush1.msra.mxu0 0.0
        %746 = vmatprep.subr.mxu0 0.0
        %747 = vmatpush1.msra.mxu0 0.0
        %748 = vmatprep.subr.mxu0 0.0
        %749 = vmatpush1.msra.mxu0 0.0
        %750 = vmatprep.subr.mxu0 0.0
        %751 = vmatpush1.msra.mxu0 0.0
        %752 = vmatprep.subr.mxu0 0.0
        %753 = vmatpush1.msra.mxu0 0.0
        %754 = vmatprep.subr.mxu0 0.0
        %755 = vmatpush1.msra.mxu0 0.0
        %756 = vmatprep.subr.mxu0 0.0
        %757 = vmatpush1.msra.mxu0 0.0
        %758 = vmatprep.subr.mxu0 0.0
        %759 = vmatpush1.msra.mxu0 0.0
        %760 = vmatprep.subr.mxu0 0.0
        %761 = vmatpush1.msra.mxu0 0.0
        %762 = vmatprep.subr.mxu0 0.0
        %763 = vmatpush1.msra.mxu0 0.0
        %764 = vmatprep.subr.mxu0 0.0
        %765 = vmatpush1.msra.mxu0 0.0
        %766 = vmatprep.subr.mxu0 0.0
        %767 = vmatpush1.msra.mxu0 0.0
        %768 = vmatprep.mubr.f32.mxu0 0.0
        %769 = vmatmul.mubr.f32.gmra.mrb[0].mxu0 %v681
        %v770 = vpop.f32.mrb[0].mxu0
        %v771 = vadd.f32 %v642, %v770
        %v772 = vpop.f32.mrb[0].mxu0
        %773 = vmatprep.mubr.f32.mxu0 0.0
        %774 = vmatmul.mubr.f32.gmra.mrb[0].mxu0 %v684
        %v775 = vpop.f32.mrb[0].mxu0
        %v776 = vadd.f32 %v647, %v775
        %v777 = vpop.f32.mrb[0].mxu0
        %778 = vmatprep.mubr.f32.mxu0 0.0
        %779 = vmatmul.mubr.f32.gmra.mrb[0].mxu0 %v687
        %v780 = vpop.f32.mrb[0].mxu0
        %v781 = vadd.f32 %v652, %v780
        %v782 = vpop.f32.mrb[0].mxu0
        %783 = vmatprep.mubr.f32.mxu0 0.0
        %784 = vmatmul.mubr.f32.gmra.mrb[0].mxu0 %v690
        %v785 = vpop.f32.mrb[0].mxu0
        %v786 = vadd.f32 %v657, %v785
        %v787 = vpop.f32.mrb[0].mxu0
        %788 = vmatprep.mubr.f32.mxu0 0.0
        %789 = vmatmul.mubr.f32.gmra.mrb[0].mxu0 %v693
        %v790 = vpop.f32.mrb[0].mxu0
        %v791 = vadd.f32 %v662, %v790
        %v792 = vpop.f32.mrb[0].mxu0
        %793 = vmatprep.mubr.f32.mxu0 0.0
        %794 = vmatmul.mubr.f32.gmra.mrb[0].mxu0 %v696
        %v795 = vpop.f32.mrb[0].mxu0
        %v796 = vadd.f32 %v667, %v795
        %v797 = vpop.f32.mrb[0].mxu0
        %798 = vmatprep.mubr.f32.mxu0 0.0
        %799 = vmatmul.mubr.f32.gmra.mrb[0].mxu0 %v699
        %v800 = vpop.f32.mrb[0].mxu0
        %v801 = vadd.f32 %v672, %v800
        %v802 = vpop.f32.mrb[0].mxu0
        %803 = vmatprep.mubr.f32.mxu0 0.0
        %804 = vmatmul.mubr.f32.gmra.mrb[0].mxu0 %v702
        %v805 = vpop.f32.mrb[0].mxu0
        %v806 = vadd.f32 %v677, %v805
        %v807 = vpop.f32.mrb[0].mxu0
        %808 = vdwg.mxu0
        %s809 = scalar_lea.vmem %s1, 256
        %v810 = vld [vmem:[%s809] sm:$0xff]
        %v811 = vld [vmem:[%s809 + $0x8] sm:$0xff]
        %v812 = vld [vmem:[%s809 + $0x10] sm:$0xff]
        %v813 = vld [vmem:[%s809 + $0x18] sm:$0xff]
        %v814 = vld [vmem:[%s809 + $0x20] sm:$0xff]
        %v815 = vld [vmem:[%s809 + $0x28] sm:$0xff]
        %v816 = vld [vmem:[%s809 + $0x30] sm:$0xff]
        %v817 = vld [vmem:[%s809 + $0x38] sm:$0xff]
        %818 = vmatprep.subr.mxu0 0.0
        %819 = vmatpush1.msra.mxu0 %v810
        %820 = vmatprep.subr.mxu0 0.0
        %821 = vmatpush1.msra.mxu0 %v811
        %822 = vmatprep.subr.mxu0 0.0
        %823 = vmatpush1.msra.mxu0 %v812
        %824 = vmatprep.subr.mxu0 0.0
        %825 = vmatpush1.msra.mxu0 %v813
        %826 = vmatprep.subr.mxu0 0.0
        %827 = vmatpush1.msra.mxu0 %v814
        %828 = vmatprep.subr.mxu0 0.0
        %829 = vmatpush1.msra.mxu0 %v815
        %830 = vmatprep.subr.mxu0 0.0
        %831 = vmatpush1.msra.mxu0 %v816
        %832 = vmatprep.subr.mxu0 0.0
        %833 = vmatpush1.msra.mxu0 %v817
        %834 = vmatprep.subr.mxu0 0.0
        %835 = vmatpush1.msra.mxu0 0.0
        %836 = vmatprep.subr.mxu0 0.0
        %837 = vmatpush1.msra.mxu0 0.0
        %838 = vmatprep.subr.mxu0 0.0
        %839 = vmatpush1.msra.mxu0 0.0
        %840 = vmatprep.subr.mxu0 0.0
        %841 = vmatpush1.msra.mxu0 0.0
        %842 = vmatprep.subr.mxu0 0.0
        %843 = vmatpush1.msra.mxu0 0.0
        %844 = vmatprep.subr.mxu0 0.0
        %845 = vmatpush1.msra.mxu0 0.0
        %846 = vmatprep.subr.mxu0 0.0
        %847 = vmatpush1.msra.mxu0 0.0
        %848 = vmatprep.subr.mxu0 0.0
        %849 = vmatpush1.msra.mxu0 0.0
        %850 = vmatprep.subr.mxu0 0.0
        %851 = vmatpush1.msra.mxu0 0.0
        %852 = vmatprep.subr.mxu0 0.0
        %853 = vmatpush1.msra.mxu0 0.0
        %854 = vmatprep.subr.mxu0 0.0
        %855 = vmatpush1.msra.mxu0 0.0
        %856 = vmatprep.subr.mxu0 0.0
        %857 = vmatpush1.msra.mxu0 0.0
        %858 = vmatprep.subr.mxu0 0.0
        %859 = vmatpush1.msra.mxu0 0.0
        %860 = vmatprep.subr.mxu0 0.0
        %861 = vmatpush1.msra.mxu0 0.0
        %862 = vmatprep.subr.mxu0 0.0
        %863 = vmatpush1.msra.mxu0 0.0
        %864 = vmatprep.subr.mxu0 0.0
        %865 = vmatpush1.msra.mxu0 0.0
        %866 = vmatprep.subr.mxu0 0.0
        %867 = vmatpush1.msra.mxu0 0.0
        %868 = vmatprep.subr.mxu0 0.0
        %869 = vmatpush1.msra.mxu0 0.0
        %870 = vmatprep.subr.mxu0 0.0
        %871 = vmatpush1.msra.mxu0 0.0
        %872 = vmatprep.subr.mxu0 0.0
        %873 = vmatpush1.msra.mxu0 0.0
        %874 = vmatprep.subr.mxu0 0.0
        %875 = vmatpush1.msra.mxu0 0.0
        %876 = vmatprep.subr.mxu0 0.0
        %877 = vmatpush1.msra.mxu0 0.0
        %878 = vmatprep.subr.mxu0 0.0
        %879 = vmatpush1.msra.mxu0 0.0
        %880 = vmatprep.subr.mxu0 0.0
        %881 = vmatpush1.msra.mxu0 0.0
        %882 = vmatprep.mubr.f32.mxu0 0.0
        %883 = vmatmul.mubr.f32.gmra.mrb[0].mxu0 %v552
        %v884 = vpop.f32.mrb[0].mxu0
        %v885 = vadd.f32 0.0, %v884
        %v886 = vpop.f32.mrb[0].mxu0
        %887 = vmatprep.mubr.f32.mxu0 0.0
        %888 = vmatmul.mubr.f32.gmra.mrb[0].mxu0 %v555
        %v889 = vpop.f32.mrb[0].mxu0
        %v890 = vadd.f32 0.0, %v889
        %v891 = vpop.f32.mrb[0].mxu0
        %892 = vmatprep.mubr.f32.mxu0 0.0
        %893 = vmatmul.mubr.f32.gmra.mrb[0].mxu0 %v558
        %v894 = vpop.f32.mrb[0].mxu0
        %v895 = vadd.f32 0.0, %v894
        %v896 = vpop.f32.mrb[0].mxu0
        %897 = vmatprep.mubr.f32.mxu0 0.0
        %898 = vmatmul.mubr.f32.gmra.mrb[0].mxu0 %v561
        %v899 = vpop.f32.mrb[0].mxu0
        %v900 = vadd.f32 0.0, %v899
        %v901 = vpop.f32.mrb[0].mxu0
        %902 = vmatprep.mubr.f32.mxu0 0.0
        %903 = vmatmul.mubr.f32.gmra.mrb[0].mxu0 %v564
        %v904 = vpop.f32.mrb[0].mxu0
        %v905 = vadd.f32 0.0, %v904
        %v906 = vpop.f32.mrb[0].mxu0
        %907 = vmatprep.mubr.f32.mxu0 0.0
        %908 = vmatmul.mubr.f32.gmra.mrb[0].mxu0 %v567
        %v909 = vpop.f32.mrb[0].mxu0
        %v910 = vadd.f32 0.0, %v909
        %v911 = vpop.f32.mrb[0].mxu0
        %912 = vmatprep.mubr.f32.mxu0 0.0
        %913 = vmatmul.mubr.f32.gmra.mrb[0].mxu0 %v570
        %v914 = vpop.f32.mrb[0].mxu0
        %v915 = vadd.f32 0.0, %v914
        %v916 = vpop.f32.mrb[0].mxu0
        %917 = vmatprep.mubr.f32.mxu0 0.0
        %918 = vmatmul.mubr.f32.gmra.mrb[0].mxu0 %v573
        %v919 = vpop.f32.mrb[0].mxu0
        %v920 = vadd.f32 0.0, %v919
        %v921 = vpop.f32.mrb[0].mxu0
        %922 = vdwg.mxu0
        %923 = vmatprep.subr.mxu0 0.0
        %924 = vmatpush1.msra.mxu0 %v526
        %925 = vmatprep.subr.mxu0 0.0
        %926 = vmatpush1.msra.mxu0 %v527
        %927 = vmatprep.subr.mxu0 0.0
        %928 = vmatpush1.msra.mxu0 %v528
        %929 = vmatprep.subr.mxu0 0.0
        %930 = vmatpush1.msra.mxu0 %v529
        %931 = vmatprep.subr.mxu0 0.0
        %932 = vmatpush1.msra.mxu0 %v530
        %933 = vmatprep.subr.mxu0 0.0
        %934 = vmatpush1.msra.mxu0 %v531
        %935 = vmatprep.subr.mxu0 0.0
        %936 = vmatpush1.msra.mxu0 %v532
        %937 = vmatprep.subr.mxu0 0.0
        %938 = vmatpush1.msra.mxu0 %v533
        %939 = vmatprep.subr.mxu0 0.0
        %940 = vmatpush1.msra.mxu0 0.0
        %941 = vmatprep.subr.mxu0 0.0
        %942 = vmatpush1.msra.mxu0 0.0
        %943 = vmatprep.subr.mxu0 0.0
        %944 = vmatpush1.msra.mxu0 0.0
        %945 = vmatprep.subr.mxu0 0.0
        %946 = vmatpush1.msra.mxu0 0.0
        %947 = vmatprep.subr.mxu0 0.0
        %948 = vmatpush1.msra.mxu0 0.0
        %949 = vmatprep.subr.mxu0 0.0
        %950 = vmatpush1.msra.mxu0 0.0
        %951 = vmatprep.subr.mxu0 0.0
        %952 = vmatpush1.msra.mxu0 0.0
        %953 = vmatprep.subr.mxu0 0.0
        %954 = vmatpush1.msra.mxu0 0.0
        %955 = vmatprep.subr.mxu0 0.0
        %956 = vmatpush1.msra.mxu0 0.0
        %957 = vmatprep.subr.mxu0 0.0
        %958 = vmatpush1.msra.mxu0 0.0
        %959 = vmatprep.subr.mxu0 0.0
        %960 = vmatpush1.msra.mxu0 0.0
        %961 = vmatprep.subr.mxu0 0.0
        %962 = vmatpush1.msra.mxu0 0.0
        %963 = vmatprep.subr.mxu0 0.0
        %964 = vmatpush1.msra.mxu0 0.0
        %965 = vmatprep.subr.mxu0 0.0
        %966 = vmatpush1.msra.mxu0 0.0
        %967 = vmatprep.subr.mxu0 0.0
        %968 = vmatpush1.msra.mxu0 0.0
        %969 = vmatprep.subr.mxu0 0.0
        %970 = vmatpush1.msra.mxu0 0.0
        %971 = vmatprep.subr.mxu0 0.0
        %972 = vmatpush1.msra.mxu0 0.0
        %973 = vmatprep.subr.mxu0 0.0
        %974 = vmatpush1.msra.mxu0 0.0
        %975 = vmatprep.subr.mxu0 0.0
        %976 = vmatpush1.msra.mxu0 0.0
        %977 = vmatprep.subr.mxu0 0.0
        %978 = vmatpush1.msra.mxu0 0.0
        %979 = vmatprep.subr.mxu0 0.0
        %980 = vmatpush1.msra.mxu0 0.0
        %981 = vmatprep.subr.mxu0 0.0
        %982 = vmatpush1.msra.mxu0 0.0
        %983 = vmatprep.subr.mxu0 0.0
        %984 = vmatpush1.msra.mxu0 0.0
        %985 = vmatprep.subr.mxu0 0.0
        %986 = vmatpush1.msra.mxu0 0.0
        %987 = vmatprep.mubr.f32.mxu0 0.0
        %988 = vmatmul.mubr.f32.gmra.mrb[0].mxu0 %v681
        %v989 = vpop.f32.mrb[0].mxu0
        %v990 = vadd.f32 %v885, %v989
        %v991 = vpop.f32.mrb[0].mxu0
        %992 = vmatprep.mubr.f32.mxu0 0.0
        %993 = vmatmul.mubr.f32.gmra.mrb[0].mxu0 %v684
        %v994 = vpop.f32.mrb[0].mxu0
        %v995 = vadd.f32 %v890, %v994
        %v996 = vpop.f32.mrb[0].mxu0
        %997 = vmatprep.mubr.f32.mxu0 0.0
        %998 = vmatmul.mubr.f32.gmra.mrb[0].mxu0 %v687
        %v999 = vpop.f32.mrb[0].mxu0
        %v1000 = vadd.f32 %v895, %v999
        %v1001 = vpop.f32.mrb[0].mxu0
        %1002 = vmatprep.mubr.f32.mxu0 0.0
        %1003 = vmatmul.mubr.f32.gmra.mrb[0].mxu0 %v690
        %v1004 = vpop.f32.mrb[0].mxu0
        %v1005 = vadd.f32 %v900, %v1004
        %v1006 = vpop.f32.mrb[0].mxu0
        %1007 = vmatprep.mubr.f32.mxu0 0.0
        %1008 = vmatmul.mubr.f32.gmra.mrb[0].mxu0 %v693
        %v1009 = vpop.f32.mrb[0].mxu0
        %v1010 = vadd.f32 %v905, %v1009
        %v1011 = vpop.f32.mrb[0].mxu0
        %1012 = vmatprep.mubr.f32.mxu0 0.0
        %1013 = vmatmul.mubr.f32.gmra.mrb[0].mxu0 %v696
        %v1014 = vpop.f32.mrb[0].mxu0
        %v1015 = vadd.f32 %v910, %v1014
        %v1016 = vpop.f32.mrb[0].mxu0
        %1017 = vmatprep.mubr.f32.mxu0 0.0
        %1018 = vmatmul.mubr.f32.gmra.mrb[0].mxu0 %v699
        %v1019 = vpop.f32.mrb[0].mxu0
        %v1020 = vadd.f32 %v915, %v1019
        %v1021 = vpop.f32.mrb[0].mxu0
        %1022 = vmatprep.mubr.f32.mxu0 0.0
        %1023 = vmatmul.mubr.f32.gmra.mrb[0].mxu0 %v702
        %v1024 = vpop.f32.mrb[0].mxu0
        %v1025 = vadd.f32 %v920, %v1024
        %v1026 = vpop.f32.mrb[0].mxu0
        %1027 = vdwg.mxu0
        %v1028 = vld [vmem:[#allocation2 + $0x2] sm:$0xff]
        %v1029 = vld [vmem:[#allocation2 + $0xa] sm:$0xff]
        %v1030 = vld [vmem:[#allocation2 + $0x12] sm:$0xff]
        %v1031 = vld [vmem:[#allocation2 + $0x1a] sm:$0xff]
        %v1032 = vld [vmem:[#allocation2 + $0x22] sm:$0xff]
        %v1033 = vld [vmem:[#allocation2 + $0x2a] sm:$0xff]
        %v1034 = vld [vmem:[#allocation2 + $0x32] sm:$0xff]
        %v1035 = vld [vmem:[#allocation2 + $0x3a] sm:$0xff]
        %s1036 = scalar_lea.vmem %s1, 128
        %v1037 = vld [vmem:[%s1036] sm:$0xff]
        %v1038 = vld [vmem:[%s1036 + $0x8] sm:$0xff]
        %v1039 = vld [vmem:[%s1036 + $0x10] sm:$0xff]
        %v1040 = vld [vmem:[%s1036 + $0x18] sm:$0xff]
        %v1041 = vld [vmem:[%s1036 + $0x20] sm:$0xff]
        %v1042 = vld [vmem:[%s1036 + $0x28] sm:$0xff]
        %v1043 = vld [vmem:[%s1036 + $0x30] sm:$0xff]
        %v1044 = vld [vmem:[%s1036 + $0x38] sm:$0xff]
        %v1046 = vsel %vm490, %v1028, 0
        %v1049 = vsel %vm490, %v1029, 0
        %v1052 = vsel %vm490, %v1030, 0
        %v1055 = vsel %vm490, %v1031, 0
        %v1058 = vsel %vm490, %v1032, 0
        %v1061 = vsel %vm490, %v1033, 0
        %v1064 = vsel %vm490, %v1034, 0
        %v1067 = vsel %vm490, %v1035, 0
        %1069 = vmatprep.subr.mxu0 0.0
        %1070 = vmatpush1.msra.mxu0 %v1037
        %1071 = vmatprep.subr.mxu0 0.0
        %1072 = vmatpush1.msra.mxu0 %v1038
        %1073 = vmatprep.subr.mxu0 0.0
        %1074 = vmatpush1.msra.mxu0 %v1039
        %1075 = vmatprep.subr.mxu0 0.0
        %1076 = vmatpush1.msra.mxu0 %v1040
        %1077 = vmatprep.subr.mxu0 0.0
        %1078 = vmatpush1.msra.mxu0 %v1041
        %1079 = vmatprep.subr.mxu0 0.0
        %1080 = vmatpush1.msra.mxu0 %v1042
        %1081 = vmatprep.subr.mxu0 0.0
        %1082 = vmatpush1.msra.mxu0 %v1043
        %1083 = vmatprep.subr.mxu0 0.0
        %1084 = vmatpush1.msra.mxu0 %v1044
        %1085 = vmatprep.subr.mxu0 0.0
        %1086 = vmatpush1.msra.mxu0 0.0
        %1087 = vmatprep.subr.mxu0 0.0
        %1088 = vmatpush1.msra.mxu0 0.0
        %1089 = vmatprep.subr.mxu0 0.0
        %1090 = vmatpush1.msra.mxu0 0.0
        %1091 = vmatprep.subr.mxu0 0.0
        %1092 = vmatpush1.msra.mxu0 0.0
        %1093 = vmatprep.subr.mxu0 0.0
        %1094 = vmatpush1.msra.mxu0 0.0
        %1095 = vmatprep.subr.mxu0 0.0
        %1096 = vmatpush1.msra.mxu0 0.0
        %1097 = vmatprep.subr.mxu0 0.0
        %1098 = vmatpush1.msra.mxu0 0.0
        %1099 = vmatprep.subr.mxu0 0.0
        %1100 = vmatpush1.msra.mxu0 0.0
        %1101 = vmatprep.subr.mxu0 0.0
        %1102 = vmatpush1.msra.mxu0 0.0
        %1103 = vmatprep.subr.mxu0 0.0
        %1104 = vmatpush1.msra.mxu0 0.0
        %1105 = vmatprep.subr.mxu0 0.0
        %1106 = vmatpush1.msra.mxu0 0.0
        %1107 = vmatprep.subr.mxu0 0.0
        %1108 = vmatpush1.msra.mxu0 0.0
        %1109 = vmatprep.subr.mxu0 0.0
        %1110 = vmatpush1.msra.mxu0 0.0
        %1111 = vmatprep.subr.mxu0 0.0
        %1112 = vmatpush1.msra.mxu0 0.0
        %1113 = vmatprep.subr.mxu0 0.0
        %1114 = vmatpush1.msra.mxu0 0.0
        %1115 = vmatprep.subr.mxu0 0.0
        %1116 = vmatpush1.msra.mxu0 0.0
        %1117 = vmatprep.subr.mxu0 0.0
        %1118 = vmatpush1.msra.mxu0 0.0
        %1119 = vmatprep.subr.mxu0 0.0
        %1120 = vmatpush1.msra.mxu0 0.0
        %1121 = vmatprep.subr.mxu0 0.0
        %1122 = vmatpush1.msra.mxu0 0.0
        %1123 = vmatprep.subr.mxu0 0.0
        %1124 = vmatpush1.msra.mxu0 0.0
        %1125 = vmatprep.subr.mxu0 0.0
        %1126 = vmatpush1.msra.mxu0 0.0
        %1127 = vmatprep.subr.mxu0 0.0
        %1128 = vmatpush1.msra.mxu0 0.0
        %1129 = vmatprep.subr.mxu0 0.0
        %1130 = vmatpush1.msra.mxu0 0.0
        %1131 = vmatprep.subr.mxu0 0.0
        %1132 = vmatpush1.msra.mxu0 0.0
        %1133 = vmatprep.mubr.f32.mxu0 0.0
        %1134 = vmatmul.mubr.f32.gmra.mrb[0].mxu0 %v1046
        %v1135 = vpop.f32.mrb[0].mxu0
        %v1136 = vadd.f32 0.0, %v1135
        %v1137 = vpop.f32.mrb[0].mxu0
        %1138 = vmatprep.mubr.f32.mxu0 0.0
        %1139 = vmatmul.mubr.f32.gmra.mrb[0].mxu0 %v1049
        %v1140 = vpop.f32.mrb[0].mxu0
        %v1141 = vadd.f32 0.0, %v1140
        %v1142 = vpop.f32.mrb[0].mxu0
        %1143 = vmatprep.mubr.f32.mxu0 0.0
        %1144 = vmatmul.mubr.f32.gmra.mrb[0].mxu0 %v1052
        %v1145 = vpop.f32.mrb[0].mxu0
        %v1146 = vadd.f32 0.0, %v1145
        %v1147 = vpop.f32.mrb[0].mxu0
        %1148 = vmatprep.mubr.f32.mxu0 0.0
        %1149 = vmatmul.mubr.f32.gmra.mrb[0].mxu0 %v1055
        %v1150 = vpop.f32.mrb[0].mxu0
        %v1151 = vadd.f32 0.0, %v1150
        %v1152 = vpop.f32.mrb[0].mxu0
        %1153 = vmatprep.mubr.f32.mxu0 0.0
        %1154 = vmatmul.mubr.f32.gmra.mrb[0].mxu0 %v1058
        %v1155 = vpop.f32.mrb[0].mxu0
        %v1156 = vadd.f32 0.0, %v1155
        %v1157 = vpop.f32.mrb[0].mxu0
        %1158 = vmatprep.mubr.f32.mxu0 0.0
        %1159 = vmatmul.mubr.f32.gmra.mrb[0].mxu0 %v1061
        %v1160 = vpop.f32.mrb[0].mxu0
        %v1161 = vadd.f32 0.0, %v1160
        %v1162 = vpop.f32.mrb[0].mxu0
        %1163 = vmatprep.mubr.f32.mxu0 0.0
        %1164 = vmatmul.mubr.f32.gmra.mrb[0].mxu0 %v1064
        %v1165 = vpop.f32.mrb[0].mxu0
        %v1166 = vadd.f32 0.0, %v1165
        %v1167 = vpop.f32.mrb[0].mxu0
        %1168 = vmatprep.mubr.f32.mxu0 0.0
        %1169 = vmatmul.mubr.f32.gmra.mrb[0].mxu0 %v1067
        %v1170 = vpop.f32.mrb[0].mxu0
        %v1171 = vadd.f32 0.0, %v1170
        %v1172 = vpop.f32.mrb[0].mxu0
        %1173 = vdwg.mxu0
        %v1174 = vadd.f32 %v771, %v1136
        %v1175 = vadd.f32 %v776, %v1141
        %v1176 = vadd.f32 %v781, %v1146
        %v1177 = vadd.f32 %v786, %v1151
        %v1178 = vadd.f32 %v791, %v1156
        %v1179 = vadd.f32 %v796, %v1161
        %v1180 = vadd.f32 %v801, %v1166
        %v1181 = vadd.f32 %v806, %v1171
        %s1182 = scalar_lea.vmem %s1, 320
        %v1183 = vld [vmem:[%s1182] sm:$0xff]
        %v1184 = vld [vmem:[%s1182 + $0x8] sm:$0xff]
        %v1185 = vld [vmem:[%s1182 + $0x10] sm:$0xff]
        %v1186 = vld [vmem:[%s1182 + $0x18] sm:$0xff]
        %v1187 = vld [vmem:[%s1182 + $0x20] sm:$0xff]
        %v1188 = vld [vmem:[%s1182 + $0x28] sm:$0xff]
        %v1189 = vld [vmem:[%s1182 + $0x30] sm:$0xff]
        %v1190 = vld [vmem:[%s1182 + $0x38] sm:$0xff]
        %1191 = vmatprep.subr.mxu0 0.0
        %1192 = vmatpush1.msra.mxu0 %v1183
        %1193 = vmatprep.subr.mxu0 0.0
        %1194 = vmatpush1.msra.mxu0 %v1184
        %1195 = vmatprep.subr.mxu0 0.0
        %1196 = vmatpush1.msra.mxu0 %v1185
        %1197 = vmatprep.subr.mxu0 0.0
        %1198 = vmatpush1.msra.mxu0 %v1186
        %1199 = vmatprep.subr.mxu0 0.0
        %1200 = vmatpush1.msra.mxu0 %v1187
        %1201 = vmatprep.subr.mxu0 0.0
        %1202 = vmatpush1.msra.mxu0 %v1188
        %1203 = vmatprep.subr.mxu0 0.0
        %1204 = vmatpush1.msra.mxu0 %v1189
        %1205 = vmatprep.subr.mxu0 0.0
        %1206 = vmatpush1.msra.mxu0 %v1190
        %1207 = vmatprep.subr.mxu0 0.0
        %1208 = vmatpush1.msra.mxu0 0.0
        %1209 = vmatprep.subr.mxu0 0.0
        %1210 = vmatpush1.msra.mxu0 0.0
        %1211 = vmatprep.subr.mxu0 0.0
        %1212 = vmatpush1.msra.mxu0 0.0
        %1213 = vmatprep.subr.mxu0 0.0
        %1214 = vmatpush1.msra.mxu0 0.0
        %1215 = vmatprep.subr.mxu0 0.0
        %1216 = vmatpush1.msra.mxu0 0.0
        %1217 = vmatprep.subr.mxu0 0.0
        %1218 = vmatpush1.msra.mxu0 0.0
        %1219 = vmatprep.subr.mxu0 0.0
        %1220 = vmatpush1.msra.mxu0 0.0
        %1221 = vmatprep.subr.mxu0 0.0
        %1222 = vmatpush1.msra.mxu0 0.0
        %1223 = vmatprep.subr.mxu0 0.0
        %1224 = vmatpush1.msra.mxu0 0.0
        %1225 = vmatprep.subr.mxu0 0.0
        %1226 = vmatpush1.msra.mxu0 0.0
        %1227 = vmatprep.subr.mxu0 0.0
        %1228 = vmatpush1.msra.mxu0 0.0
        %1229 = vmatprep.subr.mxu0 0.0
        %1230 = vmatpush1.msra.mxu0 0.0
        %1231 = vmatprep.subr.mxu0 0.0
        %1232 = vmatpush1.msra.mxu0 0.0
        %1233 = vmatprep.subr.mxu0 0.0
        %1234 = vmatpush1.msra.mxu0 0.0
        %1235 = vmatprep.subr.mxu0 0.0
        %1236 = vmatpush1.msra.mxu0 0.0
        %1237 = vmatprep.subr.mxu0 0.0
        %1238 = vmatpush1.msra.mxu0 0.0
        %1239 = vmatprep.subr.mxu0 0.0
        %1240 = vmatpush1.msra.mxu0 0.0
        %1241 = vmatprep.subr.mxu0 0.0
        %1242 = vmatpush1.msra.mxu0 0.0
        %1243 = vmatprep.subr.mxu0 0.0
        %1244 = vmatpush1.msra.mxu0 0.0
        %1245 = vmatprep.subr.mxu0 0.0
        %1246 = vmatpush1.msra.mxu0 0.0
        %1247 = vmatprep.subr.mxu0 0.0
        %1248 = vmatpush1.msra.mxu0 0.0
        %1249 = vmatprep.subr.mxu0 0.0
        %1250 = vmatpush1.msra.mxu0 0.0
        %1251 = vmatprep.subr.mxu0 0.0
        %1252 = vmatpush1.msra.mxu0 0.0
        %1253 = vmatprep.subr.mxu0 0.0
        %1254 = vmatpush1.msra.mxu0 0.0
        %1255 = vmatprep.mubr.f32.mxu0 0.0
        %1256 = vmatmul.mubr.f32.gmra.mrb[0].mxu0 %v1046
        %v1257 = vpop.f32.mrb[0].mxu0
        %v1258 = vadd.f32 0.0, %v1257
        %v1259 = vpop.f32.mrb[0].mxu0
        %1260 = vmatprep.mubr.f32.mxu0 0.0
        %1261 = vmatmul.mubr.f32.gmra.mrb[0].mxu0 %v1049
        %v1262 = vpop.f32.mrb[0].mxu0
        %v1263 = vadd.f32 0.0, %v1262
        %v1264 = vpop.f32.mrb[0].mxu0
        %1265 = vmatprep.mubr.f32.mxu0 0.0
        %1266 = vmatmul.mubr.f32.gmra.mrb[0].mxu0 %v1052
        %v1267 = vpop.f32.mrb[0].mxu0
        %v1268 = vadd.f32 0.0, %v1267
        %v1269 = vpop.f32.mrb[0].mxu0
        %1270 = vmatprep.mubr.f32.mxu0 0.0
        %1271 = vmatmul.mubr.f32.gmra.mrb[0].mxu0 %v1055
        %v1272 = vpop.f32.mrb[0].mxu0
        %v1273 = vadd.f32 0.0, %v1272
        %v1274 = vpop.f32.mrb[0].mxu0
        %1275 = vmatprep.mubr.f32.mxu0 0.0
        %1276 = vmatmul.mubr.f32.gmra.mrb[0].mxu0 %v1058
        %v1277 = vpop.f32.mrb[0].mxu0
        %v1278 = vadd.f32 0.0, %v1277
        %v1279 = vpop.f32.mrb[0].mxu0
        %1280 = vmatprep.mubr.f32.mxu0 0.0
        %1281 = vmatmul.mubr.f32.gmra.mrb[0].mxu0 %v1061
        %v1282 = vpop.f32.mrb[0].mxu0
        %v1283 = vadd.f32 0.0, %v1282
        %v1284 = vpop.f32.mrb[0].mxu0
        %1285 = vmatprep.mubr.f32.mxu0 0.0
        %1286 = vmatmul.mubr.f32.gmra.mrb[0].mxu0 %v1064
        %v1287 = vpop.f32.mrb[0].mxu0
        %v1288 = vadd.f32 0.0, %v1287
        %v1289 = vpop.f32.mrb[0].mxu0
        %1290 = vmatprep.mubr.f32.mxu0 0.0
        %1291 = vmatmul.mubr.f32.gmra.mrb[0].mxu0 %v1067
        %v1292 = vpop.f32.mrb[0].mxu0
        %v1293 = vadd.f32 0.0, %v1292
        %v1294 = vpop.f32.mrb[0].mxu0
        %1295 = vdwg.mxu0
        %v1296 = vadd.f32 %v990, %v1258
        %v1297 = vadd.f32 %v995, %v1263
        %v1298 = vadd.f32 %v1000, %v1268
        %v1299 = vadd.f32 %v1005, %v1273
        %v1300 = vadd.f32 %v1010, %v1278
        %v1301 = vadd.f32 %v1015, %v1283
        %v1302 = vadd.f32 %v1020, %v1288
        %v1303 = vadd.f32 %v1025, %v1293
        %v1304 = vmax.f32 %v1174, %v1296
        %v1305 = vmax.f32 %v1175, %v1297
        %v1306 = vmax.f32 %v1176, %v1298
        %v1307 = vmax.f32 %v1177, %v1299
        %v1308 = vmax.f32 %v1178, %v1300
        %v1309 = vmax.f32 %v1179, %v1301
        %v1310 = vmax.f32 %v1180, %v1302
        %v1311 = vmax.f32 %v1181, %v1303
        %1312 = vst [vmem:[#allocation6] sm:$0xff] %v1304
        %1313 = vst [vmem:[#allocation6 + $0x8] sm:$0xff] %v1305
        %1314 = vst [vmem:[#allocation6 + $0x10] sm:$0xff] %v1306
        %1315 = vst [vmem:[#allocation6 + $0x18] sm:$0xff] %v1307
        %1316 = vst [vmem:[#allocation6 + $0x20] sm:$0xff] %v1308
        %1317 = vst [vmem:[#allocation6 + $0x28] sm:$0xff] %v1309
        %1318 = vst [vmem:[#allocation6 + $0x30] sm:$0xff] %v1310
        %1319 = vst [vmem:[#allocation6 + $0x38] sm:$0xff] %v1311
        %v1320 = vld [vmem:[#allocation6] ss:$2 sm:$0xff]
        %s1321 = scalar_lea.vmem [#allocation6], 16
        %v1322 = vld [vmem:[%s1321] ss:$2 sm:$0xff]
        %s1323 = scalar_lea.vmem [#allocation6], 32
        %v1324 = vld [vmem:[%s1323] ss:$2 sm:$0xff]
        %s1325 = scalar_lea.vmem [#allocation6], 48
        %v1326 = vld [vmem:[%s1325] ss:$2 sm:$0xff]
        %s1327 = scalar_lea.vmem [#allocation6], 1
        %v1328 = vld [vmem:[%s1327] ss:$2 sm:$0xff]
        %s1329 = scalar_lea.vmem [#allocation6], 17
        %v1330 = vld [vmem:[%s1329] ss:$2 sm:$0xff]
        %s1331 = scalar_lea.vmem [#allocation6], 33
        %v1332 = vld [vmem:[%s1331] ss:$2 sm:$0xff]
        %s1333 = scalar_lea.vmem [#allocation6], 49
        %v1334 = vld [vmem:[%s1333] ss:$2 sm:$0xff]
        %v1335 = vmax.f32 %v1320, %v1328
        %v1336 = vmax.f32 %v1322, %v1330
        %v1337 = vmax.f32 %v1324, %v1332
        %v1338 = vmax.f32 %v1326, %v1334
        %v1339 = vld [vmem:[%s2] sm:$0x1]
        %v1341 = vlaneseq
        %v1342 = vshrl.u32 %v1341, 7
        %v1343 = vsub.s32 0, %v1342
        %v1344 = vrot.slane %v1339, %v1343
        %v1346 = vadd.f32 %v1335, %v1344
        %v1347 = vadd.f32 %v1336, %v1344
        %v1348 = vadd.f32 %v1337, %v1344
        %v1349 = vadd.f32 %v1338, %v1344
        %v1350 = vmax.f32 %v1346, 0.0
        %v1351 = vmax.f32 %v1347, 0.0
        %v1352 = vmax.f32 %v1348, 0.0
        %v1353 = vmax.f32 %v1349, 0.0
        %1354 = vst [vmem:[#allocation3] sm:$0xff] 0.0
        %1355 = vst [vmem:[#allocation3 + $0x8] sm:$0xff] 0.0
        %1356 = vst [vmem:[#allocation3 + $0x10] sm:$0xff] 0.0
        %1357 = vst [vmem:[#allocation3 + $0x18] sm:$0xff] 0.0
        %1358 = vst [vmem:[#allocation3 + $0x20] sm:$0x3] 0.0
        %1359 = vst [vmem:[#allocation3 + $0x1] sm:$0xff] %v1350
        %1360 = vst [vmem:[#allocation3 + $0x9] sm:$0xff] %v1351
        %1361 = vst [vmem:[#allocation3 + $0x11] sm:$0xff] %v1352
        %1362 = vst [vmem:[#allocation3 + $0x19] sm:$0xff] %v1353
        %v1363 = vld [vmem:[#allocation3] sm:$0xff]
        %v1364 = vld [vmem:[#allocation3 + $0x8] sm:$0xff]
        %v1365 = vld [vmem:[#allocation3 + $0x10] sm:$0xff]
        %v1366 = vld [vmem:[#allocation3 + $0x18] sm:$0xff]
        %v1367 = vld [vmem:[#allocation7] sm:$0xff]
        %v1368 = vld [vmem:[#allocation7 + $0x8] sm:$0xff]
        %v1369 = vld [vmem:[#allocation7 + $0x10] sm:$0xff]
        %v1370 = vld [vmem:[#allocation7 + $0x18] sm:$0xff]
        %v1371 = vld [vmem:[#allocation7 + $0x20] sm:$0xff]
        %v1372 = vld [vmem:[#allocation7 + $0x28] sm:$0xff]
        %v1373 = vld [vmem:[#allocation7 + $0x30] sm:$0xff]
        %v1374 = vld [vmem:[#allocation7 + $0x38] sm:$0xff]
        %v1375 = vld [vmem:[#allocation7 + $0x40] sm:$0xff]
        %v1376 = vld [vmem:[#allocation7 + $0x48] sm:$0xff]
        %v1377 = vld [vmem:[#allocation7 + $0x50] sm:$0xff]
        %v1378 = vld [vmem:[#allocation7 + $0x58] sm:$0xff]
        %v1379 = vld [vmem:[#allocation7 + $0x60] sm:$0xff]
        %v1380 = vld [vmem:[#allocation7 + $0x68] sm:$0xff]
        %v1381 = vld [vmem:[#allocation7 + $0x70] sm:$0xff]
        %v1382 = vld [vmem:[#allocation7 + $0x78] sm:$0xff]
        %s1383 = scalar_lea.vmem [#allocation7], 384
        %v1384 = vld [vmem:[%s1383] sm:$0xff]
        %v1385 = vld [vmem:[%s1383 + $0x8] sm:$0xff]
        %v1386 = vld [vmem:[%s1383 + $0x10] sm:$0xff]
        %v1387 = vld [vmem:[%s1383 + $0x18] sm:$0xff]
        %v1388 = vld [vmem:[%s1383 + $0x20] sm:$0xff]
        %v1389 = vld [vmem:[%s1383 + $0x28] sm:$0xff]
        %v1390 = vld [vmem:[%s1383 + $0x30] sm:$0xff]
        %v1391 = vld [vmem:[%s1383 + $0x38] sm:$0xff]
        %v1392 = vld [vmem:[%s1383 + $0x40] sm:$0xff]
        %v1393 = vld [vmem:[%s1383 + $0x48] sm:$0xff]
        %v1394 = vld [vmem:[%s1383 + $0x50] sm:$0xff]
        %v1395 = vld [vmem:[%s1383 + $0x58] sm:$0xff]
        %v1396 = vld [vmem:[%s1383 + $0x60] sm:$0xff]
        %v1397 = vld [vmem:[%s1383 + $0x68] sm:$0xff]
        %v1398 = vld [vmem:[%s1383 + $0x70] sm:$0xff]
        %v1399 = vld [vmem:[%s1383 + $0x78] sm:$0xff]
        %v1400 = vld [vmem:[#allocation3 + $0x1] sm:$0xff]
        %v1401 = vld [vmem:[#allocation3 + $0x9] sm:$0xff]
        %v1402 = vld [vmem:[#allocation3 + $0x11] sm:$0xff]
        %v1403 = vld [vmem:[#allocation3 + $0x19] sm:$0xff]
        %s1404 = scalar_lea.vmem [#allocation7], 128
        %v1405 = vld [vmem:[%s1404] sm:$0xff]
        %v1406 = vld [vmem:[%s1404 + $0x8] sm:$0xff]
        %v1407 = vld [vmem:[%s1404 + $0x10] sm:$0xff]
        %v1408 = vld [vmem:[%s1404 + $0x18] sm:$0xff]
        %v1409 = vld [vmem:[%s1404 + $0x20] sm:$0xff]
        %v1410 = vld [vmem:[%s1404 + $0x28] sm:$0xff]
        %v1411 = vld [vmem:[%s1404 + $0x30] sm:$0xff]
        %v1412 = vld [vmem:[%s1404 + $0x38] sm:$0xff]
        %v1413 = vld [vmem:[%s1404 + $0x40] sm:$0xff]
        %v1414 = vld [vmem:[%s1404 + $0x48] sm:$0xff]
        %v1415 = vld [vmem:[%s1404 + $0x50] sm:$0xff]
        %v1416 = vld [vmem:[%s1404 + $0x58] sm:$0xff]
        %v1417 = vld [vmem:[%s1404 + $0x60] sm:$0xff]
        %v1418 = vld [vmem:[%s1404 + $0x68] sm:$0xff]
        %v1419 = vld [vmem:[%s1404 + $0x70] sm:$0xff]
        %v1420 = vld [vmem:[%s1404 + $0x78] sm:$0xff]
        %1421 = vmatprep.subr.mxu0 0.0
        %1422 = vmatpush1.msra.mxu0 %v1405
        %1423 = vmatprep.subr.mxu0 0.0
        %1424 = vmatpush1.msra.mxu0 %v1406
        %1425 = vmatprep.subr.mxu0 0.0
        %1426 = vmatpush1.msra.mxu0 %v1407
        %1427 = vmatprep.subr.mxu0 0.0
        %1428 = vmatpush1.msra.mxu0 %v1408
        %1429 = vmatprep.subr.mxu0 0.0
        %1430 = vmatpush1.msra.mxu0 %v1409
        %1431 = vmatprep.subr.mxu0 0.0
        %1432 = vmatpush1.msra.mxu0 %v1410
        %1433 = vmatprep.subr.mxu0 0.0
        %1434 = vmatpush1.msra.mxu0 %v1411
        %1435 = vmatprep.subr.mxu0 0.0
        %1436 = vmatpush1.msra.mxu0 %v1412
        %1437 = vmatprep.subr.mxu0 0.0
        %1438 = vmatpush1.msra.mxu0 %v1413
        %1439 = vmatprep.subr.mxu0 0.0
        %1440 = vmatpush1.msra.mxu0 %v1414
        %1441 = vmatprep.subr.mxu0 0.0
        %1442 = vmatpush1.msra.mxu0 %v1415
        %1443 = vmatprep.subr.mxu0 0.0
        %1444 = vmatpush1.msra.mxu0 %v1416
        %1445 = vmatprep.subr.mxu0 0.0
        %1446 = vmatpush1.msra.mxu0 %v1417
        %1447 = vmatprep.subr.mxu0 0.0
        %1448 = vmatpush1.msra.mxu0 %v1418
        %1449 = vmatprep.subr.mxu0 0.0
        %1450 = vmatpush1.msra.mxu0 %v1419
        %1451 = vmatprep.subr.mxu0 0.0
        %1452 = vmatpush1.msra.mxu0 %v1420
        %1453 = vmatprep.subr.mxu0 0.0
        %1454 = vmatpush1.msra.mxu0 0.0
        %1455 = vmatprep.subr.mxu0 0.0
        %1456 = vmatpush1.msra.mxu0 0.0
        %1457 = vmatprep.subr.mxu0 0.0
        %1458 = vmatpush1.msra.mxu0 0.0
        %1459 = vmatprep.subr.mxu0 0.0
        %1460 = vmatpush1.msra.mxu0 0.0
        %1461 = vmatprep.subr.mxu0 0.0
        %1462 = vmatpush1.msra.mxu0 0.0
        %1463 = vmatprep.subr.mxu0 0.0
        %1464 = vmatpush1.msra.mxu0 0.0
        %1465 = vmatprep.subr.mxu0 0.0
        %1466 = vmatpush1.msra.mxu0 0.0
        %1467 = vmatprep.subr.mxu0 0.0
        %1468 = vmatpush1.msra.mxu0 0.0
        %1469 = vmatprep.subr.mxu0 0.0
        %1470 = vmatpush1.msra.mxu0 0.0
        %1471 = vmatprep.subr.mxu0 0.0
        %1472 = vmatpush1.msra.mxu0 0.0
        %1473 = vmatprep.subr.mxu0 0.0
        %1474 = vmatpush1.msra.mxu0 0.0
        %1475 = vmatprep.subr.mxu0 0.0
        %1476 = vmatpush1.msra.mxu0 0.0
        %1477 = vmatprep.subr.mxu0 0.0
        %1478 = vmatpush1.msra.mxu0 0.0
        %1479 = vmatprep.subr.mxu0 0.0
        %1480 = vmatpush1.msra.mxu0 0.0
        %1481 = vmatprep.subr.mxu0 0.0
        %1482 = vmatpush1.msra.mxu0 0.0
        %1483 = vmatprep.subr.mxu0 0.0
        %1484 = vmatpush1.msra.mxu0 0.0
        %1485 = vmatprep.mubr.f32.mxu0 0.0
        %1486 = vmatmul.mubr.f32.gmra.mrb[0].mxu0 %v1400
        %v1487 = vpop.f32.mrb[0].mxu0
        %v1488 = vadd.f32 0.0, %v1487
        %v1489 = vpop.f32.mrb[0].mxu0
        %1490 = vmatprep.mubr.f32.mxu0 0.0
        %1491 = vmatmul.mubr.f32.gmra.mrb[0].mxu0 %v1401
        %v1492 = vpop.f32.mrb[0].mxu0
        %v1493 = vadd.f32 0.0, %v1492
        %v1494 = vpop.f32.mrb[0].mxu0
        %1495 = vmatprep.mubr.f32.mxu0 0.0
        %1496 = vmatmul.mubr.f32.gmra.mrb[0].mxu0 %v1402
        %v1497 = vpop.f32.mrb[0].mxu0
        %v1498 = vadd.f32 0.0, %v1497
        %v1499 = vpop.f32.mrb[0].mxu0
        %1500 = vmatprep.mubr.f32.mxu0 0.0
        %1501 = vmatmul.mubr.f32.gmra.mrb[0].mxu0 %v1403
        %v1502 = vpop.f32.mrb[0].mxu0
        %v1503 = vadd.f32 0.0, %v1502
        %v1504 = vpop.f32.mrb[0].mxu0
        %1505 = vdwg.mxu0
        %1506 = vmatprep.subr.mxu0 0.0
        %1507 = vmatpush1.msra.mxu0 %v1367
        %1508 = vmatprep.subr.mxu0 0.0
        %1509 = vmatpush1.msra.mxu0 %v1368
        %1510 = vmatprep.subr.mxu0 0.0
        %1511 = vmatpush1.msra.mxu0 %v1369
        %1512 = vmatprep.subr.mxu0 0.0
        %1513 = vmatpush1.msra.mxu0 %v1370
        %1514 = vmatprep.subr.mxu0 0.0
        %1515 = vmatpush1.msra.mxu0 %v1371
        %1516 = vmatprep.subr.mxu0 0.0
        %1517 = vmatpush1.msra.mxu0 %v1372
        %1518 = vmatprep.subr.mxu0 0.0
        %1519 = vmatpush1.msra.mxu0 %v1373
        %1520 = vmatprep.subr.mxu0 0.0
        %1521 = vmatpush1.msra.mxu0 %v1374
        %1522 = vmatprep.subr.mxu0 0.0
        %1523 = vmatpush1.msra.mxu0 %v1375
        %1524 = vmatprep.subr.mxu0 0.0
        %1525 = vmatpush1.msra.mxu0 %v1376
        %1526 = vmatprep.subr.mxu0 0.0
        %1527 = vmatpush1.msra.mxu0 %v1377
        %1528 = vmatprep.subr.mxu0 0.0
        %1529 = vmatpush1.msra.mxu0 %v1378
        %1530 = vmatprep.subr.mxu0 0.0
        %1531 = vmatpush1.msra.mxu0 %v1379
        %1532 = vmatprep.subr.mxu0 0.0
        %1533 = vmatpush1.msra.mxu0 %v1380
        %1534 = vmatprep.subr.mxu0 0.0
        %1535 = vmatpush1.msra.mxu0 %v1381
        %1536 = vmatprep.subr.mxu0 0.0
        %1537 = vmatpush1.msra.mxu0 %v1382
        %1538 = vmatprep.subr.mxu0 0.0
        %1539 = vmatpush1.msra.mxu0 0.0
        %1540 = vmatprep.subr.mxu0 0.0
        %1541 = vmatpush1.msra.mxu0 0.0
        %1542 = vmatprep.subr.mxu0 0.0
        %1543 = vmatpush1.msra.mxu0 0.0
        %1544 = vmatprep.subr.mxu0 0.0
        %1545 = vmatpush1.msra.mxu0 0.0
        %1546 = vmatprep.subr.mxu0 0.0
        %1547 = vmatpush1.msra.mxu0 0.0
        %1548 = vmatprep.subr.mxu0 0.0
        %1549 = vmatpush1.msra.mxu0 0.0
        %1550 = vmatprep.subr.mxu0 0.0
        %1551 = vmatpush1.msra.mxu0 0.0
        %1552 = vmatprep.subr.mxu0 0.0
        %1553 = vmatpush1.msra.mxu0 0.0
        %1554 = vmatprep.subr.mxu0 0.0
        %1555 = vmatpush1.msra.mxu0 0.0
        %1556 = vmatprep.subr.mxu0 0.0
        %1557 = vmatpush1.msra.mxu0 0.0
        %1558 = vmatprep.subr.mxu0 0.0
        %1559 = vmatpush1.msra.mxu0 0.0
        %1560 = vmatprep.subr.mxu0 0.0
        %1561 = vmatpush1.msra.mxu0 0.0
        %1562 = vmatprep.subr.mxu0 0.0
        %1563 = vmatpush1.msra.mxu0 0.0
        %1564 = vmatprep.subr.mxu0 0.0
        %1565 = vmatpush1.msra.mxu0 0.0
        %1566 = vmatprep.subr.mxu0 0.0
        %1567 = vmatpush1.msra.mxu0 0.0
        %1568 = vmatprep.subr.mxu0 0.0
        %1569 = vmatpush1.msra.mxu0 0.0
        %1570 = vmatprep.mubr.f32.mxu0 0.0
        %1571 = vmatmul.mubr.f32.gmra.mrb[0].mxu0 %v1363
        %v1572 = vpop.f32.mrb[0].mxu0
        %v1573 = vadd.f32 %v1488, %v1572
        %v1574 = vpop.f32.mrb[0].mxu0
        %1575 = vmatprep.mubr.f32.mxu0 0.0
        %1576 = vmatmul.mubr.f32.gmra.mrb[0].mxu0 %v1364
        %v1577 = vpop.f32.mrb[0].mxu0
        %v1578 = vadd.f32 %v1493, %v1577
        %v1579 = vpop.f32.mrb[0].mxu0
        %1580 = vmatprep.mubr.f32.mxu0 0.0
        %1581 = vmatmul.mubr.f32.gmra.mrb[0].mxu0 %v1365
        %v1582 = vpop.f32.mrb[0].mxu0
        %v1583 = vadd.f32 %v1498, %v1582
        %v1584 = vpop.f32.mrb[0].mxu0
        %1585 = vmatprep.mubr.f32.mxu0 0.0
        %1586 = vmatmul.mubr.f32.gmra.mrb[0].mxu0 %v1366
        %v1587 = vpop.f32.mrb[0].mxu0
        %v1588 = vadd.f32 %v1503, %v1587
        %v1589 = vpop.f32.mrb[0].mxu0
        %1590 = vdwg.mxu0
        %s1591 = scalar_lea.vmem [#allocation7], 512
        %v1592 = vld [vmem:[%s1591] sm:$0xff]
        %v1593 = vld [vmem:[%s1591 + $0x8] sm:$0xff]
        %v1594 = vld [vmem:[%s1591 + $0x10] sm:$0xff]
        %v1595 = vld [vmem:[%s1591 + $0x18] sm:$0xff]
        %v1596 = vld [vmem:[%s1591 + $0x20] sm:$0xff]
        %v1597 = vld [vmem:[%s1591 + $0x28] sm:$0xff]
        %v1598 = vld [vmem:[%s1591 + $0x30] sm:$0xff]
        %v1599 = vld [vmem:[%s1591 + $0x38] sm:$0xff]
        %v1600 = vld [vmem:[%s1591 + $0x40] sm:$0xff]
        %v1601 = vld [vmem:[%s1591 + $0x48] sm:$0xff]
        %v1602 = vld [vmem:[%s1591 + $0x50] sm:$0xff]
        %v1603 = vld [vmem:[%s1591 + $0x58] sm:$0xff]
        %v1604 = vld [vmem:[%s1591 + $0x60] sm:$0xff]
        %v1605 = vld [vmem:[%s1591 + $0x68] sm:$0xff]
        %v1606 = vld [vmem:[%s1591 + $0x70] sm:$0xff]
        %v1607 = vld [vmem:[%s1591 + $0x78] sm:$0xff]
        %1608 = vmatprep.subr.mxu0 0.0
        %1609 = vmatpush1.msra.mxu0 %v1592
        %1610 = vmatprep.subr.mxu0 0.0
        %1611 = vmatpush1.msra.mxu0 %v1593
        %1612 = vmatprep.subr.mxu0 0.0
        %1613 = vmatpush1.msra.mxu0 %v1594
        %1614 = vmatprep.subr.mxu0 0.0
        %1615 = vmatpush1.msra.mxu0 %v1595
        %1616 = vmatprep.subr.mxu0 0.0
        %1617 = vmatpush1.msra.mxu0 %v1596
        %1618 = vmatprep.subr.mxu0 0.0
        %1619 = vmatpush1.msra.mxu0 %v1597
        %1620 = vmatprep.subr.mxu0 0.0
        %1621 = vmatpush1.msra.mxu0 %v1598
        %1622 = vmatprep.subr.mxu0 0.0
        %1623 = vmatpush1.msra.mxu0 %v1599
        %1624 = vmatprep.subr.mxu0 0.0
        %1625 = vmatpush1.msra.mxu0 %v1600
        %1626 = vmatprep.subr.mxu0 0.0
        %1627 = vmatpush1.msra.mxu0 %v1601
        %1628 = vmatprep.subr.mxu0 0.0
        %1629 = vmatpush1.msra.mxu0 %v1602
        %1630 = vmatprep.subr.mxu0 0.0
        %1631 = vmatpush1.msra.mxu0 %v1603
        %1632 = vmatprep.subr.mxu0 0.0
        %1633 = vmatpush1.msra.mxu0 %v1604
        %1634 = vmatprep.subr.mxu0 0.0
        %1635 = vmatpush1.msra.mxu0 %v1605
        %1636 = vmatprep.subr.mxu0 0.0
        %1637 = vmatpush1.msra.mxu0 %v1606
        %1638 = vmatprep.subr.mxu0 0.0
        %1639 = vmatpush1.msra.mxu0 %v1607
        %1640 = vmatprep.subr.mxu0 0.0
        %1641 = vmatpush1.msra.mxu0 0.0
        %1642 = vmatprep.subr.mxu0 0.0
        %1643 = vmatpush1.msra.mxu0 0.0
        %1644 = vmatprep.subr.mxu0 0.0
        %1645 = vmatpush1.msra.mxu0 0.0
        %1646 = vmatprep.subr.mxu0 0.0
        %1647 = vmatpush1.msra.mxu0 0.0
        %1648 = vmatprep.subr.mxu0 0.0
        %1649 = vmatpush1.msra.mxu0 0.0
        %1650 = vmatprep.subr.mxu0 0.0
        %1651 = vmatpush1.msra.mxu0 0.0
        %1652 = vmatprep.subr.mxu0 0.0
        %1653 = vmatpush1.msra.mxu0 0.0
        %1654 = vmatprep.subr.mxu0 0.0
        %1655 = vmatpush1.msra.mxu0 0.0
        %1656 = vmatprep.subr.mxu0 0.0
        %1657 = vmatpush1.msra.mxu0 0.0
        %1658 = vmatprep.subr.mxu0 0.0
        %1659 = vmatpush1.msra.mxu0 0.0
        %1660 = vmatprep.subr.mxu0 0.0
        %1661 = vmatpush1.msra.mxu0 0.0
        %1662 = vmatprep.subr.mxu0 0.0
        %1663 = vmatpush1.msra.mxu0 0.0
        %1664 = vmatprep.subr.mxu0 0.0
        %1665 = vmatpush1.msra.mxu0 0.0
        %1666 = vmatprep.subr.mxu0 0.0
        %1667 = vmatpush1.msra.mxu0 0.0
        %1668 = vmatprep.subr.mxu0 0.0
        %1669 = vmatpush1.msra.mxu0 0.0
        %1670 = vmatprep.subr.mxu0 0.0
        %1671 = vmatpush1.msra.mxu0 0.0
        %1672 = vmatprep.mubr.f32.mxu0 0.0
        %1673 = vmatmul.mubr.f32.gmra.mrb[0].mxu0 %v1400
        %v1674 = vpop.f32.mrb[0].mxu0
        %v1675 = vadd.f32 0.0, %v1674
        %v1676 = vpop.f32.mrb[0].mxu0
        %1677 = vmatprep.mubr.f32.mxu0 0.0
        %1678 = vmatmul.mubr.f32.gmra.mrb[0].mxu0 %v1401
        %v1679 = vpop.f32.mrb[0].mxu0
        %v1680 = vadd.f32 0.0, %v1679
        %v1681 = vpop.f32.mrb[0].mxu0
        %1682 = vmatprep.mubr.f32.mxu0 0.0
        %1683 = vmatmul.mubr.f32.gmra.mrb[0].mxu0 %v1402
        %v1684 = vpop.f32.mrb[0].mxu0
        %v1685 = vadd.f32 0.0, %v1684
        %v1686 = vpop.f32.mrb[0].mxu0
        %1687 = vmatprep.mubr.f32.mxu0 0.0
        %1688 = vmatmul.mubr.f32.gmra.mrb[0].mxu0 %v1403
        %v1689 = vpop.f32.mrb[0].mxu0
        %v1690 = vadd.f32 0.0, %v1689
        %v1691 = vpop.f32.mrb[0].mxu0
        %1692 = vdwg.mxu0
        %1693 = vmatprep.subr.mxu0 0.0
        %1694 = vmatpush1.msra.mxu0 %v1384
        %1695 = vmatprep.subr.mxu0 0.0
        %1696 = vmatpush1.msra.mxu0 %v1385
        %1697 = vmatprep.subr.mxu0 0.0
        %1698 = vmatpush1.msra.mxu0 %v1386
        %1699 = vmatprep.subr.mxu0 0.0
        %1700 = vmatpush1.msra.mxu0 %v1387
        %1701 = vmatprep.subr.mxu0 0.0
        %1702 = vmatpush1.msra.mxu0 %v1388
        %1703 = vmatprep.subr.mxu0 0.0
        %1704 = vmatpush1.msra.mxu0 %v1389
        %1705 = vmatprep.subr.mxu0 0.0
        %1706 = vmatpush1.msra.mxu0 %v1390
        %1707 = vmatprep.subr.mxu0 0.0
        %1708 = vmatpush1.msra.mxu0 %v1391
        %1709 = vmatprep.subr.mxu0 0.0
        %1710 = vmatpush1.msra.mxu0 %v1392
        %1711 = vmatprep.subr.mxu0 0.0
        %1712 = vmatpush1.msra.mxu0 %v1393
        %1713 = vmatprep.subr.mxu0 0.0
        %1714 = vmatpush1.msra.mxu0 %v1394
        %1715 = vmatprep.subr.mxu0 0.0
        %1716 = vmatpush1.msra.mxu0 %v1395
        %1717 = vmatprep.subr.mxu0 0.0
        %1718 = vmatpush1.msra.mxu0 %v1396
        %1719 = vmatprep.subr.mxu0 0.0
        %1720 = vmatpush1.msra.mxu0 %v1397
        %1721 = vmatprep.subr.mxu0 0.0
        %1722 = vmatpush1.msra.mxu0 %v1398
        %1723 = vmatprep.subr.mxu0 0.0
        %1724 = vmatpush1.msra.mxu0 %v1399
        %1725 = vmatprep.subr.mxu0 0.0
        %1726 = vmatpush1.msra.mxu0 0.0
        %1727 = vmatprep.subr.mxu0 0.0
        %1728 = vmatpush1.msra.mxu0 0.0
        %1729 = vmatprep.subr.mxu0 0.0
        %1730 = vmatpush1.msra.mxu0 0.0
        %1731 = vmatprep.subr.mxu0 0.0
        %1732 = vmatpush1.msra.mxu0 0.0
        %1733 = vmatprep.subr.mxu0 0.0
        %1734 = vmatpush1.msra.mxu0 0.0
        %1735 = vmatprep.subr.mxu0 0.0
        %1736 = vmatpush1.msra.mxu0 0.0
        %1737 = vmatprep.subr.mxu0 0.0
        %1738 = vmatpush1.msra.mxu0 0.0
        %1739 = vmatprep.subr.mxu0 0.0
        %1740 = vmatpush1.msra.mxu0 0.0
        %1741 = vmatprep.subr.mxu0 0.0
        %1742 = vmatpush1.msra.mxu0 0.0
        %1743 = vmatprep.subr.mxu0 0.0
        %1744 = vmatpush1.msra.mxu0 0.0
        %1745 = vmatprep.subr.mxu0 0.0
        %1746 = vmatpush1.msra.mxu0 0.0
        %1747 = vmatprep.subr.mxu0 0.0
        %1748 = vmatpush1.msra.mxu0 0.0
        %1749 = vmatprep.subr.mxu0 0.0
        %1750 = vmatpush1.msra.mxu0 0.0
        %1751 = vmatprep.subr.mxu0 0.0
        %1752 = vmatpush1.msra.mxu0 0.0
        %1753 = vmatprep.subr.mxu0 0.0
        %1754 = vmatpush1.msra.mxu0 0.0
        %1755 = vmatprep.subr.mxu0 0.0
        %1756 = vmatpush1.msra.mxu0 0.0
        %1757 = vmatprep.mubr.f32.mxu0 0.0
        %1758 = vmatmul.mubr.f32.gmra.mrb[0].mxu0 %v1363
        %v1759 = vpop.f32.mrb[0].mxu0
        %v1760 = vadd.f32 %v1675, %v1759
        %v1761 = vpop.f32.mrb[0].mxu0
        %1762 = vmatprep.mubr.f32.mxu0 0.0
        %1763 = vmatmul.mubr.f32.gmra.mrb[0].mxu0 %v1364
        %v1764 = vpop.f32.mrb[0].mxu0
        %v1765 = vadd.f32 %v1680, %v1764
        %v1766 = vpop.f32.mrb[0].mxu0
        %1767 = vmatprep.mubr.f32.mxu0 0.0
        %1768 = vmatmul.mubr.f32.gmra.mrb[0].mxu0 %v1365
        %v1769 = vpop.f32.mrb[0].mxu0
        %v1770 = vadd.f32 %v1685, %v1769
        %v1771 = vpop.f32.mrb[0].mxu0
        %1772 = vmatprep.mubr.f32.mxu0 0.0
        %1773 = vmatmul.mubr.f32.gmra.mrb[0].mxu0 %v1366
        %v1774 = vpop.f32.mrb[0].mxu0
        %v1775 = vadd.f32 %v1690, %v1774
        %v1776 = vpop.f32.mrb[0].mxu0
        %1777 = vdwg.mxu0
        %v1778 = vld [vmem:[#allocation3 + $0x2] sm:$0xff]
        %v1779 = vld [vmem:[#allocation3 + $0xa] sm:$0xff]
        %v1780 = vld [vmem:[#allocation3 + $0x12] sm:$0xff]
        %v1781 = vld [vmem:[#allocation3 + $0x1a] sm:$0xff]
        %s1782 = scalar_lea.vmem [#allocation7], 256
        %v1783 = vld [vmem:[%s1782] sm:$0xff]
        %v1784 = vld [vmem:[%s1782 + $0x8] sm:$0xff]
        %v1785 = vld [vmem:[%s1782 + $0x10] sm:$0xff]
        %v1786 = vld [vmem:[%s1782 + $0x18] sm:$0xff]
        %v1787 = vld [vmem:[%s1782 + $0x20] sm:$0xff]
        %v1788 = vld [vmem:[%s1782 + $0x28] sm:$0xff]
        %v1789 = vld [vmem:[%s1782 + $0x30] sm:$0xff]
        %v1790 = vld [vmem:[%s1782 + $0x38] sm:$0xff]
        %v1791 = vld [vmem:[%s1782 + $0x40] sm:$0xff]
        %v1792 = vld [vmem:[%s1782 + $0x48] sm:$0xff]
        %v1793 = vld [vmem:[%s1782 + $0x50] sm:$0xff]
        %v1794 = vld [vmem:[%s1782 + $0x58] sm:$0xff]
        %v1795 = vld [vmem:[%s1782 + $0x60] sm:$0xff]
        %v1796 = vld [vmem:[%s1782 + $0x68] sm:$0xff]
        %v1797 = vld [vmem:[%s1782 + $0x70] sm:$0xff]
        %v1798 = vld [vmem:[%s1782 + $0x78] sm:$0xff]
        %1799 = vmatprep.subr.mxu0 0.0
        %1800 = vmatpush1.msra.mxu0 %v1783
        %1801 = vmatprep.subr.mxu0 0.0
        %1802 = vmatpush1.msra.mxu0 %v1784
        %1803 = vmatprep.subr.mxu0 0.0
        %1804 = vmatpush1.msra.mxu0 %v1785
        %1805 = vmatprep.subr.mxu0 0.0
        %1806 = vmatpush1.msra.mxu0 %v1786
        %1807 = vmatprep.subr.mxu0 0.0
        %1808 = vmatpush1.msra.mxu0 %v1787
        %1809 = vmatprep.subr.mxu0 0.0
        %1810 = vmatpush1.msra.mxu0 %v1788
        %1811 = vmatprep.subr.mxu0 0.0
        %1812 = vmatpush1.msra.mxu0 %v1789
        %1813 = vmatprep.subr.mxu0 0.0
        %1814 = vmatpush1.msra.mxu0 %v1790
        %1815 = vmatprep.subr.mxu0 0.0
        %1816 = vmatpush1.msra.mxu0 %v1791
        %1817 = vmatprep.subr.mxu0 0.0
        %1818 = vmatpush1.msra.mxu0 %v1792
        %1819 = vmatprep.subr.mxu0 0.0
        %1820 = vmatpush1.msra.mxu0 %v1793
        %1821 = vmatprep.subr.mxu0 0.0
        %1822 = vmatpush1.msra.mxu0 %v1794
        %1823 = vmatprep.subr.mxu0 0.0
        %1824 = vmatpush1.msra.mxu0 %v1795
        %1825 = vmatprep.subr.mxu0 0.0
        %1826 = vmatpush1.msra.mxu0 %v1796
        %1827 = vmatprep.subr.mxu0 0.0
        %1828 = vmatpush1.msra.mxu0 %v1797
        %1829 = vmatprep.subr.mxu0 0.0
        %1830 = vmatpush1.msra.mxu0 %v1798
        %1831 = vmatprep.subr.mxu0 0.0
        %1832 = vmatpush1.msra.mxu0 0.0
        %1833 = vmatprep.subr.mxu0 0.0
        %1834 = vmatpush1.msra.mxu0 0.0
        %1835 = vmatprep.subr.mxu0 0.0
        %1836 = vmatpush1.msra.mxu0 0.0
        %1837 = vmatprep.subr.mxu0 0.0
        %1838 = vmatpush1.msra.mxu0 0.0
        %1839 = vmatprep.subr.mxu0 0.0
        %1840 = vmatpush1.msra.mxu0 0.0
        %1841 = vmatprep.subr.mxu0 0.0
        %1842 = vmatpush1.msra.mxu0 0.0
        %1843 = vmatprep.subr.mxu0 0.0
        %1844 = vmatpush1.msra.mxu0 0.0
        %1845 = vmatprep.subr.mxu0 0.0
        %1846 = vmatpush1.msra.mxu0 0.0
        %1847 = vmatprep.subr.mxu0 0.0
        %1848 = vmatpush1.msra.mxu0 0.0
        %1849 = vmatprep.subr.mxu0 0.0
        %1850 = vmatpush1.msra.mxu0 0.0
        %1851 = vmatprep.subr.mxu0 0.0
        %1852 = vmatpush1.msra.mxu0 0.0
        %1853 = vmatprep.subr.mxu0 0.0
        %1854 = vmatpush1.msra.mxu0 0.0
        %1855 = vmatprep.subr.mxu0 0.0
        %1856 = vmatpush1.msra.mxu0 0.0
        %1857 = vmatprep.subr.mxu0 0.0
        %1858 = vmatpush1.msra.mxu0 0.0
        %1859 = vmatprep.subr.mxu0 0.0
        %1860 = vmatpush1.msra.mxu0 0.0
        %1861 = vmatprep.subr.mxu0 0.0
        %1862 = vmatpush1.msra.mxu0 0.0
        %1863 = vmatprep.mubr.f32.mxu0 0.0
        %1864 = vmatmul.mubr.f32.gmra.mrb[0].mxu0 %v1778
        %v1865 = vpop.f32.mrb[0].mxu0
        %v1866 = vadd.f32 0.0, %v1865
        %v1867 = vpop.f32.mrb[0].mxu0
        %1868 = vmatprep.mubr.f32.mxu0 0.0
        %1869 = vmatmul.mubr.f32.gmra.mrb[0].mxu0 %v1779
        %v1870 = vpop.f32.mrb[0].mxu0
        %v1871 = vadd.f32 0.0, %v1870
        %v1872 = vpop.f32.mrb[0].mxu0
        %1873 = vmatprep.mubr.f32.mxu0 0.0
        %1874 = vmatmul.mubr.f32.gmra.mrb[0].mxu0 %v1780
        %v1875 = vpop.f32.mrb[0].mxu0
        %v1876 = vadd.f32 0.0, %v1875
        %v1877 = vpop.f32.mrb[0].mxu0
        %1878 = vmatprep.mubr.f32.mxu0 0.0
        %1879 = vmatmul.mubr.f32.gmra.mrb[0].mxu0 %v1781
        %v1880 = vpop.f32.mrb[0].mxu0
        %v1881 = vadd.f32 0.0, %v1880
        %v1882 = vpop.f32.mrb[0].mxu0
        %1883 = vdwg.mxu0
        %v1884 = vadd.f32 %v1573, %v1866
        %v1885 = vadd.f32 %v1578, %v1871
        %v1886 = vadd.f32 %v1583, %v1876
        %v1887 = vadd.f32 %v1588, %v1881
        %s1888 = scalar_lea.vmem [#allocation7], 640
        %v1889 = vld [vmem:[%s1888] sm:$0xff]
        %v1890 = vld [vmem:[%s1888 + $0x8] sm:$0xff]
        %v1891 = vld [vmem:[%s1888 + $0x10] sm:$0xff]
        %v1892 = vld [vmem:[%s1888 + $0x18] sm:$0xff]
        %v1893 = vld [vmem:[%s1888 + $0x20] sm:$0xff]
        %v1894 = vld [vmem:[%s1888 + $0x28] sm:$0xff]
        %v1895 = vld [vmem:[%s1888 + $0x30] sm:$0xff]
        %v1896 = vld [vmem:[%s1888 + $0x38] sm:$0xff]
        %v1897 = vld [vmem:[%s1888 + $0x40] sm:$0xff]
        %v1898 = vld [vmem:[%s1888 + $0x48] sm:$0xff]
        %v1899 = vld [vmem:[%s1888 + $0x50] sm:$0xff]
        %v1900 = vld [vmem:[%s1888 + $0x58] sm:$0xff]
        %v1901 = vld [vmem:[%s1888 + $0x60] sm:$0xff]
        %v1902 = vld [vmem:[%s1888 + $0x68] sm:$0xff]
        %v1903 = vld [vmem:[%s1888 + $0x70] sm:$0xff]
        %v1904 = vld [vmem:[%s1888 + $0x78] sm:$0xff]
        %1905 = vmatprep.subr.mxu0 0.0
        %1906 = vmatpush1.msra.mxu0 %v1889
        %1907 = vmatprep.subr.mxu0 0.0
        %1908 = vmatpush1.msra.mxu0 %v1890
        %1909 = vmatprep.subr.mxu0 0.0
        %1910 = vmatpush1.msra.mxu0 %v1891
        %1911 = vmatprep.subr.mxu0 0.0
        %1912 = vmatpush1.msra.mxu0 %v1892
        %1913 = vmatprep.subr.mxu0 0.0
        %1914 = vmatpush1.msra.mxu0 %v1893
        %1915 = vmatprep.subr.mxu0 0.0
        %1916 = vmatpush1.msra.mxu0 %v1894
        %1917 = vmatprep.subr.mxu0 0.0
        %1918 = vmatpush1.msra.mxu0 %v1895
        %1919 = vmatprep.subr.mxu0 0.0
        %1920 = vmatpush1.msra.mxu0 %v1896
        %1921 = vmatprep.subr.mxu0 0.0
        %1922 = vmatpush1.msra.mxu0 %v1897
        %1923 = vmatprep.subr.mxu0 0.0
        %1924 = vmatpush1.msra.mxu0 %v1898
        %1925 = vmatprep.subr.mxu0 0.0
        %1926 = vmatpush1.msra.mxu0 %v1899
        %1927 = vmatprep.subr.mxu0 0.0
        %1928 = vmatpush1.msra.mxu0 %v1900
        %1929 = vmatprep.subr.mxu0 0.0
        %1930 = vmatpush1.msra.mxu0 %v1901
        %1931 = vmatprep.subr.mxu0 0.0
        %1932 = vmatpush1.msra.mxu0 %v1902
        %1933 = vmatprep.subr.mxu0 0.0
        %1934 = vmatpush1.msra.mxu0 %v1903
        %1935 = vmatprep.subr.mxu0 0.0
        %1936 = vmatpush1.msra.mxu0 %v1904
        %1937 = vmatprep.subr.mxu0 0.0
        %1938 = vmatpush1.msra.mxu0 0.0
        %1939 = vmatprep.subr.mxu0 0.0
        %1940 = vmatpush1.msra.mxu0 0.0
        %1941 = vmatprep.subr.mxu0 0.0
        %1942 = vmatpush1.msra.mxu0 0.0
        %1943 = vmatprep.subr.mxu0 0.0
        %1944 = vmatpush1.msra.mxu0 0.0
        %1945 = vmatprep.subr.mxu0 0.0
        %1946 = vmatpush1.msra.mxu0 0.0
        %1947 = vmatprep.subr.mxu0 0.0
        %1948 = vmatpush1.msra.mxu0 0.0
        %1949 = vmatprep.subr.mxu0 0.0
        %1950 = vmatpush1.msra.mxu0 0.0
        %1951 = vmatprep.subr.mxu0 0.0
        %1952 = vmatpush1.msra.mxu0 0.0
        %1953 = vmatprep.subr.mxu0 0.0
        %1954 = vmatpush1.msra.mxu0 0.0
        %1955 = vmatprep.subr.mxu0 0.0
        %1956 = vmatpush1.msra.mxu0 0.0
        %1957 = vmatprep.subr.mxu0 0.0
        %1958 = vmatpush1.msra.mxu0 0.0
        %1959 = vmatprep.subr.mxu0 0.0
        %1960 = vmatpush1.msra.mxu0 0.0
        %1961 = vmatprep.subr.mxu0 0.0
        %1962 = vmatpush1.msra.mxu0 0.0
        %1963 = vmatprep.subr.mxu0 0.0
        %1964 = vmatpush1.msra.mxu0 0.0
        %1965 = vmatprep.subr.mxu0 0.0
        %1966 = vmatpush1.msra.mxu0 0.0
        %1967 = vmatprep.subr.mxu0 0.0
        %1968 = vmatpush1.msra.mxu0 0.0
        %1969 = vmatprep.mubr.f32.mxu0 0.0
        %1970 = vmatmul.mubr.f32.gmra.mrb[0].mxu0 %v1778
        %v1971 = vpop.f32.mrb[0].mxu0
        %v1972 = vadd.f32 0.0, %v1971
        %v1973 = vpop.f32.mrb[0].mxu0
        %1974 = vmatprep.mubr.f32.mxu0 0.0
        %1975 = vmatmul.mubr.f32.gmra.mrb[0].mxu0 %v1779
        %v1976 = vpop.f32.mrb[0].mxu0
        %v1977 = vadd.f32 0.0, %v1976
        %v1978 = vpop.f32.mrb[0].mxu0
        %1979 = vmatprep.mubr.f32.mxu0 0.0
        %1980 = vmatmul.mubr.f32.gmra.mrb[0].mxu0 %v1780
        %v1981 = vpop.f32.mrb[0].mxu0
        %v1982 = vadd.f32 0.0, %v1981
        %v1983 = vpop.f32.mrb[0].mxu0
        %1984 = vmatprep.mubr.f32.mxu0 0.0
        %1985 = vmatmul.mubr.f32.gmra.mrb[0].mxu0 %v1781
        %v1986 = vpop.f32.mrb[0].mxu0
        %v1987 = vadd.f32 0.0, %v1986
        %v1988 = vpop.f32.mrb[0].mxu0
        %1989 = vdwg.mxu0
        %v1990 = vadd.f32 %v1760, %v1972
        %v1991 = vadd.f32 %v1765, %v1977
        %v1992 = vadd.f32 %v1770, %v1982
        %v1993 = vadd.f32 %v1775, %v1987
        %v1994 = vmax.f32 %v1884, %v1990
        %v1995 = vmax.f32 %v1885, %v1991
        %v1996 = vmax.f32 %v1886, %v1992
        %v1997 = vmax.f32 %v1887, %v1993
        %1998 = vst [vmem:[#allocation6] sm:$0xff] %v1994
        %1999 = vst [vmem:[#allocation6 + $0x8] sm:$0xff] %v1995
        %2000 = vst [vmem:[#allocation6 + $0x10] sm:$0xff] %v1996
        %2001 = vst [vmem:[#allocation6 + $0x18] sm:$0xff] %v1997
        %v2002 = vld [vmem:[#allocation6] ss:$2 sm:$0xff]
        %s2003 = scalar_lea.vmem [#allocation6], 16
        %v2004 = vld [vmem:[%s2003] ss:$2 sm:$0xff]
        %v2005 = vld [vmem:[%s1327] ss:$2 sm:$0xff]
        %v2006 = vld [vmem:[%s1329] ss:$2 sm:$0xff]
        %v2007 = vmax.f32 %v2002, %v2005
        %v2008 = vmax.f32 %v2004, %v2006
        %v2009 = vld [vmem:[%s4] sm:$0x1]
        %v2011 = vlaneseq
        %v2012 = vshrl.u32 %v2011, 7
        %v2013 = vsub.s32 0, %v2012
        %v2014 = vrot.slane %v2009, %v2013
        %v2016 = vadd.f32 %v2007, %v2014
        %v2017 = vadd.f32 %v2008, %v2014
        %v2018 = vmax.f32 %v2016, 0.0
        %v2019 = vmax.f32 %v2017, 0.0
        %2020 = vst [vmem:[#allocation4] sm:$0xff] 0.0
        %2021 = vst [vmem:[#allocation4 + $0x8] sm:$0xff] 0.0
        %2022 = vst [vmem:[#allocation4 + $0x10] sm:$0x3] 0.0
        %2023 = vst [vmem:[#allocation4 + $0x1] sm:$0xff] %v2018
        %2024 = vst [vmem:[#allocation4 + $0x9] sm:$0xff] %v2019
        %v2025 = vld [vmem:[#allocation4] sm:$0xff]
        %v2026 = vld [vmem:[#allocation4 + $0x8] sm:$0xff]
        %v2027 = vld [vmem:[#allocation10] sm:$0xff]
        %v2028 = vld [vmem:[#allocation10 + $0x8] sm:$0xff]
        %v2029 = vld [vmem:[#allocation10 + $0x10] sm:$0xff]
        %v2030 = vld [vmem:[#allocation10 + $0x18] sm:$0xff]
        %v2031 = vld [vmem:[#allocation10 + $0x20] sm:$0xff]
        %v2032 = vld [vmem:[#allocation10 + $0x28] sm:$0xff]
        %v2033 = vld [vmem:[#allocation10 + $0x30] sm:$0xff]
        %v2034 = vld [vmem:[#allocation10 + $0x38] sm:$0xff]
        %v2035 = vld [vmem:[#allocation10 + $0x40] sm:$0xff]
        %v2036 = vld [vmem:[#allocation10 + $0x48] sm:$0xff]
        %v2037 = vld [vmem:[#allocation10 + $0x50] sm:$0xff]
        %v2038 = vld [vmem:[#allocation10 + $0x58] sm:$0xff]
        %v2039 = vld [vmem:[#allocation10 + $0x60] sm:$0xff]
        %v2040 = vld [vmem:[#allocation10 + $0x68] sm:$0xff]
        %v2041 = vld [vmem:[#allocation10 + $0x70] sm:$0xff]
        %v2042 = vld [vmem:[#allocation10 + $0x78] sm:$0xff]
        %s2043 = scalar_lea.vmem [#allocation10], 384
        %v2044 = vld [vmem:[%s2043] sm:$0xff]
        %v2045 = vld [vmem:[%s2043 + $0x8] sm:$0xff]
        %v2046 = vld [vmem:[%s2043 + $0x10] sm:$0xff]
        %v2047 = vld [vmem:[%s2043 + $0x18] sm:$0xff]
        %v2048 = vld [vmem:[%s2043 + $0x20] sm:$0xff]
        %v2049 = vld [vmem:[%s2043 + $0x28] sm:$0xff]
        %v2050 = vld [vmem:[%s2043 + $0x30] sm:$0xff]
        %v2051 = vld [vmem:[%s2043 + $0x38] sm:$0xff]
        %v2052 = vld [vmem:[%s2043 + $0x40] sm:$0xff]
        %v2053 = vld [vmem:[%s2043 + $0x48] sm:$0xff]
        %v2054 = vld [vmem:[%s2043 + $0x50] sm:$0xff]
        %v2055 = vld [vmem:[%s2043 + $0x58] sm:$0xff]
        %v2056 = vld [vmem:[%s2043 + $0x60] sm:$0xff]
        %v2057 = vld [vmem:[%s2043 + $0x68] sm:$0xff]
        %v2058 = vld [vmem:[%s2043 + $0x70] sm:$0xff]
        %v2059 = vld [vmem:[%s2043 + $0x78] sm:$0xff]
        %v2060 = vld [vmem:[#allocation4 + $0x1] sm:$0xff]
        %v2061 = vld [vmem:[#allocation4 + $0x9] sm:$0xff]
        %s2062 = scalar_lea.vmem [#allocation10], 128
        %v2063 = vld [vmem:[%s2062] sm:$0xff]
        %v2064 = vld [vmem:[%s2062 + $0x8] sm:$0xff]
        %v2065 = vld [vmem:[%s2062 + $0x10] sm:$0xff]
        %v2066 = vld [vmem:[%s2062 + $0x18] sm:$0xff]
        %v2067 = vld [vmem:[%s2062 + $0x20] sm:$0xff]
        %v2068 = vld [vmem:[%s2062 + $0x28] sm:$0xff]
        %v2069 = vld [vmem:[%s2062 + $0x30] sm:$0xff]
        %v2070 = vld [vmem:[%s2062 + $0x38] sm:$0xff]
        %v2071 = vld [vmem:[%s2062 + $0x40] sm:$0xff]
        %v2072 = vld [vmem:[%s2062 + $0x48] sm:$0xff]
        %v2073 = vld [vmem:[%s2062 + $0x50] sm:$0xff]
        %v2074 = vld [vmem:[%s2062 + $0x58] sm:$0xff]
        %v2075 = vld [vmem:[%s2062 + $0x60] sm:$0xff]
        %v2076 = vld [vmem:[%s2062 + $0x68] sm:$0xff]
        %v2077 = vld [vmem:[%s2062 + $0x70] sm:$0xff]
        %v2078 = vld [vmem:[%s2062 + $0x78] sm:$0xff]
        %2079 = vmatprep.subr.mxu0 0.0
        %2080 = vmatpush1.msra.mxu0 %v2063
        %2081 = vmatprep.subr.mxu0 0.0
        %2082 = vmatpush1.msra.mxu0 %v2064
        %2083 = vmatprep.subr.mxu0 0.0
        %2084 = vmatpush1.msra.mxu0 %v2065
        %2085 = vmatprep.subr.mxu0 0.0
        %2086 = vmatpush1.msra.mxu0 %v2066
        %2087 = vmatprep.subr.mxu0 0.0
        %2088 = vmatpush1.msra.mxu0 %v2067
        %2089 = vmatprep.subr.mxu0 0.0
        %2090 = vmatpush1.msra.mxu0 %v2068
        %2091 = vmatprep.subr.mxu0 0.0
        %2092 = vmatpush1.msra.mxu0 %v2069
        %2093 = vmatprep.subr.mxu0 0.0
        %2094 = vmatpush1.msra.mxu0 %v2070
        %2095 = vmatprep.subr.mxu0 0.0
        %2096 = vmatpush1.msra.mxu0 %v2071
        %2097 = vmatprep.subr.mxu0 0.0
        %2098 = vmatpush1.msra.mxu0 %v2072
        %2099 = vmatprep.subr.mxu0 0.0
        %2100 = vmatpush1.msra.mxu0 %v2073
        %2101 = vmatprep.subr.mxu0 0.0
        %2102 = vmatpush1.msra.mxu0 %v2074
        %2103 = vmatprep.subr.mxu0 0.0
        %2104 = vmatpush1.msra.mxu0 %v2075
        %2105 = vmatprep.subr.mxu0 0.0
        %2106 = vmatpush1.msra.mxu0 %v2076
        %2107 = vmatprep.subr.mxu0 0.0
        %2108 = vmatpush1.msra.mxu0 %v2077
        %2109 = vmatprep.subr.mxu0 0.0
        %2110 = vmatpush1.msra.mxu0 %v2078
        %2111 = vmatprep.subr.mxu0 0.0
        %2112 = vmatpush1.msra.mxu0 0.0
        %2113 = vmatprep.subr.mxu0 0.0
        %2114 = vmatpush1.msra.mxu0 0.0
        %2115 = vmatprep.subr.mxu0 0.0
        %2116 = vmatpush1.msra.mxu0 0.0
        %2117 = vmatprep.subr.mxu0 0.0
        %2118 = vmatpush1.msra.mxu0 0.0
        %2119 = vmatprep.subr.mxu0 0.0
        %2120 = vmatpush1.msra.mxu0 0.0
        %2121 = vmatprep.subr.mxu0 0.0
        %2122 = vmatpush1.msra.mxu0 0.0
        %2123 = vmatprep.subr.mxu0 0.0
        %2124 = vmatpush1.msra.mxu0 0.0
        %2125 = vmatprep.subr.mxu0 0.0
        %2126 = vmatpush1.msra.mxu0 0.0
        %2127 = vmatprep.subr.mxu0 0.0
        %2128 = vmatpush1.msra.mxu0 0.0
        %2129 = vmatprep.subr.mxu0 0.0
        %2130 = vmatpush1.msra.mxu0 0.0
        %2131 = vmatprep.subr.mxu0 0.0
        %2132 = vmatpush1.msra.mxu0 0.0
        %2133 = vmatprep.subr.mxu0 0.0
        %2134 = vmatpush1.msra.mxu0 0.0
        %2135 = vmatprep.subr.mxu0 0.0
        %2136 = vmatpush1.msra.mxu0 0.0
        %2137 = vmatprep.subr.mxu0 0.0
        %2138 = vmatpush1.msra.mxu0 0.0
        %2139 = vmatprep.subr.mxu0 0.0
        %2140 = vmatpush1.msra.mxu0 0.0
        %2141 = vmatprep.subr.mxu0 0.0
        %2142 = vmatpush1.msra.mxu0 0.0
        %2143 = vmatprep.mubr.f32.mxu0 0.0
        %2144 = vmatmul.mubr.f32.gmra.mrb[0].mxu0 %v2060
        %v2145 = vpop.f32.mrb[0].mxu0
        %v2146 = vadd.f32 0.0, %v2145
        %v2147 = vpop.f32.mrb[0].mxu0
        %2148 = vmatprep.mubr.f32.mxu0 0.0
        %2149 = vmatmul.mubr.f32.gmra.mrb[0].mxu0 %v2061
        %v2150 = vpop.f32.mrb[0].mxu0
        %v2151 = vadd.f32 0.0, %v2150
        %v2152 = vpop.f32.mrb[0].mxu0
        %2153 = vdwg.mxu0
        %2154 = vmatprep.subr.mxu0 0.0
        %2155 = vmatpush1.msra.mxu0 %v2027
        %2156 = vmatprep.subr.mxu0 0.0
        %2157 = vmatpush1.msra.mxu0 %v2028
        %2158 = vmatprep.subr.mxu0 0.0
        %2159 = vmatpush1.msra.mxu0 %v2029
        %2160 = vmatprep.subr.mxu0 0.0
        %2161 = vmatpush1.msra.mxu0 %v2030
        %2162 = vmatprep.subr.mxu0 0.0
        %2163 = vmatpush1.msra.mxu0 %v2031
        %2164 = vmatprep.subr.mxu0 0.0
        %2165 = vmatpush1.msra.mxu0 %v2032
        %2166 = vmatprep.subr.mxu0 0.0
        %2167 = vmatpush1.msra.mxu0 %v2033
        %2168 = vmatprep.subr.mxu0 0.0
        %2169 = vmatpush1.msra.mxu0 %v2034
        %2170 = vmatprep.subr.mxu0 0.0
        %2171 = vmatpush1.msra.mxu0 %v2035
        %2172 = vmatprep.subr.mxu0 0.0
        %2173 = vmatpush1.msra.mxu0 %v2036
        %2174 = vmatprep.subr.mxu0 0.0
        %2175 = vmatpush1.msra.mxu0 %v2037
        %2176 = vmatprep.subr.mxu0 0.0
        %2177 = vmatpush1.msra.mxu0 %v2038
        %2178 = vmatprep.subr.mxu0 0.0
        %2179 = vmatpush1.msra.mxu0 %v2039
        %2180 = vmatprep.subr.mxu0 0.0
        %2181 = vmatpush1.msra.mxu0 %v2040
        %2182 = vmatprep.subr.mxu0 0.0
        %2183 = vmatpush1.msra.mxu0 %v2041
        %2184 = vmatprep.subr.mxu0 0.0
        %2185 = vmatpush1.msra.mxu0 %v2042
        %2186 = vmatprep.subr.mxu0 0.0
        %2187 = vmatpush1.msra.mxu0 0.0
        %2188 = vmatprep.subr.mxu0 0.0
        %2189 = vmatpush1.msra.mxu0 0.0
        %2190 = vmatprep.subr.mxu0 0.0
        %2191 = vmatpush1.msra.mxu0 0.0
        %2192 = vmatprep.subr.mxu0 0.0
        %2193 = vmatpush1.msra.mxu0 0.0
        %2194 = vmatprep.subr.mxu0 0.0
        %2195 = vmatpush1.msra.mxu0 0.0
        %2196 = vmatprep.subr.mxu0 0.0
        %2197 = vmatpush1.msra.mxu0 0.0
        %2198 = vmatprep.subr.mxu0 0.0
        %2199 = vmatpush1.msra.mxu0 0.0
        %2200 = vmatprep.subr.mxu0 0.0
        %2201 = vmatpush1.msra.mxu0 0.0
        %2202 = vmatprep.subr.mxu0 0.0
        %2203 = vmatpush1.msra.mxu0 0.0
        %2204 = vmatprep.subr.mxu0 0.0
        %2205 = vmatpush1.msra.mxu0 0.0
        %2206 = vmatprep.subr.mxu0 0.0
        %2207 = vmatpush1.msra.mxu0 0.0
        %2208 = vmatprep.subr.mxu0 0.0
        %2209 = vmatpush1.msra.mxu0 0.0
        %2210 = vmatprep.subr.mxu0 0.0
        %2211 = vmatpush1.msra.mxu0 0.0
        %2212 = vmatprep.subr.mxu0 0.0
        %2213 = vmatpush1.msra.mxu0 0.0
        %2214 = vmatprep.subr.mxu0 0.0
        %2215 = vmatpush1.msra.mxu0 0.0
        %2216 = vmatprep.subr.mxu0 0.0
        %2217 = vmatpush1.msra.mxu0 0.0
        %2218 = vmatprep.mubr.f32.mxu0 0.0
        %2219 = vmatmul.mubr.f32.gmra.mrb[0].mxu0 %v2025
        %v2220 = vpop.f32.mrb[0].mxu0
        %v2221 = vadd.f32 %v2146, %v2220
        %v2222 = vpop.f32.mrb[0].mxu0
        %2223 = vmatprep.mubr.f32.mxu0 0.0
        %2224 = vmatmul.mubr.f32.gmra.mrb[0].mxu0 %v2026
        %v2225 = vpop.f32.mrb[0].mxu0
        %v2226 = vadd.f32 %v2151, %v2225
        %v2227 = vpop.f32.mrb[0].mxu0
        %2228 = vdwg.mxu0
        %s2229 = scalar_lea.vmem [#allocation10], 512
        %v2230 = vld [vmem:[%s2229] sm:$0xff]
        %v2231 = vld [vmem:[%s2229 + $0x8] sm:$0xff]
        %v2232 = vld [vmem:[%s2229 + $0x10] sm:$0xff]
        %v2233 = vld [vmem:[%s2229 + $0x18] sm:$0xff]
        %v2234 = vld [vmem:[%s2229 + $0x20] sm:$0xff]
        %v2235 = vld [vmem:[%s2229 + $0x28] sm:$0xff]
        %v2236 = vld [vmem:[%s2229 + $0x30] sm:$0xff]
        %v2237 = vld [vmem:[%s2229 + $0x38] sm:$0xff]
        %v2238 = vld [vmem:[%s2229 + $0x40] sm:$0xff]
        %v2239 = vld [vmem:[%s2229 + $0x48] sm:$0xff]
        %v2240 = vld [vmem:[%s2229 + $0x50] sm:$0xff]
        %v2241 = vld [vmem:[%s2229 + $0x58] sm:$0xff]
        %v2242 = vld [vmem:[%s2229 + $0x60] sm:$0xff]
        %v2243 = vld [vmem:[%s2229 + $0x68] sm:$0xff]
        %v2244 = vld [vmem:[%s2229 + $0x70] sm:$0xff]
        %v2245 = vld [vmem:[%s2229 + $0x78] sm:$0xff]
        %2246 = vmatprep.subr.mxu0 0.0
        %2247 = vmatpush1.msra.mxu0 %v2230
        %2248 = vmatprep.subr.mxu0 0.0
        %2249 = vmatpush1.msra.mxu0 %v2231
        %2250 = vmatprep.subr.mxu0 0.0
        %2251 = vmatpush1.msra.mxu0 %v2232
        %2252 = vmatprep.subr.mxu0 0.0
        %2253 = vmatpush1.msra.mxu0 %v2233
        %2254 = vmatprep.subr.mxu0 0.0
        %2255 = vmatpush1.msra.mxu0 %v2234
        %2256 = vmatprep.subr.mxu0 0.0
        %2257 = vmatpush1.msra.mxu0 %v2235
        %2258 = vmatprep.subr.mxu0 0.0
        %2259 = vmatpush1.msra.mxu0 %v2236
        %2260 = vmatprep.subr.mxu0 0.0
        %2261 = vmatpush1.msra.mxu0 %v2237
        %2262 = vmatprep.subr.mxu0 0.0
        %2263 = vmatpush1.msra.mxu0 %v2238
        %2264 = vmatprep.subr.mxu0 0.0
        %2265 = vmatpush1.msra.mxu0 %v2239
        %2266 = vmatprep.subr.mxu0 0.0
        %2267 = vmatpush1.msra.mxu0 %v2240
        %2268 = vmatprep.subr.mxu0 0.0
        %2269 = vmatpush1.msra.mxu0 %v2241
        %2270 = vmatprep.subr.mxu0 0.0
        %2271 = vmatpush1.msra.mxu0 %v2242
        %2272 = vmatprep.subr.mxu0 0.0
        %2273 = vmatpush1.msra.mxu0 %v2243
        %2274 = vmatprep.subr.mxu0 0.0
        %2275 = vmatpush1.msra.mxu0 %v2244
        %2276 = vmatprep.subr.mxu0 0.0
        %2277 = vmatpush1.msra.mxu0 %v2245
        %2278 = vmatprep.subr.mxu0 0.0
        %2279 = vmatpush1.msra.mxu0 0.0
        %2280 = vmatprep.subr.mxu0 0.0
        %2281 = vmatpush1.msra.mxu0 0.0
        %2282 = vmatprep.subr.mxu0 0.0
        %2283 = vmatpush1.msra.mxu0 0.0
        %2284 = vmatprep.subr.mxu0 0.0
        %2285 = vmatpush1.msra.mxu0 0.0
        %2286 = vmatprep.subr.mxu0 0.0
        %2287 = vmatpush1.msra.mxu0 0.0
        %2288 = vmatprep.subr.mxu0 0.0
        %2289 = vmatpush1.msra.mxu0 0.0
        %2290 = vmatprep.subr.mxu0 0.0
        %2291 = vmatpush1.msra.mxu0 0.0
        %2292 = vmatprep.subr.mxu0 0.0
        %2293 = vmatpush1.msra.mxu0 0.0
        %2294 = vmatprep.subr.mxu0 0.0
        %2295 = vmatpush1.msra.mxu0 0.0
        %2296 = vmatprep.subr.mxu0 0.0
        %2297 = vmatpush1.msra.mxu0 0.0
        %2298 = vmatprep.subr.mxu0 0.0
        %2299 = vmatpush1.msra.mxu0 0.0
        %2300 = vmatprep.subr.mxu0 0.0
        %2301 = vmatpush1.msra.mxu0 0.0
        %2302 = vmatprep.subr.mxu0 0.0
        %2303 = vmatpush1.msra.mxu0 0.0
        %2304 = vmatprep.subr.mxu0 0.0
        %2305 = vmatpush1.msra.mxu0 0.0
        %2306 = vmatprep.subr.mxu0 0.0
        %2307 = vmatpush1.msra.mxu0 0.0
        %2308 = vmatprep.subr.mxu0 0.0
        %2309 = vmatpush1.msra.mxu0 0.0
        %2310 = vmatprep.mubr.f32.mxu0 0.0
        %2311 = vmatmul.mubr.f32.gmra.mrb[0].mxu0 %v2060
        %v2312 = vpop.f32.mrb[0].mxu0
        %v2313 = vadd.f32 0.0, %v2312
        %v2314 = vpop.f32.mrb[0].mxu0
        %2315 = vmatprep.mubr.f32.mxu0 0.0
        %2316 = vmatmul.mubr.f32.gmra.mrb[0].mxu0 %v2061
        %v2317 = vpop.f32.mrb[0].mxu0
        %v2318 = vadd.f32 0.0, %v2317
        %v2319 = vpop.f32.mrb[0].mxu0
        %2320 = vdwg.mxu0
        %2321 = vmatprep.subr.mxu0 0.0
        %2322 = vmatpush1.msra.mxu0 %v2044
        %2323 = vmatprep.subr.mxu0 0.0
        %2324 = vmatpush1.msra.mxu0 %v2045
        %2325 = vmatprep.subr.mxu0 0.0
        %2326 = vmatpush1.msra.mxu0 %v2046
        %2327 = vmatprep.subr.mxu0 0.0
        %2328 = vmatpush1.msra.mxu0 %v2047
        %2329 = vmatprep.subr.mxu0 0.0
        %2330 = vmatpush1.msra.mxu0 %v2048
        %2331 = vmatprep.subr.mxu0 0.0
        %2332 = vmatpush1.msra.mxu0 %v2049
        %2333 = vmatprep.subr.mxu0 0.0
        %2334 = vmatpush1.msra.mxu0 %v2050
        %2335 = vmatprep.subr.mxu0 0.0
        %2336 = vmatpush1.msra.mxu0 %v2051
        %2337 = vmatprep.subr.mxu0 0.0
        %2338 = vmatpush1.msra.mxu0 %v2052
        %2339 = vmatprep.subr.mxu0 0.0
        %2340 = vmatpush1.msra.mxu0 %v2053
        %2341 = vmatprep.subr.mxu0 0.0
        %2342 = vmatpush1.msra.mxu0 %v2054
        %2343 = vmatprep.subr.mxu0 0.0
        %2344 = vmatpush1.msra.mxu0 %v2055
        %2345 = vmatprep.subr.mxu0 0.0
        %2346 = vmatpush1.msra.mxu0 %v2056
        %2347 = vmatprep.subr.mxu0 0.0
        %2348 = vmatpush1.msra.mxu0 %v2057
        %2349 = vmatprep.subr.mxu0 0.0
        %2350 = vmatpush1.msra.mxu0 %v2058
        %2351 = vmatprep.subr.mxu0 0.0
        %2352 = vmatpush1.msra.mxu0 %v2059
        %2353 = vmatprep.subr.mxu0 0.0
        %2354 = vmatpush1.msra.mxu0 0.0
        %2355 = vmatprep.subr.mxu0 0.0
        %2356 = vmatpush1.msra.mxu0 0.0
        %2357 = vmatprep.subr.mxu0 0.0
        %2358 = vmatpush1.msra.mxu0 0.0
        %2359 = vmatprep.subr.mxu0 0.0
        %2360 = vmatpush1.msra.mxu0 0.0
        %2361 = vmatprep.subr.mxu0 0.0
        %2362 = vmatpush1.msra.mxu0 0.0
        %2363 = vmatprep.subr.mxu0 0.0
        %2364 = vmatpush1.msra.mxu0 0.0
        %2365 = vmatprep.subr.mxu0 0.0
        %2366 = vmatpush1.msra.mxu0 0.0
        %2367 = vmatprep.subr.mxu0 0.0
        %2368 = vmatpush1.msra.mxu0 0.0
        %2369 = vmatprep.subr.mxu0 0.0
        %2370 = vmatpush1.msra.mxu0 0.0
        %2371 = vmatprep.subr.mxu0 0.0
        %2372 = vmatpush1.msra.mxu0 0.0
        %2373 = vmatprep.subr.mxu0 0.0
        %2374 = vmatpush1.msra.mxu0 0.0
        %2375 = vmatprep.subr.mxu0 0.0
        %2376 = vmatpush1.msra.mxu0 0.0
        %2377 = vmatprep.subr.mxu0 0.0
        %2378 = vmatpush1.msra.mxu0 0.0
        %2379 = vmatprep.subr.mxu0 0.0
        %2380 = vmatpush1.msra.mxu0 0.0
        %2381 = vmatprep.subr.mxu0 0.0
        %2382 = vmatpush1.msra.mxu0 0.0
        %2383 = vmatprep.subr.mxu0 0.0
        %2384 = vmatpush1.msra.mxu0 0.0
        %2385 = vmatprep.mubr.f32.mxu0 0.0
        %2386 = vmatmul.mubr.f32.gmra.mrb[0].mxu0 %v2025
        %v2387 = vpop.f32.mrb[0].mxu0
        %v2388 = vadd.f32 %v2313, %v2387
        %v2389 = vpop.f32.mrb[0].mxu0
        %2390 = vmatprep.mubr.f32.mxu0 0.0
        %2391 = vmatmul.mubr.f32.gmra.mrb[0].mxu0 %v2026
        %v2392 = vpop.f32.mrb[0].mxu0
        %v2393 = vadd.f32 %v2318, %v2392
        %v2394 = vpop.f32.mrb[0].mxu0
        %2395 = vdwg.mxu0
        %v2396 = vld [vmem:[#allocation4 + $0x2] sm:$0xff]
        %v2397 = vld [vmem:[#allocation4 + $0xa] sm:$0xff]
        %s2398 = scalar_lea.vmem [#allocation10], 256
        %v2399 = vld [vmem:[%s2398] sm:$0xff]
        %v2400 = vld [vmem:[%s2398 + $0x8] sm:$0xff]
        %v2401 = vld [vmem:[%s2398 + $0x10] sm:$0xff]
        %v2402 = vld [vmem:[%s2398 + $0x18] sm:$0xff]
        %v2403 = vld [vmem:[%s2398 + $0x20] sm:$0xff]
        %v2404 = vld [vmem:[%s2398 + $0x28] sm:$0xff]
        %v2405 = vld [vmem:[%s2398 + $0x30] sm:$0xff]
        %v2406 = vld [vmem:[%s2398 + $0x38] sm:$0xff]
        %v2407 = vld [vmem:[%s2398 + $0x40] sm:$0xff]
        %v2408 = vld [vmem:[%s2398 + $0x48] sm:$0xff]
        %v2409 = vld [vmem:[%s2398 + $0x50] sm:$0xff]
        %v2410 = vld [vmem:[%s2398 + $0x58] sm:$0xff]
        %v2411 = vld [vmem:[%s2398 + $0x60] sm:$0xff]
        %v2412 = vld [vmem:[%s2398 + $0x68] sm:$0xff]
        %v2413 = vld [vmem:[%s2398 + $0x70] sm:$0xff]
        %v2414 = vld [vmem:[%s2398 + $0x78] sm:$0xff]
        %2415 = vmatprep.subr.mxu0 0.0
        %2416 = vmatpush1.msra.mxu0 %v2399
        %2417 = vmatprep.subr.mxu0 0.0
        %2418 = vmatpush1.msra.mxu0 %v2400
        %2419 = vmatprep.subr.mxu0 0.0
        %2420 = vmatpush1.msra.mxu0 %v2401
        %2421 = vmatprep.subr.mxu0 0.0
        %2422 = vmatpush1.msra.mxu0 %v2402
        %2423 = vmatprep.subr.mxu0 0.0
        %2424 = vmatpush1.msra.mxu0 %v2403
        %2425 = vmatprep.subr.mxu0 0.0
        %2426 = vmatpush1.msra.mxu0 %v2404
        %2427 = vmatprep.subr.mxu0 0.0
        %2428 = vmatpush1.msra.mxu0 %v2405
        %2429 = vmatprep.subr.mxu0 0.0
        %2430 = vmatpush1.msra.mxu0 %v2406
        %2431 = vmatprep.subr.mxu0 0.0
        %2432 = vmatpush1.msra.mxu0 %v2407
        %2433 = vmatprep.subr.mxu0 0.0
        %2434 = vmatpush1.msra.mxu0 %v2408
        %2435 = vmatprep.subr.mxu0 0.0
        %2436 = vmatpush1.msra.mxu0 %v2409
        %2437 = vmatprep.subr.mxu0 0.0
        %2438 = vmatpush1.msra.mxu0 %v2410
        %2439 = vmatprep.subr.mxu0 0.0
        %2440 = vmatpush1.msra.mxu0 %v2411
        %2441 = vmatprep.subr.mxu0 0.0
        %2442 = vmatpush1.msra.mxu0 %v2412
        %2443 = vmatprep.subr.mxu0 0.0
        %2444 = vmatpush1.msra.mxu0 %v2413
        %2445 = vmatprep.subr.mxu0 0.0
        %2446 = vmatpush1.msra.mxu0 %v2414
        %2447 = vmatprep.subr.mxu0 0.0
        %2448 = vmatpush1.msra.mxu0 0.0
        %2449 = vmatprep.subr.mxu0 0.0
        %2450 = vmatpush1.msra.mxu0 0.0
        %2451 = vmatprep.subr.mxu0 0.0
        %2452 = vmatpush1.msra.mxu0 0.0
        %2453 = vmatprep.subr.mxu0 0.0
        %2454 = vmatpush1.msra.mxu0 0.0
        %2455 = vmatprep.subr.mxu0 0.0
        %2456 = vmatpush1.msra.mxu0 0.0
        %2457 = vmatprep.subr.mxu0 0.0
        %2458 = vmatpush1.msra.mxu0 0.0
        %2459 = vmatprep.subr.mxu0 0.0
        %2460 = vmatpush1.msra.mxu0 0.0
        %2461 = vmatprep.subr.mxu0 0.0
        %2462 = vmatpush1.msra.mxu0 0.0
        %2463 = vmatprep.subr.mxu0 0.0
        %2464 = vmatpush1.msra.mxu0 0.0
        %2465 = vmatprep.subr.mxu0 0.0
        %2466 = vmatpush1.msra.mxu0 0.0
        %2467 = vmatprep.subr.mxu0 0.0
        %2468 = vmatpush1.msra.mxu0 0.0
        %2469 = vmatprep.subr.mxu0 0.0
        %2470 = vmatpush1.msra.mxu0 0.0
        %2471 = vmatprep.subr.mxu0 0.0
        %2472 = vmatpush1.msra.mxu0 0.0
        %2473 = vmatprep.subr.mxu0 0.0
        %2474 = vmatpush1.msra.mxu0 0.0
        %2475 = vmatprep.subr.mxu0 0.0
        %2476 = vmatpush1.msra.mxu0 0.0
        %2477 = vmatprep.subr.mxu0 0.0
        %2478 = vmatpush1.msra.mxu0 0.0
        %2479 = vmatprep.mubr.f32.mxu0 0.0
        %2480 = vmatmul.mubr.f32.gmra.mrb[0].mxu0 %v2396
        %v2481 = vpop.f32.mrb[0].mxu0
        %v2482 = vadd.f32 0.0, %v2481
        %v2483 = vpop.f32.mrb[0].mxu0
        %2484 = vmatprep.mubr.f32.mxu0 0.0
        %2485 = vmatmul.mubr.f32.gmra.mrb[0].mxu0 %v2397
        %v2486 = vpop.f32.mrb[0].mxu0
        %v2487 = vadd.f32 0.0, %v2486
        %v2488 = vpop.f32.mrb[0].mxu0
        %2489 = vdwg.mxu0
        %v2490 = vadd.f32 %v2221, %v2482
        %v2491 = vadd.f32 %v2226, %v2487
        %s2492 = scalar_lea.vmem [#allocation10], 640
        %v2493 = vld [vmem:[%s2492] sm:$0xff]
        %v2494 = vld [vmem:[%s2492 + $0x8] sm:$0xff]
        %v2495 = vld [vmem:[%s2492 + $0x10] sm:$0xff]
        %v2496 = vld [vmem:[%s2492 + $0x18] sm:$0xff]
        %v2497 = vld [vmem:[%s2492 + $0x20] sm:$0xff]
        %v2498 = vld [vmem:[%s2492 + $0x28] sm:$0xff]
        %v2499 = vld [vmem:[%s2492 + $0x30] sm:$0xff]
        %v2500 = vld [vmem:[%s2492 + $0x38] sm:$0xff]
        %v2501 = vld [vmem:[%s2492 + $0x40] sm:$0xff]
        %v2502 = vld [vmem:[%s2492 + $0x48] sm:$0xff]
        %v2503 = vld [vmem:[%s2492 + $0x50] sm:$0xff]
        %v2504 = vld [vmem:[%s2492 + $0x58] sm:$0xff]
        %v2505 = vld [vmem:[%s2492 + $0x60] sm:$0xff]
        %v2506 = vld [vmem:[%s2492 + $0x68] sm:$0xff]
        %v2507 = vld [vmem:[%s2492 + $0x70] sm:$0xff]
        %v2508 = vld [vmem:[%s2492 + $0x78] sm:$0xff]
        %2509 = vmatprep.subr.mxu0 0.0
        %2510 = vmatpush1.msra.mxu0 %v2493
        %2511 = vmatprep.subr.mxu0 0.0
        %2512 = vmatpush1.msra.mxu0 %v2494
        %2513 = vmatprep.subr.mxu0 0.0
        %2514 = vmatpush1.msra.mxu0 %v2495
        %2515 = vmatprep.subr.mxu0 0.0
        %2516 = vmatpush1.msra.mxu0 %v2496
        %2517 = vmatprep.subr.mxu0 0.0
        %2518 = vmatpush1.msra.mxu0 %v2497
        %2519 = vmatprep.subr.mxu0 0.0
        %2520 = vmatpush1.msra.mxu0 %v2498
        %2521 = vmatprep.subr.mxu0 0.0
        %2522 = vmatpush1.msra.mxu0 %v2499
        %2523 = vmatprep.subr.mxu0 0.0
        %2524 = vmatpush1.msra.mxu0 %v2500
        %2525 = vmatprep.subr.mxu0 0.0
        %2526 = vmatpush1.msra.mxu0 %v2501
        %2527 = vmatprep.subr.mxu0 0.0
        %2528 = vmatpush1.msra.mxu0 %v2502
        %2529 = vmatprep.subr.mxu0 0.0
        %2530 = vmatpush1.msra.mxu0 %v2503
        %2531 = vmatprep.subr.mxu0 0.0
        %2532 = vmatpush1.msra.mxu0 %v2504
        %2533 = vmatprep.subr.mxu0 0.0
        %2534 = vmatpush1.msra.mxu0 %v2505
        %2535 = vmatprep.subr.mxu0 0.0
        %2536 = vmatpush1.msra.mxu0 %v2506
        %2537 = vmatprep.subr.mxu0 0.0
        %2538 = vmatpush1.msra.mxu0 %v2507
        %2539 = vmatprep.subr.mxu0 0.0
        %2540 = vmatpush1.msra.mxu0 %v2508
        %2541 = vmatprep.subr.mxu0 0.0
        %2542 = vmatpush1.msra.mxu0 0.0
        %2543 = vmatprep.subr.mxu0 0.0
        %2544 = vmatpush1.msra.mxu0 0.0
        %2545 = vmatprep.subr.mxu0 0.0
        %2546 = vmatpush1.msra.mxu0 0.0
        %2547 = vmatprep.subr.mxu0 0.0
        %2548 = vmatpush1.msra.mxu0 0.0
        %2549 = vmatprep.subr.mxu0 0.0
        %2550 = vmatpush1.msra.mxu0 0.0
        %2551 = vmatprep.subr.mxu0 0.0
        %2552 = vmatpush1.msra.mxu0 0.0
        %2553 = vmatprep.subr.mxu0 0.0
        %2554 = vmatpush1.msra.mxu0 0.0
        %2555 = vmatprep.subr.mxu0 0.0
        %2556 = vmatpush1.msra.mxu0 0.0
        %2557 = vmatprep.subr.mxu0 0.0
        %2558 = vmatpush1.msra.mxu0 0.0
        %2559 = vmatprep.subr.mxu0 0.0
        %2560 = vmatpush1.msra.mxu0 0.0
        %2561 = vmatprep.subr.mxu0 0.0
        %2562 = vmatpush1.msra.mxu0 0.0
        %2563 = vmatprep.subr.mxu0 0.0
        %2564 = vmatpush1.msra.mxu0 0.0
        %2565 = vmatprep.subr.mxu0 0.0
        %2566 = vmatpush1.msra.mxu0 0.0
        %2567 = vmatprep.subr.mxu0 0.0
        %2568 = vmatpush1.msra.mxu0 0.0
        %2569 = vmatprep.subr.mxu0 0.0
        %2570 = vmatpush1.msra.mxu0 0.0
        %2571 = vmatprep.subr.mxu0 0.0
        %2572 = vmatpush1.msra.mxu0 0.0
        %2573 = vmatprep.mubr.f32.mxu0 0.0
        %2574 = vmatmul.mubr.f32.gmra.mrb[0].mxu0 %v2396
        %v2575 = vpop.f32.mrb[0].mxu0
        %v2576 = vadd.f32 0.0, %v2575
        %v2577 = vpop.f32.mrb[0].mxu0
        %2578 = vmatprep.mubr.f32.mxu0 0.0
        %2579 = vmatmul.mubr.f32.gmra.mrb[0].mxu0 %v2397
        %v2580 = vpop.f32.mrb[0].mxu0
        %v2581 = vadd.f32 0.0, %v2580
        %v2582 = vpop.f32.mrb[0].mxu0
        %2583 = vdwg.mxu0
        %v2584 = vadd.f32 %v2388, %v2576
        %v2585 = vadd.f32 %v2393, %v2581
        %v2586 = vmax.f32 %v2490, %v2584
        %v2587 = vmax.f32 %v2491, %v2585
        %2588 = vst [vmem:[#allocation6] sm:$0xff] %v2586
        %2589 = vst [vmem:[#allocation6 + $0x8] sm:$0xff] %v2587
        %v2590 = vld [vmem:[#allocation6] ss:$2 sm:$0xff]
        %v2591 = vld [vmem:[%s1327] ss:$2 sm:$0xff]
        %v2592 = vmax.f32 %v2590, %v2591
        %v2593 = vld [vmem:[%s6] sm:$0x1]
        %v2595 = vlaneseq
        %v2596 = vshrl.u32 %v2595, 7
        %v2597 = vsub.s32 0, %v2596
        %v2598 = vrot.slane %v2593, %v2597
        %v2600 = vadd.f32 %v2592, %v2598
        %v2601 = vmax.f32 %v2600, 0.0
        %2602 = vst [vmem:[#allocation5] sm:$0xff] 0.0
        %2603 = vst [vmem:[#allocation5 + $0x8] sm:$0x3] 0.0
        %2604 = vst [vmem:[#allocation5 + $0x1] sm:$0xff] %v2601
        %v2605 = vld [vmem:[#allocation5] sm:$0xff]
        %v2606 = vld [vmem:[#allocation12] sm:$0xff]
        %v2607 = vld [vmem:[#allocation12 + $0x8] sm:$0xff]
        %v2608 = vld [vmem:[#allocation12 + $0x10] sm:$0xff]
        %v2609 = vld [vmem:[#allocation12 + $0x18] sm:$0xff]
        %v2610 = vld [vmem:[#allocation12 + $0x20] sm:$0xff]
        %v2611 = vld [vmem:[#allocation12 + $0x28] sm:$0xff]
        %v2612 = vld [vmem:[#allocation12 + $0x30] sm:$0xff]
        %v2613 = vld [vmem:[#allocation12 + $0x38] sm:$0xff]
        %v2614 = vld [vmem:[#allocation12 + $0x40] sm:$0xff]
        %v2615 = vld [vmem:[#allocation12 + $0x48] sm:$0xff]
        %v2616 = vld [vmem:[#allocation12 + $0x50] sm:$0xff]
        %v2617 = vld [vmem:[#allocation12 + $0x58] sm:$0xff]
        %v2618 = vld [vmem:[#allocation12 + $0x60] sm:$0xff]
        %v2619 = vld [vmem:[#allocation12 + $0x68] sm:$0xff]
        %v2620 = vld [vmem:[#allocation12 + $0x70] sm:$0xff]
        %v2621 = vld [vmem:[#allocation12 + $0x78] sm:$0xff]
        %s2622 = scalar_lea.vmem [#allocation12], 384
        %v2623 = vld [vmem:[%s2622] sm:$0xff]
        %v2624 = vld [vmem:[%s2622 + $0x8] sm:$0xff]
        %v2625 = vld [vmem:[%s2622 + $0x10] sm:$0xff]
        %v2626 = vld [vmem:[%s2622 + $0x18] sm:$0xff]
        %v2627 = vld [vmem:[%s2622 + $0x20] sm:$0xff]
        %v2628 = vld [vmem:[%s2622 + $0x28] sm:$0xff]
        %v2629 = vld [vmem:[%s2622 + $0x30] sm:$0xff]
        %v2630 = vld [vmem:[%s2622 + $0x38] sm:$0xff]
        %v2631 = vld [vmem:[%s2622 + $0x40] sm:$0xff]
        %v2632 = vld [vmem:[%s2622 + $0x48] sm:$0xff]
        %v2633 = vld [vmem:[%s2622 + $0x50] sm:$0xff]
        %v2634 = vld [vmem:[%s2622 + $0x58] sm:$0xff]
        %v2635 = vld [vmem:[%s2622 + $0x60] sm:$0xff]
        %v2636 = vld [vmem:[%s2622 + $0x68] sm:$0xff]
        %v2637 = vld [vmem:[%s2622 + $0x70] sm:$0xff]
        %v2638 = vld [vmem:[%s2622 + $0x78] sm:$0xff]
        %v2639 = vld [vmem:[#allocation5 + $0x1] sm:$0xff]
        %s2640 = scalar_lea.vmem [#allocation12], 128
        %v2641 = vld [vmem:[%s2640] sm:$0xff]
        %v2642 = vld [vmem:[%s2640 + $0x8] sm:$0xff]
        %v2643 = vld [vmem:[%s2640 + $0x10] sm:$0xff]
        %v2644 = vld [vmem:[%s2640 + $0x18] sm:$0xff]
        %v2645 = vld [vmem:[%s2640 + $0x20] sm:$0xff]
        %v2646 = vld [vmem:[%s2640 + $0x28] sm:$0xff]
        %v2647 = vld [vmem:[%s2640 + $0x30] sm:$0xff]
        %v2648 = vld [vmem:[%s2640 + $0x38] sm:$0xff]
        %v2649 = vld [vmem:[%s2640 + $0x40] sm:$0xff]
        %v2650 = vld [vmem:[%s2640 + $0x48] sm:$0xff]
        %v2651 = vld [vmem:[%s2640 + $0x50] sm:$0xff]
        %v2652 = vld [vmem:[%s2640 + $0x58] sm:$0xff]
        %v2653 = vld [vmem:[%s2640 + $0x60] sm:$0xff]
        %v2654 = vld [vmem:[%s2640 + $0x68] sm:$0xff]
        %v2655 = vld [vmem:[%s2640 + $0x70] sm:$0xff]
        %v2656 = vld [vmem:[%s2640 + $0x78] sm:$0xff]
        %2657 = vmatprep.subr.mxu0 0.0
        %2658 = vmatpush1.msra.mxu0 %v2641
        %2659 = vmatprep.subr.mxu0 0.0
        %2660 = vmatpush1.msra.mxu0 %v2642
        %2661 = vmatprep.subr.mxu0 0.0
        %2662 = vmatpush1.msra.mxu0 %v2643
        %2663 = vmatprep.subr.mxu0 0.0
        %2664 = vmatpush1.msra.mxu0 %v2644
        %2665 = vmatprep.subr.mxu0 0.0
        %2666 = vmatpush1.msra.mxu0 %v2645
        %2667 = vmatprep.subr.mxu0 0.0
        %2668 = vmatpush1.msra.mxu0 %v2646
        %2669 = vmatprep.subr.mxu0 0.0
        %2670 = vmatpush1.msra.mxu0 %v2647
        %2671 = vmatprep.subr.mxu0 0.0
        %2672 = vmatpush1.msra.mxu0 %v2648
        %2673 = vmatprep.subr.mxu0 0.0
        %2674 = vmatpush1.msra.mxu0 %v2649
        %2675 = vmatprep.subr.mxu0 0.0
        %2676 = vmatpush1.msra.mxu0 %v2650
        %2677 = vmatprep.subr.mxu0 0.0
        %2678 = vmatpush1.msra.mxu0 %v2651
        %2679 = vmatprep.subr.mxu0 0.0
        %2680 = vmatpush1.msra.mxu0 %v2652
        %2681 = vmatprep.subr.mxu0 0.0
        %2682 = vmatpush1.msra.mxu0 %v2653
        %2683 = vmatprep.subr.mxu0 0.0
        %2684 = vmatpush1.msra.mxu0 %v2654
        %2685 = vmatprep.subr.mxu0 0.0
        %2686 = vmatpush1.msra.mxu0 %v2655
        %2687 = vmatprep.subr.mxu0 0.0
        %2688 = vmatpush1.msra.mxu0 %v2656
        %2689 = vmatprep.subr.mxu0 0.0
        %2690 = vmatpush1.msra.mxu0 0.0
        %2691 = vmatprep.subr.mxu0 0.0
        %2692 = vmatpush1.msra.mxu0 0.0
        %2693 = vmatprep.subr.mxu0 0.0
        %2694 = vmatpush1.msra.mxu0 0.0
        %2695 = vmatprep.subr.mxu0 0.0
        %2696 = vmatpush1.msra.mxu0 0.0
        %2697 = vmatprep.subr.mxu0 0.0
        %2698 = vmatpush1.msra.mxu0 0.0
        %2699 = vmatprep.subr.mxu0 0.0
        %2700 = vmatpush1.msra.mxu0 0.0
        %2701 = vmatprep.subr.mxu0 0.0
        %2702 = vmatpush1.msra.mxu0 0.0
        %2703 = vmatprep.subr.mxu0 0.0
        %2704 = vmatpush1.msra.mxu0 0.0
        %2705 = vmatprep.subr.mxu0 0.0
        %2706 = vmatpush1.msra.mxu0 0.0
        %2707 = vmatprep.subr.mxu0 0.0
        %2708 = vmatpush1.msra.mxu0 0.0
        %2709 = vmatprep.subr.mxu0 0.0
        %2710 = vmatpush1.msra.mxu0 0.0
        %2711 = vmatprep.subr.mxu0 0.0
        %2712 = vmatpush1.msra.mxu0 0.0
        %2713 = vmatprep.subr.mxu0 0.0
        %2714 = vmatpush1.msra.mxu0 0.0
        %2715 = vmatprep.subr.mxu0 0.0
        %2716 = vmatpush1.msra.mxu0 0.0
        %2717 = vmatprep.subr.mxu0 0.0
        %2718 = vmatpush1.msra.mxu0 0.0
        %2719 = vmatprep.subr.mxu0 0.0
        %2720 = vmatpush1.msra.mxu0 0.0
        %2721 = vmatprep.mubr.f32.mxu0 0.0
        %2722 = vmatmul.mubr.f32.gmra.mrb[0].mxu0 %v2639
        %v2723 = vpop.f32.mrb[0].mxu0
        %v2724 = vadd.f32 0.0, %v2723
        %v2725 = vpop.f32.mrb[0].mxu0
        %2726 = vdwg.mxu0
        %2727 = vmatprep.subr.mxu0 0.0
        %2728 = vmatpush1.msra.mxu0 %v2606
        %2729 = vmatprep.subr.mxu0 0.0
        %2730 = vmatpush1.msra.mxu0 %v2607
        %2731 = vmatprep.subr.mxu0 0.0
        %2732 = vmatpush1.msra.mxu0 %v2608
        %2733 = vmatprep.subr.mxu0 0.0
        %2734 = vmatpush1.msra.mxu0 %v2609
        %2735 = vmatprep.subr.mxu0 0.0
        %2736 = vmatpush1.msra.mxu0 %v2610
        %2737 = vmatprep.subr.mxu0 0.0
        %2738 = vmatpush1.msra.mxu0 %v2611
        %2739 = vmatprep.subr.mxu0 0.0
        %2740 = vmatpush1.msra.mxu0 %v2612
        %2741 = vmatprep.subr.mxu0 0.0
        %2742 = vmatpush1.msra.mxu0 %v2613
        %2743 = vmatprep.subr.mxu0 0.0
        %2744 = vmatpush1.msra.mxu0 %v2614
        %2745 = vmatprep.subr.mxu0 0.0
        %2746 = vmatpush1.msra.mxu0 %v2615
        %2747 = vmatprep.subr.mxu0 0.0
        %2748 = vmatpush1.msra.mxu0 %v2616
        %2749 = vmatprep.subr.mxu0 0.0
        %2750 = vmatpush1.msra.mxu0 %v2617
        %2751 = vmatprep.subr.mxu0 0.0
        %2752 = vmatpush1.msra.mxu0 %v2618
        %2753 = vmatprep.subr.mxu0 0.0
        %2754 = vmatpush1.msra.mxu0 %v2619
        %2755 = vmatprep.subr.mxu0 0.0
        %2756 = vmatpush1.msra.mxu0 %v2620
        %2757 = vmatprep.subr.mxu0 0.0
        %2758 = vmatpush1.msra.mxu0 %v2621
        %2759 = vmatprep.subr.mxu0 0.0
        %2760 = vmatpush1.msra.mxu0 0.0
        %2761 = vmatprep.subr.mxu0 0.0
        %2762 = vmatpush1.msra.mxu0 0.0
        %2763 = vmatprep.subr.mxu0 0.0
        %2764 = vmatpush1.msra.mxu0 0.0
        %2765 = vmatprep.subr.mxu0 0.0
        %2766 = vmatpush1.msra.mxu0 0.0
        %2767 = vmatprep.subr.mxu0 0.0
        %2768 = vmatpush1.msra.mxu0 0.0
        %2769 = vmatprep.subr.mxu0 0.0
        %2770 = vmatpush1.msra.mxu0 0.0
        %2771 = vmatprep.subr.mxu0 0.0
        %2772 = vmatpush1.msra.mxu0 0.0
        %2773 = vmatprep.subr.mxu0 0.0
        %2774 = vmatpush1.msra.mxu0 0.0
        %2775 = vmatprep.subr.mxu0 0.0
        %2776 = vmatpush1.msra.mxu0 0.0
        %2777 = vmatprep.subr.mxu0 0.0
        %2778 = vmatpush1.msra.mxu0 0.0
        %2779 = vmatprep.subr.mxu0 0.0
        %2780 = vmatpush1.msra.mxu0 0.0
        %2781 = vmatprep.subr.mxu0 0.0
        %2782 = vmatpush1.msra.mxu0 0.0
        %2783 = vmatprep.subr.mxu0 0.0
        %2784 = vmatpush1.msra.mxu0 0.0
        %2785 = vmatprep.subr.mxu0 0.0
        %2786 = vmatpush1.msra.mxu0 0.0
        %2787 = vmatprep.subr.mxu0 0.0
        %2788 = vmatpush1.msra.mxu0 0.0
        %2789 = vmatprep.subr.mxu0 0.0
        %2790 = vmatpush1.msra.mxu0 0.0
        %2791 = vmatprep.mubr.f32.mxu0 0.0
        %2792 = vmatmul.mubr.f32.gmra.mrb[0].mxu0 %v2605
        %v2793 = vpop.f32.mrb[0].mxu0
        %v2794 = vadd.f32 %v2724, %v2793
        %v2795 = vpop.f32.mrb[0].mxu0
        %2796 = vdwg.mxu0
        %s2797 = scalar_lea.vmem [#allocation12], 512
        %v2798 = vld [vmem:[%s2797] sm:$0xff]
        %v2799 = vld [vmem:[%s2797 + $0x8] sm:$0xff]
        %v2800 = vld [vmem:[%s2797 + $0x10] sm:$0xff]
        %v2801 = vld [vmem:[%s2797 + $0x18] sm:$0xff]
        %v2802 = vld [vmem:[%s2797 + $0x20] sm:$0xff]
        %v2803 = vld [vmem:[%s2797 + $0x28] sm:$0xff]
        %v2804 = vld [vmem:[%s2797 + $0x30] sm:$0xff]
        %v2805 = vld [vmem:[%s2797 + $0x38] sm:$0xff]
        %v2806 = vld [vmem:[%s2797 + $0x40] sm:$0xff]
        %v2807 = vld [vmem:[%s2797 + $0x48] sm:$0xff]
        %v2808 = vld [vmem:[%s2797 + $0x50] sm:$0xff]
        %v2809 = vld [vmem:[%s2797 + $0x58] sm:$0xff]
        %v2810 = vld [vmem:[%s2797 + $0x60] sm:$0xff]
        %v2811 = vld [vmem:[%s2797 + $0x68] sm:$0xff]
        %v2812 = vld [vmem:[%s2797 + $0x70] sm:$0xff]
        %v2813 = vld [vmem:[%s2797 + $0x78] sm:$0xff]
        %2814 = vmatprep.subr.mxu0 0.0
        %2815 = vmatpush1.msra.mxu0 %v2798
        %2816 = vmatprep.subr.mxu0 0.0
        %2817 = vmatpush1.msra.mxu0 %v2799
        %2818 = vmatprep.subr.mxu0 0.0
        %2819 = vmatpush1.msra.mxu0 %v2800
        %2820 = vmatprep.subr.mxu0 0.0
        %2821 = vmatpush1.msra.mxu0 %v2801
        %2822 = vmatprep.subr.mxu0 0.0
        %2823 = vmatpush1.msra.mxu0 %v2802
        %2824 = vmatprep.subr.mxu0 0.0
        %2825 = vmatpush1.msra.mxu0 %v2803
        %2826 = vmatprep.subr.mxu0 0.0
        %2827 = vmatpush1.msra.mxu0 %v2804
        %2828 = vmatprep.subr.mxu0 0.0
        %2829 = vmatpush1.msra.mxu0 %v2805
        %2830 = vmatprep.subr.mxu0 0.0
        %2831 = vmatpush1.msra.mxu0 %v2806
        %2832 = vmatprep.subr.mxu0 0.0
        %2833 = vmatpush1.msra.mxu0 %v2807
        %2834 = vmatprep.subr.mxu0 0.0
        %2835 = vmatpush1.msra.mxu0 %v2808
        %2836 = vmatprep.subr.mxu0 0.0
        %2837 = vmatpush1.msra.mxu0 %v2809
        %2838 = vmatprep.subr.mxu0 0.0
        %2839 = vmatpush1.msra.mxu0 %v2810
        %2840 = vmatprep.subr.mxu0 0.0
        %2841 = vmatpush1.msra.mxu0 %v2811
        %2842 = vmatprep.subr.mxu0 0.0
        %2843 = vmatpush1.msra.mxu0 %v2812
        %2844 = vmatprep.subr.mxu0 0.0
        %2845 = vmatpush1.msra.mxu0 %v2813
        %2846 = vmatprep.subr.mxu0 0.0
        %2847 = vmatpush1.msra.mxu0 0.0
        %2848 = vmatprep.subr.mxu0 0.0
        %2849 = vmatpush1.msra.mxu0 0.0
        %2850 = vmatprep.subr.mxu0 0.0
        %2851 = vmatpush1.msra.mxu0 0.0
        %2852 = vmatprep.subr.mxu0 0.0
        %2853 = vmatpush1.msra.mxu0 0.0
        %2854 = vmatprep.subr.mxu0 0.0
        %2855 = vmatpush1.msra.mxu0 0.0
        %2856 = vmatprep.subr.mxu0 0.0
        %2857 = vmatpush1.msra.mxu0 0.0
        %2858 = vmatprep.subr.mxu0 0.0
        %2859 = vmatpush1.msra.mxu0 0.0
        %2860 = vmatprep.subr.mxu0 0.0
        %2861 = vmatpush1.msra.mxu0 0.0
        %2862 = vmatprep.subr.mxu0 0.0
        %2863 = vmatpush1.msra.mxu0 0.0
        %2864 = vmatprep.subr.mxu0 0.0
        %2865 = vmatpush1.msra.mxu0 0.0
        %2866 = vmatprep.subr.mxu0 0.0
        %2867 = vmatpush1.msra.mxu0 0.0
        %2868 = vmatprep.subr.mxu0 0.0
        %2869 = vmatpush1.msra.mxu0 0.0
        %2870 = vmatprep.subr.mxu0 0.0
        %2871 = vmatpush1.msra.mxu0 0.0
        %2872 = vmatprep.subr.mxu0 0.0
        %2873 = vmatpush1.msra.mxu0 0.0
        %2874 = vmatprep.subr.mxu0 0.0
        %2875 = vmatpush1.msra.mxu0 0.0
        %2876 = vmatprep.subr.mxu0 0.0
        %2877 = vmatpush1.msra.mxu0 0.0
        %2878 = vmatprep.mubr.f32.mxu0 0.0
        %2879 = vmatmul.mubr.f32.gmra.mrb[0].mxu0 %v2639
        %v2880 = vpop.f32.mrb[0].mxu0
        %v2881 = vadd.f32 0.0, %v2880
        %v2882 = vpop.f32.mrb[0].mxu0
        %2883 = vdwg.mxu0
        %2884 = vmatprep.subr.mxu0 0.0
        %2885 = vmatpush1.msra.mxu0 %v2623
        %2886 = vmatprep.subr.mxu0 0.0
        %2887 = vmatpush1.msra.mxu0 %v2624
        %2888 = vmatprep.subr.mxu0 0.0
        %2889 = vmatpush1.msra.mxu0 %v2625
        %2890 = vmatprep.subr.mxu0 0.0
        %2891 = vmatpush1.msra.mxu0 %v2626
        %2892 = vmatprep.subr.mxu0 0.0
        %2893 = vmatpush1.msra.mxu0 %v2627
        %2894 = vmatprep.subr.mxu0 0.0
        %2895 = vmatpush1.msra.mxu0 %v2628
        %2896 = vmatprep.subr.mxu0 0.0
        %2897 = vmatpush1.msra.mxu0 %v2629
        %2898 = vmatprep.subr.mxu0 0.0
        %2899 = vmatpush1.msra.mxu0 %v2630
        %2900 = vmatprep.subr.mxu0 0.0
        %2901 = vmatpush1.msra.mxu0 %v2631
        %2902 = vmatprep.subr.mxu0 0.0
        %2903 = vmatpush1.msra.mxu0 %v2632
        %2904 = vmatprep.subr.mxu0 0.0
        %2905 = vmatpush1.msra.mxu0 %v2633
        %2906 = vmatprep.subr.mxu0 0.0
        %2907 = vmatpush1.msra.mxu0 %v2634
        %2908 = vmatprep.subr.mxu0 0.0
        %2909 = vmatpush1.msra.mxu0 %v2635
        %2910 = vmatprep.subr.mxu0 0.0
        %2911 = vmatpush1.msra.mxu0 %v2636
        %2912 = vmatprep.subr.mxu0 0.0
        %2913 = vmatpush1.msra.mxu0 %v2637
        %2914 = vmatprep.subr.mxu0 0.0
        %2915 = vmatpush1.msra.mxu0 %v2638
        %2916 = vmatprep.subr.mxu0 0.0
        %2917 = vmatpush1.msra.mxu0 0.0
        %2918 = vmatprep.subr.mxu0 0.0
        %2919 = vmatpush1.msra.mxu0 0.0
        %2920 = vmatprep.subr.mxu0 0.0
        %2921 = vmatpush1.msra.mxu0 0.0
        %2922 = vmatprep.subr.mxu0 0.0
        %2923 = vmatpush1.msra.mxu0 0.0
        %2924 = vmatprep.subr.mxu0 0.0
        %2925 = vmatpush1.msra.mxu0 0.0
        %2926 = vmatprep.subr.mxu0 0.0
        %2927 = vmatpush1.msra.mxu0 0.0
        %2928 = vmatprep.subr.mxu0 0.0
        %2929 = vmatpush1.msra.mxu0 0.0
        %2930 = vmatprep.subr.mxu0 0.0
        %2931 = vmatpush1.msra.mxu0 0.0
        %2932 = vmatprep.subr.mxu0 0.0
        %2933 = vmatpush1.msra.mxu0 0.0
        %2934 = vmatprep.subr.mxu0 0.0
        %2935 = vmatpush1.msra.mxu0 0.0
        %2936 = vmatprep.subr.mxu0 0.0
        %2937 = vmatpush1.msra.mxu0 0.0
        %2938 = vmatprep.subr.mxu0 0.0
        %2939 = vmatpush1.msra.mxu0 0.0
        %2940 = vmatprep.subr.mxu0 0.0
        %2941 = vmatpush1.msra.mxu0 0.0
        %2942 = vmatprep.subr.mxu0 0.0
        %2943 = vmatpush1.msra.mxu0 0.0
        %2944 = vmatprep.subr.mxu0 0.0
        %2945 = vmatpush1.msra.mxu0 0.0
        %2946 = vmatprep.subr.mxu0 0.0
        %2947 = vmatpush1.msra.mxu0 0.0
        %2948 = vmatprep.mubr.f32.mxu0 0.0
        %2949 = vmatmul.mubr.f32.gmra.mrb[0].mxu0 %v2605
        %v2950 = vpop.f32.mrb[0].mxu0
        %v2951 = vadd.f32 %v2881, %v2950
        %v2952 = vpop.f32.mrb[0].mxu0
        %2953 = vdwg.mxu0
        %v2954 = vld [vmem:[#allocation5 + $0x2] sm:$0xff]
        %s2955 = scalar_lea.vmem [#allocation12], 256
        %v2956 = vld [vmem:[%s2955] sm:$0xff]
        %v2957 = vld [vmem:[%s2955 + $0x8] sm:$0xff]
        %v2958 = vld [vmem:[%s2955 + $0x10] sm:$0xff]
        %v2959 = vld [vmem:[%s2955 + $0x18] sm:$0xff]
        %v2960 = vld [vmem:[%s2955 + $0x20] sm:$0xff]
        %v2961 = vld [vmem:[%s2955 + $0x28] sm:$0xff]
        %v2962 = vld [vmem:[%s2955 + $0x30] sm:$0xff]
        %v2963 = vld [vmem:[%s2955 + $0x38] sm:$0xff]
        %v2964 = vld [vmem:[%s2955 + $0x40] sm:$0xff]
        %v2965 = vld [vmem:[%s2955 + $0x48] sm:$0xff]
        %v2966 = vld [vmem:[%s2955 + $0x50] sm:$0xff]
        %v2967 = vld [vmem:[%s2955 + $0x58] sm:$0xff]
        %v2968 = vld [vmem:[%s2955 + $0x60] sm:$0xff]
        %v2969 = vld [vmem:[%s2955 + $0x68] sm:$0xff]
        %v2970 = vld [vmem:[%s2955 + $0x70] sm:$0xff]
        %v2971 = vld [vmem:[%s2955 + $0x78] sm:$0xff]
        %2972 = vmatprep.subr.mxu0 0.0
        %2973 = vmatpush1.msra.mxu0 %v2956
        %2974 = vmatprep.subr.mxu0 0.0
        %2975 = vmatpush1.msra.mxu0 %v2957
        %2976 = vmatprep.subr.mxu0 0.0
        %2977 = vmatpush1.msra.mxu0 %v2958
        %2978 = vmatprep.subr.mxu0 0.0
        %2979 = vmatpush1.msra.mxu0 %v2959
        %2980 = vmatprep.subr.mxu0 0.0
        %2981 = vmatpush1.msra.mxu0 %v2960
        %2982 = vmatprep.subr.mxu0 0.0
        %2983 = vmatpush1.msra.mxu0 %v2961
        %2984 = vmatprep.subr.mxu0 0.0
        %2985 = vmatpush1.msra.mxu0 %v2962
        %2986 = vmatprep.subr.mxu0 0.0
        %2987 = vmatpush1.msra.mxu0 %v2963
        %2988 = vmatprep.subr.mxu0 0.0
        %2989 = vmatpush1.msra.mxu0 %v2964
        %2990 = vmatprep.subr.mxu0 0.0
        %2991 = vmatpush1.msra.mxu0 %v2965
        %2992 = vmatprep.subr.mxu0 0.0
        %2993 = vmatpush1.msra.mxu0 %v2966
        %2994 = vmatprep.subr.mxu0 0.0
        %2995 = vmatpush1.msra.mxu0 %v2967
        %2996 = vmatprep.subr.mxu0 0.0
        %2997 = vmatpush1.msra.mxu0 %v2968
        %2998 = vmatprep.subr.mxu0 0.0
        %2999 = vmatpush1.msra.mxu0 %v2969
        %3000 = vmatprep.subr.mxu0 0.0
        %3001 = vmatpush1.msra.mxu0 %v2970
        %3002 = vmatprep.subr.mxu0 0.0
        %3003 = vmatpush1.msra.mxu0 %v2971
        %3004 = vmatprep.subr.mxu0 0.0
        %3005 = vmatpush1.msra.mxu0 0.0
        %3006 = vmatprep.subr.mxu0 0.0
        %3007 = vmatpush1.msra.mxu0 0.0
        %3008 = vmatprep.subr.mxu0 0.0
        %3009 = vmatpush1.msra.mxu0 0.0
        %3010 = vmatprep.subr.mxu0 0.0
        %3011 = vmatpush1.msra.mxu0 0.0
        %3012 = vmatprep.subr.mxu0 0.0
        %3013 = vmatpush1.msra.mxu0 0.0
        %3014 = vmatprep.subr.mxu0 0.0
        %3015 = vmatpush1.msra.mxu0 0.0
        %3016 = vmatprep.subr.mxu0 0.0
        %3017 = vmatpush1.msra.mxu0 0.0
        %3018 = vmatprep.subr.mxu0 0.0
        %3019 = vmatpush1.msra.mxu0 0.0
        %3020 = vmatprep.subr.mxu0 0.0
        %3021 = vmatpush1.msra.mxu0 0.0
        %3022 = vmatprep.subr.mxu0 0.0
        %3023 = vmatpush1.msra.mxu0 0.0
        %3024 = vmatprep.subr.mxu0 0.0
        %3025 = vmatpush1.msra.mxu0 0.0
        %3026 = vmatprep.subr.mxu0 0.0
        %3027 = vmatpush1.msra.mxu0 0.0
        %3028 = vmatprep.subr.mxu0 0.0
        %3029 = vmatpush1.msra.mxu0 0.0
        %3030 = vmatprep.subr.mxu0 0.0
        %3031 = vmatpush1.msra.mxu0 0.0
        %3032 = vmatprep.subr.mxu0 0.0
        %3033 = vmatpush1.msra.mxu0 0.0
        %3034 = vmatprep.subr.mxu0 0.0
        %3035 = vmatpush1.msra.mxu0 0.0
        %3036 = vmatprep.mubr.f32.mxu0 0.0
        %3037 = vmatmul.mubr.f32.gmra.mrb[0].mxu0 %v2954
        %v3038 = vpop.f32.mrb[0].mxu0
        %v3039 = vadd.f32 0.0, %v3038
        %v3040 = vpop.f32.mrb[0].mxu0
        %3041 = vdwg.mxu0
        %v3042 = vadd.f32 %v2794, %v3039
        %s3043 = scalar_lea.vmem [#allocation12], 640
        %v3044 = vld [vmem:[%s3043] sm:$0xff]
        %v3045 = vld [vmem:[%s3043 + $0x8] sm:$0xff]
        %v3046 = vld [vmem:[%s3043 + $0x10] sm:$0xff]
        %v3047 = vld [vmem:[%s3043 + $0x18] sm:$0xff]
        %v3048 = vld [vmem:[%s3043 + $0x20] sm:$0xff]
        %v3049 = vld [vmem:[%s3043 + $0x28] sm:$0xff]
        %v3050 = vld [vmem:[%s3043 + $0x30] sm:$0xff]
        %v3051 = vld [vmem:[%s3043 + $0x38] sm:$0xff]
        %v3052 = vld [vmem:[%s3043 + $0x40] sm:$0xff]
        %v3053 = vld [vmem:[%s3043 + $0x48] sm:$0xff]
        %v3054 = vld [vmem:[%s3043 + $0x50] sm:$0xff]
        %v3055 = vld [vmem:[%s3043 + $0x58] sm:$0xff]
        %v3056 = vld [vmem:[%s3043 + $0x60] sm:$0xff]
        %v3057 = vld [vmem:[%s3043 + $0x68] sm:$0xff]
        %v3058 = vld [vmem:[%s3043 + $0x70] sm:$0xff]
        %v3059 = vld [vmem:[%s3043 + $0x78] sm:$0xff]
        %3060 = vmatprep.subr.mxu0 0.0
        %3061 = vmatpush1.msra.mxu0 %v3044
        %3062 = vmatprep.subr.mxu0 0.0
        %3063 = vmatpush1.msra.mxu0 %v3045
        %3064 = vmatprep.subr.mxu0 0.0
        %3065 = vmatpush1.msra.mxu0 %v3046
        %3066 = vmatprep.subr.mxu0 0.0
        %3067 = vmatpush1.msra.mxu0 %v3047
        %3068 = vmatprep.subr.mxu0 0.0
        %3069 = vmatpush1.msra.mxu0 %v3048
        %3070 = vmatprep.subr.mxu0 0.0
        %3071 = vmatpush1.msra.mxu0 %v3049
        %3072 = vmatprep.subr.mxu0 0.0
        %3073 = vmatpush1.msra.mxu0 %v3050
        %3074 = vmatprep.subr.mxu0 0.0
        %3075 = vmatpush1.msra.mxu0 %v3051
        %3076 = vmatprep.subr.mxu0 0.0
        %3077 = vmatpush1.msra.mxu0 %v3052
        %3078 = vmatprep.subr.mxu0 0.0
        %3079 = vmatpush1.msra.mxu0 %v3053
        %3080 = vmatprep.subr.mxu0 0.0
        %3081 = vmatpush1.msra.mxu0 %v3054
        %3082 = vmatprep.subr.mxu0 0.0
        %3083 = vmatpush1.msra.mxu0 %v3055
        %3084 = vmatprep.subr.mxu0 0.0
        %3085 = vmatpush1.msra.mxu0 %v3056
        %3086 = vmatprep.subr.mxu0 0.0
        %3087 = vmatpush1.msra.mxu0 %v3057
        %3088 = vmatprep.subr.mxu0 0.0
        %3089 = vmatpush1.msra.mxu0 %v3058
        %3090 = vmatprep.subr.mxu0 0.0
        %3091 = vmatpush1.msra.mxu0 %v3059
        %3092 = vmatprep.subr.mxu0 0.0
        %3093 = vmatpush1.msra.mxu0 0.0
        %3094 = vmatprep.subr.mxu0 0.0
        %3095 = vmatpush1.msra.mxu0 0.0
        %3096 = vmatprep.subr.mxu0 0.0
        %3097 = vmatpush1.msra.mxu0 0.0
        %3098 = vmatprep.subr.mxu0 0.0
        %3099 = vmatpush1.msra.mxu0 0.0
        %3100 = vmatprep.subr.mxu0 0.0
        %3101 = vmatpush1.msra.mxu0 0.0
        %3102 = vmatprep.subr.mxu0 0.0
        %3103 = vmatpush1.msra.mxu0 0.0
        %3104 = vmatprep.subr.mxu0 0.0
        %3105 = vmatpush1.msra.mxu0 0.0
        %3106 = vmatprep.subr.mxu0 0.0
        %3107 = vmatpush1.msra.mxu0 0.0
        %3108 = vmatprep.subr.mxu0 0.0
        %3109 = vmatpush1.msra.mxu0 0.0
        %3110 = vmatprep.subr.mxu0 0.0
        %3111 = vmatpush1.msra.mxu0 0.0
        %3112 = vmatprep.subr.mxu0 0.0
        %3113 = vmatpush1.msra.mxu0 0.0
        %3114 = vmatprep.subr.mxu0 0.0
        %3115 = vmatpush1.msra.mxu0 0.0
        %3116 = vmatprep.subr.mxu0 0.0
        %3117 = vmatpush1.msra.mxu0 0.0
        %3118 = vmatprep.subr.mxu0 0.0
        %3119 = vmatpush1.msra.mxu0 0.0
        %3120 = vmatprep.subr.mxu0 0.0
        %3121 = vmatpush1.msra.mxu0 0.0
        %3122 = vmatprep.subr.mxu0 0.0
        %3123 = vmatpush1.msra.mxu0 0.0
        %3124 = vmatprep.mubr.f32.mxu0 0.0
        %3125 = vmatmul.mubr.f32.gmra.mrb[0].mxu0 %v2954
        %v3126 = vpop.f32.mrb[0].mxu0
        %v3127 = vadd.f32 0.0, %v3126
        %v3128 = vpop.f32.mrb[0].mxu0
        %3129 = vdwg.mxu0
        %v3130 = vadd.f32 %v2951, %v3127
        %v3131 = vmax.f32 %v3042, %v3130
        %3132 = vst [vmem:[#allocation6] sm:$0xff] %v3131
        %v3133 = vld [vmem:[#allocation6] ss:$2 sm:$0xf]
        %v3134 = vld [vmem:[%s1327] ss:$2 sm:$0xf]
        %v3135 = vmax.f32 %v3133, %v3134
        %v3136 = vld [vmem:[%s8] sm:$0x1]
        %v3138 = vlaneseq
        %v3139 = vshrl.u32 %v3138, 7
        %v3140 = vsub.s32 0, %v3139
        %v3141 = vrot.slane %v3136, %v3140
        %v3143 = vadd.f32 %v3135, %v3141
        %v3144 = vmax.f32 %v3143, 0.0
        %v3145 = vld [vmem:[%s10] sm:$0x1]
        %v3146 = vld [vmem:[%s9] sm:$0xff]
        %v3147 = vld [vmem:[%s9 + $0x8] sm:$0xff]
        %v3148 = vld [vmem:[%s9 + $0x10] sm:$0xff]
        %v3149 = vld [vmem:[%s9 + $0x18] sm:$0xff]
        %v3150 = vld [vmem:[%s9 + $0x20] sm:$0xff]
        %v3151 = vld [vmem:[%s9 + $0x28] sm:$0xff]
        %v3152 = vld [vmem:[%s9 + $0x30] sm:$0xff]
        %v3153 = vld [vmem:[%s9 + $0x38] sm:$0xff]
        %v3154 = vld [vmem:[%s9 + $0x40] sm:$0xff]
        %v3155 = vld [vmem:[%s9 + $0x48] sm:$0xff]
        %v3156 = vld [vmem:[%s9 + $0x50] sm:$0xff]
        %v3157 = vld [vmem:[%s9 + $0x58] sm:$0xff]
        %v3158 = vld [vmem:[%s9 + $0x60] sm:$0xff]
        %v3159 = vld [vmem:[%s9 + $0x68] sm:$0xff]
        %v3160 = vld [vmem:[%s9 + $0x70] sm:$0xff]
        %v3161 = vld [vmem:[%s9 + $0x78] sm:$0xff]
        %3162 = vmatprep.subr.mxu0 0.0
        %3163 = vmatpush1.msra.mxu0 %v3146
        %3164 = vmatprep.subr.mxu0 0.0
        %3165 = vmatpush1.msra.mxu0 %v3147
        %3166 = vmatprep.subr.mxu0 0.0
        %3167 = vmatpush1.msra.mxu0 %v3148
        %3168 = vmatprep.subr.mxu0 0.0
        %3169 = vmatpush1.msra.mxu0 %v3149
        %3170 = vmatprep.subr.mxu0 0.0
        %3171 = vmatpush1.msra.mxu0 %v3150
        %3172 = vmatprep.subr.mxu0 0.0
        %3173 = vmatpush1.msra.mxu0 %v3151
        %3174 = vmatprep.subr.mxu0 0.0
        %3175 = vmatpush1.msra.mxu0 %v3152
        %3176 = vmatprep.subr.mxu0 0.0
        %3177 = vmatpush1.msra.mxu0 %v3153
        %3178 = vmatprep.subr.mxu0 0.0
        %3179 = vmatpush1.msra.mxu0 %v3154
        %3180 = vmatprep.subr.mxu0 0.0
        %3181 = vmatpush1.msra.mxu0 %v3155
        %3182 = vmatprep.subr.mxu0 0.0
        %3183 = vmatpush1.msra.mxu0 %v3156
        %3184 = vmatprep.subr.mxu0 0.0
        %3185 = vmatpush1.msra.mxu0 %v3157
        %3186 = vmatprep.subr.mxu0 0.0
        %3187 = vmatpush1.msra.mxu0 %v3158
        %3188 = vmatprep.subr.mxu0 0.0
        %3189 = vmatpush1.msra.mxu0 %v3159
        %3190 = vmatprep.subr.mxu0 0.0
        %3191 = vmatpush1.msra.mxu0 %v3160
        %3192 = vmatprep.subr.mxu0 0.0
        %3193 = vmatpush1.msra.mxu0 %v3161
        %3194 = vmatprep.subr.mxu0 0.0
        %3195 = vmatpush1.msra.mxu0 0.0
        %3196 = vmatprep.subr.mxu0 0.0
        %3197 = vmatpush1.msra.mxu0 0.0
        %3198 = vmatprep.subr.mxu0 0.0
        %3199 = vmatpush1.msra.mxu0 0.0
        %3200 = vmatprep.subr.mxu0 0.0
        %3201 = vmatpush1.msra.mxu0 0.0
        %3202 = vmatprep.subr.mxu0 0.0
        %3203 = vmatpush1.msra.mxu0 0.0
        %3204 = vmatprep.subr.mxu0 0.0
        %3205 = vmatpush1.msra.mxu0 0.0
        %3206 = vmatprep.subr.mxu0 0.0
        %3207 = vmatpush1.msra.mxu0 0.0
        %3208 = vmatprep.subr.mxu0 0.0
        %3209 = vmatpush1.msra.mxu0 0.0
        %3210 = vmatprep.subr.mxu0 0.0
        %3211 = vmatpush1.msra.mxu0 0.0
        %3212 = vmatprep.subr.mxu0 0.0
        %3213 = vmatpush1.msra.mxu0 0.0
        %3214 = vmatprep.subr.mxu0 0.0
        %3215 = vmatpush1.msra.mxu0 0.0
        %3216 = vmatprep.subr.mxu0 0.0
        %3217 = vmatpush1.msra.mxu0 0.0
        %3218 = vmatprep.subr.mxu0 0.0
        %3219 = vmatpush1.msra.mxu0 0.0
        %3220 = vmatprep.subr.mxu0 0.0
        %3221 = vmatpush1.msra.mxu0 0.0
        %3222 = vmatprep.subr.mxu0 0.0
        %3223 = vmatpush1.msra.mxu0 0.0
        %3224 = vmatprep.subr.mxu0 0.0
        %3225 = vmatpush1.msra.mxu0 0.0
        %3226 = vmatprep.mubr.f32.mxu0 0.0
        %3227 = vmatmul.mubr.f32.gmra.mrb[0].mxu0 %v3144
        %v3228 = vpop.f32.mrb[0].mxu0
        %v3229 = vadd.f32 0.0, %v3228
        %v3230 = vpop.f32.mrb[0].mxu0
        %3231 = vdwg.mxu0
        %v3232 = vadd.f32 %v3145, %v3229
        %s3233 = scalar_lea.vmem %s9, 128
        %v3234 = vld [vmem:[%s3233] sm:$0xff]
        %v3235 = vld [vmem:[%s3233 + $0x8] sm:$0xff]
        %v3236 = vld [vmem:[%s3233 + $0x10] sm:$0xff]
        %v3237 = vld [vmem:[%s3233 + $0x18] sm:$0xff]
        %v3238 = vld [vmem:[%s3233 + $0x20] sm:$0xff]
        %v3239 = vld [vmem:[%s3233 + $0x28] sm:$0xff]
        %v3240 = vld [vmem:[%s3233 + $0x30] sm:$0xff]
        %v3241 = vld [vmem:[%s3233 + $0x38] sm:$0xff]
        %v3242 = vld [vmem:[%s3233 + $0x40] sm:$0xff]
        %v3243 = vld [vmem:[%s3233 + $0x48] sm:$0xff]
        %v3244 = vld [vmem:[%s3233 + $0x50] sm:$0xff]
        %v3245 = vld [vmem:[%s3233 + $0x58] sm:$0xff]
        %v3246 = vld [vmem:[%s3233 + $0x60] sm:$0xff]
        %v3247 = vld [vmem:[%s3233 + $0x68] sm:$0xff]
        %v3248 = vld [vmem:[%s3233 + $0x70] sm:$0xff]
        %v3249 = vld [vmem:[%s3233 + $0x78] sm:$0xff]
        %v3251 = vrot.slane %v3144, 1
        %3253 = vmatprep.subr.mxu0 0.0
        %3254 = vmatpush1.msra.mxu0 %v3234
        %3255 = vmatprep.subr.mxu0 0.0
        %3256 = vmatpush1.msra.mxu0 %v3235
        %3257 = vmatprep.subr.mxu0 0.0
        %3258 = vmatpush1.msra.mxu0 %v3236
        %3259 = vmatprep.subr.mxu0 0.0
        %3260 = vmatpush1.msra.mxu0 %v3237
        %3261 = vmatprep.subr.mxu0 0.0
        %3262 = vmatpush1.msra.mxu0 %v3238
        %3263 = vmatprep.subr.mxu0 0.0
        %3264 = vmatpush1.msra.mxu0 %v3239
        %3265 = vmatprep.subr.mxu0 0.0
        %3266 = vmatpush1.msra.mxu0 %v3240
        %3267 = vmatprep.subr.mxu0 0.0
        %3268 = vmatpush1.msra.mxu0 %v3241
        %3269 = vmatprep.subr.mxu0 0.0
        %3270 = vmatpush1.msra.mxu0 %v3242
        %3271 = vmatprep.subr.mxu0 0.0
        %3272 = vmatpush1.msra.mxu0 %v3243
        %3273 = vmatprep.subr.mxu0 0.0
        %3274 = vmatpush1.msra.mxu0 %v3244
        %3275 = vmatprep.subr.mxu0 0.0
        %3276 = vmatpush1.msra.mxu0 %v3245
        %3277 = vmatprep.subr.mxu0 0.0
        %3278 = vmatpush1.msra.mxu0 %v3246
        %3279 = vmatprep.subr.mxu0 0.0
        %3280 = vmatpush1.msra.mxu0 %v3247
        %3281 = vmatprep.subr.mxu0 0.0
        %3282 = vmatpush1.msra.mxu0 %v3248
        %3283 = vmatprep.subr.mxu0 0.0
        %3284 = vmatpush1.msra.mxu0 %v3249
        %3285 = vmatprep.subr.mxu0 0.0
        %3286 = vmatpush1.msra.mxu0 0.0
        %3287 = vmatprep.subr.mxu0 0.0
        %3288 = vmatpush1.msra.mxu0 0.0
        %3289 = vmatprep.subr.mxu0 0.0
        %3290 = vmatpush1.msra.mxu0 0.0
        %3291 = vmatprep.subr.mxu0 0.0
        %3292 = vmatpush1.msra.mxu0 0.0
        %3293 = vmatprep.subr.mxu0 0.0
        %3294 = vmatpush1.msra.mxu0 0.0
        %3295 = vmatprep.subr.mxu0 0.0
        %3296 = vmatpush1.msra.mxu0 0.0
        %3297 = vmatprep.subr.mxu0 0.0
        %3298 = vmatpush1.msra.mxu0 0.0
        %3299 = vmatprep.subr.mxu0 0.0
        %3300 = vmatpush1.msra.mxu0 0.0
        %3301 = vmatprep.subr.mxu0 0.0
        %3302 = vmatpush1.msra.mxu0 0.0
        %3303 = vmatprep.subr.mxu0 0.0
        %3304 = vmatpush1.msra.mxu0 0.0
        %3305 = vmatprep.subr.mxu0 0.0
        %3306 = vmatpush1.msra.mxu0 0.0
        %3307 = vmatprep.subr.mxu0 0.0
        %3308 = vmatpush1.msra.mxu0 0.0
        %3309 = vmatprep.subr.mxu0 0.0
        %3310 = vmatpush1.msra.mxu0 0.0
        %3311 = vmatprep.subr.mxu0 0.0
        %3312 = vmatpush1.msra.mxu0 0.0
        %3313 = vmatprep.subr.mxu0 0.0
        %3314 = vmatpush1.msra.mxu0 0.0
        %3315 = vmatprep.subr.mxu0 0.0
        %3316 = vmatpush1.msra.mxu0 0.0
        %3317 = vmatprep.mubr.f32.mxu0 0.0
        %3318 = vmatmul.mubr.f32.gmra.mrb[0].mxu0 %v3251
        %v3319 = vpop.f32.mrb[0].mxu0
        %v3320 = vadd.f32 0.0, %v3319
        %v3321 = vpop.f32.mrb[0].mxu0
        %3322 = vdwg.mxu0
        %v3323 = vadd.f32 %v3232, %v3320
        %s3324 = scalar_lea.vmem %s9, 256
        %v3325 = vld [vmem:[%s3324] sm:$0xff]
        %v3326 = vld [vmem:[%s3324 + $0x8] sm:$0xff]
        %v3327 = vld [vmem:[%s3324 + $0x10] sm:$0xff]
        %v3328 = vld [vmem:[%s3324 + $0x18] sm:$0xff]
        %v3329 = vld [vmem:[%s3324 + $0x20] sm:$0xff]
        %v3330 = vld [vmem:[%s3324 + $0x28] sm:$0xff]
        %v3331 = vld [vmem:[%s3324 + $0x30] sm:$0xff]
        %v3332 = vld [vmem:[%s3324 + $0x38] sm:$0xff]
        %v3333 = vld [vmem:[%s3324 + $0x40] sm:$0xff]
        %v3334 = vld [vmem:[%s3324 + $0x48] sm:$0xff]
        %v3335 = vld [vmem:[%s3324 + $0x50] sm:$0xff]
        %v3336 = vld [vmem:[%s3324 + $0x58] sm:$0xff]
        %v3337 = vld [vmem:[%s3324 + $0x60] sm:$0xff]
        %v3338 = vld [vmem:[%s3324 + $0x68] sm:$0xff]
        %v3339 = vld [vmem:[%s3324 + $0x70] sm:$0xff]
        %v3340 = vld [vmem:[%s3324 + $0x78] sm:$0xff]
        %v3341 = vrot.slane %v3144, 2
        %3343 = vmatprep.subr.mxu0 0.0
        %3344 = vmatpush1.msra.mxu0 %v3325
        %3345 = vmatprep.subr.mxu0 0.0
        %3346 = vmatpush1.msra.mxu0 %v3326
        %3347 = vmatprep.subr.mxu0 0.0
        %3348 = vmatpush1.msra.mxu0 %v3327
        %3349 = vmatprep.subr.mxu0 0.0
        %3350 = vmatpush1.msra.mxu0 %v3328
        %3351 = vmatprep.subr.mxu0 0.0
        %3352 = vmatpush1.msra.mxu0 %v3329
        %3353 = vmatprep.subr.mxu0 0.0
        %3354 = vmatpush1.msra.mxu0 %v3330
        %3355 = vmatprep.subr.mxu0 0.0
        %3356 = vmatpush1.msra.mxu0 %v3331
        %3357 = vmatprep.subr.mxu0 0.0
        %3358 = vmatpush1.msra.mxu0 %v3332
        %3359 = vmatprep.subr.mxu0 0.0
        %3360 = vmatpush1.msra.mxu0 %v3333
        %3361 = vmatprep.subr.mxu0 0.0
        %3362 = vmatpush1.msra.mxu0 %v3334
        %3363 = vmatprep.subr.mxu0 0.0
        %3364 = vmatpush1.msra.mxu0 %v3335
        %3365 = vmatprep.subr.mxu0 0.0
        %3366 = vmatpush1.msra.mxu0 %v3336
        %3367 = vmatprep.subr.mxu0 0.0
        %3368 = vmatpush1.msra.mxu0 %v3337
        %3369 = vmatprep.subr.mxu0 0.0
        %3370 = vmatpush1.msra.mxu0 %v3338
        %3371 = vmatprep.subr.mxu0 0.0
        %3372 = vmatpush1.msra.mxu0 %v3339
        %3373 = vmatprep.subr.mxu0 0.0
        %3374 = vmatpush1.msra.mxu0 %v3340
        %3375 = vmatprep.subr.mxu0 0.0
        %3376 = vmatpush1.msra.mxu0 0.0
        %3377 = vmatprep.subr.mxu0 0.0
        %3378 = vmatpush1.msra.mxu0 0.0
        %3379 = vmatprep.subr.mxu0 0.0
        %3380 = vmatpush1.msra.mxu0 0.0
        %3381 = vmatprep.subr.mxu0 0.0
        %3382 = vmatpush1.msra.mxu0 0.0
        %3383 = vmatprep.subr.mxu0 0.0
        %3384 = vmatpush1.msra.mxu0 0.0
        %3385 = vmatprep.subr.mxu0 0.0
        %3386 = vmatpush1.msra.mxu0 0.0
        %3387 = vmatprep.subr.mxu0 0.0
        %3388 = vmatpush1.msra.mxu0 0.0
        %3389 = vmatprep.subr.mxu0 0.0
        %3390 = vmatpush1.msra.mxu0 0.0
        %3391 = vmatprep.subr.mxu0 0.0
        %3392 = vmatpush1.msra.mxu0 0.0
        %3393 = vmatprep.subr.mxu0 0.0
        %3394 = vmatpush1.msra.mxu0 0.0
        %3395 = vmatprep.subr.mxu0 0.0
        %3396 = vmatpush1.msra.mxu0 0.0
        %3397 = vmatprep.subr.mxu0 0.0
        %3398 = vmatpush1.msra.mxu0 0.0
        %3399 = vmatprep.subr.mxu0 0.0
        %3400 = vmatpush1.msra.mxu0 0.0
        %3401 = vmatprep.subr.mxu0 0.0
        %3402 = vmatpush1.msra.mxu0 0.0
        %3403 = vmatprep.subr.mxu0 0.0
        %3404 = vmatpush1.msra.mxu0 0.0
        %3405 = vmatprep.subr.mxu0 0.0
        %3406 = vmatpush1.msra.mxu0 0.0
        %3407 = vmatprep.mubr.f32.mxu0 0.0
        %3408 = vmatmul.mubr.f32.gmra.mrb[0].mxu0 %v3341
        %v3409 = vpop.f32.mrb[0].mxu0
        %v3410 = vadd.f32 0.0, %v3409
        %v3411 = vpop.f32.mrb[0].mxu0
        %3412 = vdwg.mxu0
        %v3413 = vadd.f32 %v3323, %v3410
        %s3414 = scalar_lea.vmem %s9, 384
        %v3415 = vld [vmem:[%s3414] sm:$0xff]
        %v3416 = vld [vmem:[%s3414 + $0x8] sm:$0xff]
        %v3417 = vld [vmem:[%s3414 + $0x10] sm:$0xff]
        %v3418 = vld [vmem:[%s3414 + $0x18] sm:$0xff]
        %v3419 = vld [vmem:[%s3414 + $0x20] sm:$0xff]
        %v3420 = vld [vmem:[%s3414 + $0x28] sm:$0xff]
        %v3421 = vld [vmem:[%s3414 + $0x30] sm:$0xff]
        %v3422 = vld [vmem:[%s3414 + $0x38] sm:$0xff]
        %v3423 = vld [vmem:[%s3414 + $0x40] sm:$0xff]
        %v3424 = vld [vmem:[%s3414 + $0x48] sm:$0xff]
        %v3425 = vld [vmem:[%s3414 + $0x50] sm:$0xff]
        %v3426 = vld [vmem:[%s3414 + $0x58] sm:$0xff]
        %v3427 = vld [vmem:[%s3414 + $0x60] sm:$0xff]
        %v3428 = vld [vmem:[%s3414 + $0x68] sm:$0xff]
        %v3429 = vld [vmem:[%s3414 + $0x70] sm:$0xff]
        %v3430 = vld [vmem:[%s3414 + $0x78] sm:$0xff]
        %v3431 = vrot.slane %v3144, 3
        %3433 = vmatprep.subr.mxu0 0.0
        %3434 = vmatpush1.msra.mxu0 %v3415
        %3435 = vmatprep.subr.mxu0 0.0
        %3436 = vmatpush1.msra.mxu0 %v3416
        %3437 = vmatprep.subr.mxu0 0.0
        %3438 = vmatpush1.msra.mxu0 %v3417
        %3439 = vmatprep.subr.mxu0 0.0
        %3440 = vmatpush1.msra.mxu0 %v3418
        %3441 = vmatprep.subr.mxu0 0.0
        %3442 = vmatpush1.msra.mxu0 %v3419
        %3443 = vmatprep.subr.mxu0 0.0
        %3444 = vmatpush1.msra.mxu0 %v3420
        %3445 = vmatprep.subr.mxu0 0.0
        %3446 = vmatpush1.msra.mxu0 %v3421
        %3447 = vmatprep.subr.mxu0 0.0
        %3448 = vmatpush1.msra.mxu0 %v3422
        %3449 = vmatprep.subr.mxu0 0.0
        %3450 = vmatpush1.msra.mxu0 %v3423
        %3451 = vmatprep.subr.mxu0 0.0
        %3452 = vmatpush1.msra.mxu0 %v3424
        %3453 = vmatprep.subr.mxu0 0.0
        %3454 = vmatpush1.msra.mxu0 %v3425
        %3455 = vmatprep.subr.mxu0 0.0
        %3456 = vmatpush1.msra.mxu0 %v3426
        %3457 = vmatprep.subr.mxu0 0.0
        %3458 = vmatpush1.msra.mxu0 %v3427
        %3459 = vmatprep.subr.mxu0 0.0
        %3460 = vmatpush1.msra.mxu0 %v3428
        %3461 = vmatprep.subr.mxu0 0.0
        %3462 = vmatpush1.msra.mxu0 %v3429
        %3463 = vmatprep.subr.mxu0 0.0
        %3464 = vmatpush1.msra.mxu0 %v3430
        %3465 = vmatprep.subr.mxu0 0.0
        %3466 = vmatpush1.msra.mxu0 0.0
        %3467 = vmatprep.subr.mxu0 0.0
        %3468 = vmatpush1.msra.mxu0 0.0
        %3469 = vmatprep.subr.mxu0 0.0
        %3470 = vmatpush1.msra.mxu0 0.0
        %3471 = vmatprep.subr.mxu0 0.0
        %3472 = vmatpush1.msra.mxu0 0.0
        %3473 = vmatprep.subr.mxu0 0.0
        %3474 = vmatpush1.msra.mxu0 0.0
        %3475 = vmatprep.subr.mxu0 0.0
        %3476 = vmatpush1.msra.mxu0 0.0
        %3477 = vmatprep.subr.mxu0 0.0
        %3478 = vmatpush1.msra.mxu0 0.0
        %3479 = vmatprep.subr.mxu0 0.0
        %3480 = vmatpush1.msra.mxu0 0.0
        %3481 = vmatprep.subr.mxu0 0.0
        %3482 = vmatpush1.msra.mxu0 0.0
        %3483 = vmatprep.subr.mxu0 0.0
        %3484 = vmatpush1.msra.mxu0 0.0
        %3485 = vmatprep.subr.mxu0 0.0
        %3486 = vmatpush1.msra.mxu0 0.0
        %3487 = vmatprep.subr.mxu0 0.0
        %3488 = vmatpush1.msra.mxu0 0.0
        %3489 = vmatprep.subr.mxu0 0.0
        %3490 = vmatpush1.msra.mxu0 0.0
        %3491 = vmatprep.subr.mxu0 0.0
        %3492 = vmatpush1.msra.mxu0 0.0
        %3493 = vmatprep.subr.mxu0 0.0
        %3494 = vmatpush1.msra.mxu0 0.0
        %3495 = vmatprep.subr.mxu0 0.0
        %3496 = vmatpush1.msra.mxu0 0.0
        %3497 = vmatprep.mubr.f32.mxu0 0.0
        %3498 = vmatmul.mubr.f32.gmra.mrb[0].mxu0 %v3431
        %v3499 = vpop.f32.mrb[0].mxu0
        %v3500 = vadd.f32 0.0, %v3499
        %v3501 = vpop.f32.mrb[0].mxu0
        %3502 = vdwg.mxu0
        %v3503 = vadd.f32 %v3413, %v3500
        %v3504 = vld [vmem:[%s11] sm:$0xff]
        %v3505 = vld [vmem:[%s11 + $0x8] sm:$0xff]
        %v3506 = vld [vmem:[%s11 + $0x10] sm:$0xff]
        %v3507 = vld [vmem:[%s11 + $0x18] sm:$0xff]
        %v3508 = vld [vmem:[%s11 + $0x20] sm:$0xff]
        %v3509 = vld [vmem:[%s12] sm:$0x1]
        %vm3510 = vcmask 326656
        %v3512 = vsel %vm3510, %v3503, 0
        %3514 = vmatprep.subr.mxu0 0.0
        %3515 = vmatpush1.msra.mxu0 %v3504
        %3516 = vmatprep.subr.mxu0 0.0
        %3517 = vmatpush1.msra.mxu0 %v3505
        %3518 = vmatprep.subr.mxu0 0.0
        %3519 = vmatpush1.msra.mxu0 %v3506
        %3520 = vmatprep.subr.mxu0 0.0
        %3521 = vmatpush1.msra.mxu0 %v3507
        %3522 = vmatprep.subr.mxu0 0.0
        %3523 = vmatpush1.msra.mxu0 %v3508
        %3524 = vmatprep.subr.mxu0 0.0
        %3525 = vmatpush1.msra.mxu0 0.0
        %3526 = vmatprep.subr.mxu0 0.0
        %3527 = vmatpush1.msra.mxu0 0.0
        %3528 = vmatprep.subr.mxu0 0.0
        %3529 = vmatpush1.msra.mxu0 0.0
        %3530 = vmatprep.subr.mxu0 0.0
        %3531 = vmatpush1.msra.mxu0 0.0
        %3532 = vmatprep.subr.mxu0 0.0
        %3533 = vmatpush1.msra.mxu0 0.0
        %3534 = vmatprep.subr.mxu0 0.0
        %3535 = vmatpush1.msra.mxu0 0.0
        %3536 = vmatprep.subr.mxu0 0.0
        %3537 = vmatpush1.msra.mxu0 0.0
        %3538 = vmatprep.subr.mxu0 0.0
        %3539 = vmatpush1.msra.mxu0 0.0
        %3540 = vmatprep.subr.mxu0 0.0
        %3541 = vmatpush1.msra.mxu0 0.0
        %3542 = vmatprep.subr.mxu0 0.0
        %3543 = vmatpush1.msra.mxu0 0.0
        %3544 = vmatprep.subr.mxu0 0.0
        %3545 = vmatpush1.msra.mxu0 0.0
        %3546 = vmatprep.subr.mxu0 0.0
        %3547 = vmatpush1.msra.mxu0 0.0
        %3548 = vmatprep.subr.mxu0 0.0
        %3549 = vmatpush1.msra.mxu0 0.0
        %3550 = vmatprep.subr.mxu0 0.0
        %3551 = vmatpush1.msra.mxu0 0.0
        %3552 = vmatprep.subr.mxu0 0.0
        %3553 = vmatpush1.msra.mxu0 0.0
        %3554 = vmatprep.subr.mxu0 0.0
        %3555 = vmatpush1.msra.mxu0 0.0
        %3556 = vmatprep.subr.mxu0 0.0
        %3557 = vmatpush1.msra.mxu0 0.0
        %3558 = vmatprep.subr.mxu0 0.0
        %3559 = vmatpush1.msra.mxu0 0.0
        %3560 = vmatprep.subr.mxu0 0.0
        %3561 = vmatpush1.msra.mxu0 0.0
        %3562 = vmatprep.subr.mxu0 0.0
        %3563 = vmatpush1.msra.mxu0 0.0
        %3564 = vmatprep.subr.mxu0 0.0
        %3565 = vmatpush1.msra.mxu0 0.0
        %3566 = vmatprep.subr.mxu0 0.0
        %3567 = vmatpush1.msra.mxu0 0.0
        %3568 = vmatprep.subr.mxu0 0.0
        %3569 = vmatpush1.msra.mxu0 0.0
        %3570 = vmatprep.subr.mxu0 0.0
        %3571 = vmatpush1.msra.mxu0 0.0
        %3572 = vmatprep.subr.mxu0 0.0
        %3573 = vmatpush1.msra.mxu0 0.0
        %3574 = vmatprep.subr.mxu0 0.0
        %3575 = vmatpush1.msra.mxu0 0.0
        %3576 = vmatprep.subr.mxu0 0.0
        %3577 = vmatpush1.msra.mxu0 0.0
        %3578 = vmatprep.mubr.f32.mxu0 0.0
        %3579 = vmatmul.mubr.f32.gmra.mrb[0].mxu0 %v3512
        %v3580 = vpop.f32.mrb[0].mxu0
        %v3581 = vadd.f32 %v3509, %v3580
        %v3582 = vpop.f32.mrb[0].mxu0
        %3583 = vdwg.mxu0
        %vm3584 = vcmask 57344
        %v3585 = vsel %vm3584, %v3581, -inf
        %3586 = vmax.xlane.f32.xlu0 %v3585
        %v3587 = vpop.xlane.xlu0 %3586
        %v3588 = vsub.f32 %v3581, %v3587
        %v3589 = vmul.f32 %v3588, 1.442695
        %v3590 = vpow.pop %v3589
        %v3591 = vsel %vm3584, %v3590, 0.0
        %3592 = vadd.xlane.f32.xlu0 %v3591
        %v3593 = vpop.xlane.xlu0 %3592
        %v3594 = vlog2.pop %v3593
        %v3595 = vmul.f32 %v3594, 0.6931472
        %v3596 = vsub.f32 %v3588, %v3595
        %3597 = vst.msk [vmem:[%s476] sm:$0x1] %vm3584, %v3596
        %s3598 = sand.u32 %s315, 1
        %s3599 = scalar_lea.sflag [#allocation9], %s3598
        %s3600 = sand.u32 %s315, 1
        %s3601 = scalar_lea.vmem [#allocation13], %s3600
        // Predicated region
        $region85: #{tpu_custom_call.1} parent=71 // pred_check
          %p3602 = pneg %p325
        $region86: #{tpu_custom_call.1} parent=71 // pred_check_branch
          %3604 = sbr.rel (%p3602) target = $region88
        $region87: #{tpu_custom_call.1} parent=71 // pred_region
          %s3606 = ssub.s32 16, 16
          %3607 = vsyncadd %s3599, %s3606
          %s3608 = smul.addr %s29, 16
          %s3609 = scalar_lea.hbm %s13, %s3608
          %s3611 = sshll.u32 %s3601, 4
          %s3612 = int_to_ptr.vmem [resolvable:$true] %s3611
          %3614 = dma.vmem_to_hbm [thread:$0]  %s3612, 16, %s3609, %s3599
        $region88: #{tpu_custom_call.1} parent=71 // pred_fallthru
          _
      $region72: #{tpu_custom_call.1} parent=5 // pred_fallthru
        _
      %p3615 = scmp.le.s32.totalorder 2, %s24
      // Predicated region
      $region89: #{tpu_custom_call.1} parent=5 // pred_check
        %p3616 = pneg %p3615
      $region90: #{tpu_custom_call.1} parent=5 // pred_check_branch
        %3618 = sbr.rel (%p3616) target = $region92
      $region91: #{tpu_custom_call.1} parent=5 // pred_region
        %s3619 = ssub.s32 %s24, 2
        // Predicated region
        $region93: #{tpu_custom_call.1} parent=91 // pred_check
          %p3620 = pneg %p331
        $region94: #{tpu_custom_call.1} parent=91 // pred_check_branch
          %3622 = sbr.rel (%p3620) target = $region96
        $region95: #{tpu_custom_call.1} parent=91 // pred_region
          %s3623 = sand.u32 %s316, 1
          %s3624 = scalar_lea.sflag [#allocation9], %s3623
          %s3625 = sand.u32 %s316, 1
          %s3626 = scalar_lea.vmem [#allocation13], %s3625
          %3627 = dma.done %s3624, 16
        $region96: #{tpu_custom_call.1} parent=91 // pred_fallthru
          _
      $region92: #{tpu_custom_call.1} parent=5 // pred_fallthru
        _
    $region6: #{tpu_custom_call.1} parent=1 // loop_footer
      %s28 = sadd.s32 1, %s24
    $region7: #{tpu_custom_call.1} parent=1 // loop_footer_branch
      %23 = sbr.rel target = $region3
    $region8: #{tpu_custom_call.1} parent=1 // loop_exit
      _
    %3628 = vsyncpa [#allocation8], 1
    %s3629 = scalar_lea.sflag [#allocation8], 1
    %3630 = vsyncpa %s3629, 1
    %3631 = vsyncpa [#allocation11], 1
    %3632 = vsyncpa [#allocation9], 1
    %s3633 = scalar_lea.sflag [#allocation9], 1
    %3634 = vsyncpa %s3633, 1

</llo_original>
